<compile_context>
chip_gen: v7x
topology: tpu7x:2x2x1
jax: 0.10.0
libtpu: 0.0.40
codegen_flags: <defaults>
</compile_context>

<pallas_src>
import jax
import jax.numpy as jnp
from jax.experimental import pallas as pl
from jax.experimental.pallas import tpu as pltpu

EMBED_SIZE = 32     # embed_size argument of OurEncoder
FEAT_C = 2048       # ResNet50 final feature channels (fixed by nn.Linear(2048, E))


def encoder_head_kernel(feats_ref, drop_ref, w_ref, b_ref, out_ref):
    """Fused avgpool + ReLU + dropout + Linear for one batch tile.

    feats_ref: VMEM (TB, S, C) bf16   channels-last trunk features
    drop_ref : VMEM (TB, C)    f32    keep_mask * (1/(1-p)) * (1/S)   (or 1/S in eval)
    w_ref    : VMEM (C, E)     bf16   Linear weight, already transposed (W^T)
    b_ref    : VMEM (1, E)     f32    Linear bias
    out_ref  : VMEM (TB, E)    f32
    """
    feats = feats_ref[...].astype(jnp.float32)            # (TB, S, C), f32 VPU math
    summed = jnp.sum(feats, axis=1)                        # (TB, C)  (mean * S)

    # relu(mean) == relu(sum) * (1/S) since S > 0; the 1/S and the dropout
    # keep-mask / 2.0 scale are pre-folded into drop_ref -> single multiply.
    r = jnp.maximum(summed, 0.0)
    dropped = r * drop_ref[...]                            # (TB, C)

    # nn.Linear(2048, E): y = x @ W^T + b (bf16 MXU operands, f32 accumulate).
    out = jnp.dot(dropped.astype(jnp.bfloat16), w_ref[...],
                  preferred_element_type=jnp.float32)
    out_ref[...] = (out + b_ref[...]).astype(out_ref.dtype)


def _pick_block_b(B, S, C, block_b):
    """Batch tile: multiple of 8 dividing B, double-buffered bf16 block <=~32MiB."""
    if block_b is None:
        budget = 16 * 1024 * 1024                  # per-buffer budget for feats
        max_tb = max(1, budget // (S * C * 2))     # bf16 bytes per batch row
        block_b = B if B <= max_tb else max_tb
    if block_b >= B:
        return B
    block_b = max(8, (block_b // 8) * 8)
    while block_b > 8 and (B % block_b != 0):
        block_b -= 8
    if B % block_b != 0:
        return B                                   # fallback: single tile
    return block_b


def our_encoder(feats_bsc, w_t, b, *, rng_key, training=True, block_b=None):
    """feats_bsc: (B, S, C=2048) channels-last ResNet50 trunk features.

    Returns (B, embed_size) float32, matching OurEncoder.forward after self.l1.
    """
    B, S, C = feats_bsc.shape
    E = w_t.shape[1]

    tb = _pick_block_b(B, S, C, block_b)
    grid_b = B // tb

    # Host-side dropout multiplier: Bernoulli(keep=0.5) per element, scaled by
    # 1/(1-p)=2 (training) and by 1/S (folds the avgpool mean divide).
    inv_s = 1.0 / float(S)
    if training:
        keep = jax.random.bernoulli(rng_key, 0.5, (B, C))
        drop_scale = keep.astype(jnp.float32) * (2.0 * inv_s)
    else:
        drop_scale = jnp.full((B, C), inv_s, dtype=jnp.float32)

    return pl.pallas_call(
        encoder_head_kernel,
        out_shape=jax.ShapeDtypeStruct((B, E), jnp.float32),
        grid_spec=pltpu.PrefetchScalarGridSpec(
            num_scalar_prefetch=0,
            grid=(grid_b,),                                     # batch-tiled
            in_specs=[
                pl.BlockSpec((tb, S, C), lambda i: (i, 0, 0)),  # feats tile
                pl.BlockSpec((tb, C),    lambda i: (i, 0)),     # dropout scale tile
                pl.BlockSpec((C, E),     lambda i: (0, 0)),     # weight, resident
                pl.BlockSpec((1, E),     lambda i: (0, 0)),     # bias, resident
            ],
            out_specs=pl.BlockSpec((tb, E), lambda i: (i, 0)),
        ),
        compiler_params=pltpu.CompilerParams(
            dimension_semantics=("parallel",)),                 # shard across TCs
    )(feats_bsc.astype(jnp.bfloat16),
      drop_scale,
      w_t.astype(jnp.bfloat16),
      b.reshape(1, E).astype(jnp.float32))


if __name__ == "__main__":
    key = jax.random.PRNGKey(0)
    k_feat, k_w, k_b, k_drop = jax.random.split(key, 4)

    B, H, W = 16, 4, 4
    S = H * W
    # TODO(synk): the pretrained ResNet50 conv trunk (self.l1 up to the final
    # avgpool) is not reimplemented in Pallas; we synthesize its channels-last
    # (B, H, W, 2048) feature map deterministically, so no NCHW->NHWC
    # transpose pass is materialized in HBM before the fused head kernel.
    feats_nhwc = jax.random.normal(k_feat, (B, H, W, FEAT_C), dtype=jnp.float32)
    feats_bsc = feats_nhwc.reshape(B, S, FEAT_C)            # reshape only, no copy

    # nn.Linear(2048, embed_size): PyTorch weight is (E, 2048); pass W^T (2048, E).
    w_t = (jax.random.normal(k_w, (FEAT_C, EMBED_SIZE), dtype=jnp.float32)
           * (1.0 / jnp.sqrt(FEAT_C)))
    b = jax.random.normal(k_b, (EMBED_SIZE,), dtype=jnp.float32) * 0.01

    # block_b=8 -> grid=(2,): exercises the batch-tiled, pipelined path.
    out = our_encoder(feats_bsc, w_t, b, rng_key=k_drop, training=True, block_b=8)
    out = jax.block_until_ready(out)
    assert out.shape == (B, EMBED_SIZE) and out.dtype == jnp.float32
    print("KERNEL_OK")
</pallas_src>

<mosaic_0001>
module attributes {stable_mosaic.version = 11 : i64} {
  func.func @encoder_head_kernel(%arg0: i32, %arg1: memref<8x16x2048xbf16, #tpu.memory_space<vmem>>, %arg2: memref<8x2048xf32, #tpu.memory_space<vmem>>, %arg3: memref<2048x32xbf16, #tpu.memory_space<vmem>>, %arg4: memref<1x32xf32, #tpu.memory_space<vmem>>, %arg5: memref<8x32xf32, #tpu.memory_space<vmem>>) attributes {dimension_semantics = [#tpu.dimension_semantics<parallel>], iteration_bounds = array<i64: 2>, scalar_prefetch = 0 : i64, scratch_operands = 0 : i64, tpu.core_type = #tpu.core_type<tc>, window_params = [{transform_indices = @transform_0, window_bounds = array<i64: 8, 16, 2048>}, {transform_indices = @transform_1, window_bounds = array<i64: 8, 2048>}, {pipeline_mode = #tpu.pipeline_mode<synchronous>, transform_indices = @transform_2, window_bounds = array<i64: 2048, 32>}, {pipeline_mode = #tpu.pipeline_mode<synchronous>, transform_indices = @transform_3, window_bounds = array<i64: 1, 32>}, {transform_indices = @transform_4, window_bounds = array<i64: 8, 32>}]} {
    %c0 = arith.constant 0 : index
    %c0_0 = arith.constant 0 : index
    %c0_1 = arith.constant 0 : index
    %0 = vector.load %arg1[%c0, %c0_0, %c0_1] : memref<8x16x2048xbf16, #tpu.memory_space<vmem>>, vector<8x16x2048xbf16>
    %1 = arith.extf %0 : vector<8x16x2048xbf16> to vector<8x16x2048xf32>
    %cst = arith.constant dense<0.000000e+00> : vector<8x2048xf32>
    %2 = vector.multi_reduction <add>, %1, %cst [1] : vector<8x16x2048xf32> to vector<8x2048xf32>
    %cst_2 = arith.constant 0.000000e+00 : f32
    %3 = vector.broadcast %cst_2 : f32 to vector<8x2048xf32>
    %4 = arith.maximumf %2, %3 : vector<8x2048xf32>
    %c0_3 = arith.constant 0 : index
    %c0_4 = arith.constant 0 : index
    %5 = vector.load %arg2[%c0_3, %c0_4] : memref<8x2048xf32, #tpu.memory_space<vmem>>, vector<8x2048xf32>
    %6 = arith.mulf %4, %5 : vector<8x2048xf32>
    %7 = arith.truncf %6 : vector<8x2048xf32> to vector<8x2048xbf16>
    %c0_5 = arith.constant 0 : index
    %c0_6 = arith.constant 0 : index
    %8 = vector.load %arg3[%c0_5, %c0_6] : memref<2048x32xbf16, #tpu.memory_space<vmem>>, vector<2048x32xbf16>
    %cst_7 = arith.constant dense<0.000000e+00> : vector<8x32xf32>
    %9 = tpu.matmul %7, %8, %cst_7 {dimension_numbers = #tpu.dot_dimension_numbers<[1], [0], [0], [1], [0, 0, 1, 1], [], []>} : vector<8x2048xbf16>, vector<2048x32xbf16>, vector<8x32xf32> -> vector<8x32xf32>
    %c0_8 = arith.constant 0 : index
    %c0_9 = arith.constant 0 : index
    %10 = vector.load %arg4[%c0_8, %c0_9] : memref<1x32xf32, #tpu.memory_space<vmem>>, vector<1x32xf32>
    %11 = vector.broadcast %10 : vector<1x32xf32> to vector<8x32xf32>
    %12 = arith.addf %9, %11 : vector<8x32xf32>
    %c0_10 = arith.constant 0 : index
    %c0_11 = arith.constant 0 : index
    %13 = vector.load %arg5[%c0_10, %c0_11] : memref<8x32xf32, #tpu.memory_space<vmem>>, vector<8x32xf32>
    tpu.vector_store %arg5[%c0_10, %c0_11], %12 {strides = array<i32>} : memref<8x32xf32, #tpu.memory_space<vmem>>, vector<8x32xf32>,
    return
  }
  func.func @transform_0(%arg0: i32) -> (i32, i32, i32) {
    %c0_i32 = arith.constant 0 : i32
    %c0_i32_0 = arith.constant 0 : i32
    %c0_i32_1 = arith.constant 0 : i32
    return %arg0, %c0_i32, %c0_i32_0 : i32, i32, i32
  }
  func.func @transform_1(%arg0: i32) -> (i32, i32) {
    %c0_i32 = arith.constant 0 : i32
    %c0_i32_0 = arith.constant 0 : i32
    return %arg0, %c0_i32 : i32, i32
  }
  func.func @transform_2(%arg0: i32) -> (i32, i32) {
    %c0_i32 = arith.constant 0 : i32
    %c0_i32_0 = arith.constant 0 : i32
    %c0_i32_1 = arith.constant 0 : i32
    return %c0_i32, %c0_i32_0 : i32, i32
  }
  func.func @transform_3(%arg0: i32) -> (i32, i32) {
    %c0_i32 = arith.constant 0 : i32
    %c0_i32_0 = arith.constant 0 : i32
    %c0_i32_1 = arith.constant 0 : i32
    return %c0_i32, %c0_i32_0 : i32, i32
  }
  func.func @transform_4(%arg0: i32) -> (i32, i32) {
    %c0_i32 = arith.constant 0 : i32
    %c0_i32_0 = arith.constant 0 : i32
    return %arg0, %c0_i32 : i32, i32
  }
}

</mosaic_0001>

<llo_original>
// kernel: tpu_custom_call.1
$region0: #{tpu_custom_call.1}
  #allocation0 [shape = 'u32[]', space=smem, size = 0x4, offset = 0x4, fixed_abs, tag = 'smem constant byte address 0x4 - core index']
  #allocation1 [shape = 'u32[144,128]{1,0:T(1,128)}', space=vmem, size = 0x12000, scoped, tag = 'internal scratch']
  %s0 = inlined_call_operand.hbm [shape: bf16[16,16,2048], index: 0, kind: input, shape index: {}]
  %s1 = inlined_call_operand.vmem [shape: f32[16,2048], index: 1, kind: input, shape index: {}]
  %s2 = inlined_call_operand.vmem [shape: bf16[2048,32], index: 2, kind: input, shape index: {}]
  %s3 = inlined_call_operand.vmem [shape: f32[1,32], index: 3, kind: input, shape index: {}]
  %s4 = inlined_call_operand.hbm [shape: f32[16,32], index: 4, kind: output, shape index: {}]
  %s5 = sld [smem:[#allocation0]]
  $region53: #{tpu_custom_call.1} parent=0
    _
  %s7 = ssub.s32 1, %s5
  %s8 = scalar_select 0, %s7, %s5
  $region1: #{tpu_custom_call.1} parent=0
    #allocation2 [shape = 'u8[1048576]{0}', space=vmem, size = 0x100000, scoped, tag = 'input window, operand 0']
    #allocation3 [shape = 's32[2]{0}', space=sflag, size = 0x8, scoped, tag = 'scoped memory for tpu_custom_call.1']
    #allocation4 [shape = 's32[2]{0}', space=sflag, size = 0x8, scoped, tag = 'scoped memory for tpu_custom_call.1']
    #allocation5 [shape = 'u8[8192]{0}', space=vmem, size = 0x2000, scoped, tag = 'output window, operand 0']
    %9 = vsyncpa [#allocation3], 0
    %s10 = scalar_lea.sflag [#allocation3], 1
    %11 = vsyncpa %s10, 0
    %12 = vsyncpa [#allocation4], 0
    %s13 = scalar_lea.sflag [#allocation4], 1
    %14 = vsyncpa %s13, 0
    loop: start=0, step=1, limit=4
    $region2: #{tpu_custom_call.1} parent=1 // loop_pre_header
      _
    $region3: #{tpu_custom_call.1} parent=1 // loop_header
      %s16 = sphi 0, %s20
      %p17 = scmp.ge.s32.totalorder %s16, 4
      %s26 = sphi 0, %s28
      %s29 = sphi 0, %s26
      %s30 = sphi 0, %s29
      %s46 = sphi 0, %s30
      %s52 = sphi 0, %s54
      %s55 = sphi 0, %s52
      %s56 = sphi 0, %s55
      %s72 = sphi 0, %s56
      %s76 = sphi 0, %s76
      %s78 = sphi 0, %s76
      %s79 = sphi 0, %s78
      %s93 = sphi 0, %s79
      %s97 = sphi 0, %s97
      %s99 = sphi 0, %s97
      %s100 = sphi 0, %s99
      %s114 = sphi 0, %s100
      %s120 = sphi 0, %s122
      %s123 = sphi 0, %s120
      %s124 = sphi 0, %s123
      %s140 = sphi 0, %s124
    $region4: #{tpu_custom_call.1} parent=1 // loop_header_branch
      %19 = sbr.rel (%p17) target = $region8
    $region5: #{tpu_custom_call.1} parent=1 // loop_body
      %s21 = ssub.s32 %s16, 1
      %s22 = ssub.s32 %s16, 2
      %s23 = sadd.s32 %s16, 1
      %s24 = ssub.s32 %s16, %s23
      %p25 = scmp.eq.s32.totalorder %s24, 0
      %s27 = sadd.s32 %s26, 1
      %s28 = scalar_select %p25, %s26, %s27
      %p31 = pneg %p25
      %p32 = scmp.eq.s32.totalorder %s16, 1
      %p33 = por %p31, %p32
      %p34 = scmp.ne.s32.totalorder %s26, %s29
      %p35 = scmp.eq.s32.totalorder %s16, 0
      %p36 = por %p34, %p35
      %p37 = scmp.ne.s32.totalorder %s26, %s29
      %p38 = scmp.eq.s32.totalorder %s21, 1
      %p39 = por %p37, %p38
      %p40 = scmp.ne.s32.totalorder %s29, %s30
      %p41 = scmp.eq.s32.totalorder %s21, 0
      %p42 = por %p40, %p41
      %p43 = scmp.ne.s32.totalorder %s29, %s30
      %p44 = scmp.eq.s32.totalorder %s22, 1
      %p45 = por %p43, %p44
      %p47 = scmp.ne.s32.totalorder %s30, %s46
      %p48 = scmp.eq.s32.totalorder %s22, 0
      %p49 = por %p47, %p48
      %s50 = ssub.s32 %s16, %s23
      %p51 = scmp.eq.s32.totalorder %s50, 0
      %s53 = sadd.s32 %s52, 1
      %s54 = scalar_select %p51, %s52, %s53
      %p57 = pneg %p51
      %p58 = scmp.eq.s32.totalorder %s16, 1
      %p59 = por %p57, %p58
      %p60 = scmp.ne.s32.totalorder %s52, %s55
      %p61 = scmp.eq.s32.totalorder %s16, 0
      %p62 = por %p60, %p61
      %p63 = scmp.ne.s32.totalorder %s52, %s55
      %p64 = scmp.eq.s32.totalorder %s21, 1
      %p65 = por %p63, %p64
      %p66 = scmp.ne.s32.totalorder %s55, %s56
      %p67 = scmp.eq.s32.totalorder %s21, 0
      %p68 = por %p66, %p67
      %p69 = scmp.ne.s32.totalorder %s55, %s56
      %p70 = scmp.eq.s32.totalorder %s22, 1
      %p71 = por %p69, %p70
      %p73 = scmp.ne.s32.totalorder %s56, %s72
      %p74 = scmp.eq.s32.totalorder %s22, 0
      %p75 = por %p73, %p74
      %s77 = sadd.s32 %s76, 1
      %p80 = scmp.eq.s32.totalorder %s16, 1
      %p81 = scmp.ne.s32.totalorder %s76, %s78
      %p82 = scmp.eq.s32.totalorder %s16, 0
      %p83 = por %p81, %p82
      %p84 = scmp.ne.s32.totalorder %s76, %s78
      %p85 = scmp.eq.s32.totalorder %s21, 1
      %p86 = por %p84, %p85
      %p87 = scmp.ne.s32.totalorder %s78, %s79
      %p88 = scmp.eq.s32.totalorder %s21, 0
      %p89 = por %p87, %p88
      %p90 = scmp.ne.s32.totalorder %s78, %s79
      %p91 = scmp.eq.s32.totalorder %s22, 1
      %p92 = por %p90, %p91
      %p94 = scmp.ne.s32.totalorder %s79, %s93
      %p95 = scmp.eq.s32.totalorder %s22, 0
      %p96 = por %p94, %p95
      %s98 = sadd.s32 %s97, 1
      %p101 = scmp.eq.s32.totalorder %s16, 1
      %p102 = scmp.ne.s32.totalorder %s97, %s99
      %p103 = scmp.eq.s32.totalorder %s16, 0
      %p104 = por %p102, %p103
      %p105 = scmp.ne.s32.totalorder %s97, %s99
      %p106 = scmp.eq.s32.totalorder %s21, 1
      %p107 = por %p105, %p106
      %p108 = scmp.ne.s32.totalorder %s99, %s100
      %p109 = scmp.eq.s32.totalorder %s21, 0
      %p110 = por %p108, %p109
      %p111 = scmp.ne.s32.totalorder %s99, %s100
      %p112 = scmp.eq.s32.totalorder %s22, 1
      %p113 = por %p111, %p112
      %p115 = scmp.ne.s32.totalorder %s100, %s114
      %p116 = scmp.eq.s32.totalorder %s22, 0
      %p117 = por %p115, %p116
      %s118 = ssub.s32 %s16, %s23
      %p119 = scmp.eq.s32.totalorder %s118, 0
      %s121 = sadd.s32 %s120, 1
      %s122 = scalar_select %p119, %s120, %s121
      %p125 = pneg %p119
      %p126 = scmp.eq.s32.totalorder %s16, 1
      %p127 = por %p125, %p126
      %p128 = scmp.ne.s32.totalorder %s120, %s123
      %p129 = scmp.eq.s32.totalorder %s16, 0
      %p130 = por %p128, %p129
      %p131 = scmp.ne.s32.totalorder %s120, %s123
      %p132 = scmp.eq.s32.totalorder %s21, 1
      %p133 = por %p131, %p132
      %p134 = scmp.ne.s32.totalorder %s123, %s124
      %p135 = scmp.eq.s32.totalorder %s21, 0
      %p136 = por %p134, %p135
      %p137 = scmp.ne.s32.totalorder %s123, %s124
      %p138 = scmp.eq.s32.totalorder %s22, 1
      %p139 = por %p137, %p138
      %p141 = scmp.ne.s32.totalorder %s124, %s140
      %p142 = scmp.eq.s32.totalorder %s22, 0
      %p143 = por %p141, %p142
      %p144 = scmp.le.s32.totalorder 1, %s16
      %p145 = scmp.lt.s32.totalorder %s16, 3
      %p146 = pnand %p144, %p145
      %p147 = pneg %p146
      // Predicated region
      $region9: #{tpu_custom_call.1} parent=5 // pred_check
        _
      $region10: #{tpu_custom_call.1} parent=5 // pred_check_branch
        %149 = sbr.rel (%p146) target = $region12
      $region11: #{tpu_custom_call.1} parent=5 // pred_region
        %s150 = ssub.s32 %s16, 1
        // Predicated region
        $region13: #{tpu_custom_call.1} parent=11 // pred_check
          %p151 = pneg %p89
        $region14: #{tpu_custom_call.1} parent=11 // pred_check_branch
          %153 = sbr.rel (%p151) target = $region16
        $region15: #{tpu_custom_call.1} parent=11 // pred_region
          _
        $region16: #{tpu_custom_call.1} parent=11 // pred_fallthru
          _
        // Predicated region
        $region17: #{tpu_custom_call.1} parent=11 // pred_check
          %p154 = pneg %p110
        $region18: #{tpu_custom_call.1} parent=11 // pred_check_branch
          %156 = sbr.rel (%p154) target = $region20
        $region19: #{tpu_custom_call.1} parent=11 // pred_region
          _
        $region20: #{tpu_custom_call.1} parent=11 // pred_fallthru
          _
      $region12: #{tpu_custom_call.1} parent=5 // pred_fallthru
        _
      %p157 = scmp.lt.s32.totalorder %s16, 2
      // Predicated region
      $region21: #{tpu_custom_call.1} parent=5 // pred_check
        %p158 = pneg %p157
      $region22: #{tpu_custom_call.1} parent=5 // pred_check_branch
        %160 = sbr.rel (%p158) target = $region24
      $region23: #{tpu_custom_call.1} parent=5 // pred_region
        // Predicated region
        $region25: #{tpu_custom_call.1} parent=23 // pred_check
          %p161 = pneg %p36
        $region26: #{tpu_custom_call.1} parent=23 // pred_check_branch
          %163 = sbr.rel (%p161) target = $region28
        $region27: #{tpu_custom_call.1} parent=23 // pred_region
          %s164 = sand.u32 %s26, 1
          %s165 = scalar_lea.sflag [#allocation3], %s164
          %s166 = sand.u32 %s26, 1
          %s167 = smul.addr %s166, 1024
          %s168 = scalar_lea.vmem [#allocation2], %s167
          %s169 = smul.u32 8, %s16
          %s171 = ssub.s32 16384, 16384
          %172 = vsyncadd %s165, %s171
          %s173 = smul.addr %s169, 32
          %s174 = smul.addr %s173, 64
          %s175 = scalar_lea.hbm %s0, %s174
          %s176 = sshll.u32 %s168, 4
          %s177 = int_to_ptr.vmem [resolvable:$true] %s176
          %182 = dma.hbm_to_vmem [thread:$0]  %s175, 16384, %s177, %s165, 1024, 1024, 64
        $region28: #{tpu_custom_call.1} parent=23 // pred_fallthru
          _
        // Predicated region
        $region29: #{tpu_custom_call.1} parent=23 // pred_check
          %p183 = pneg %p62
        $region30: #{tpu_custom_call.1} parent=23 // pred_check_branch
          %185 = sbr.rel (%p183) target = $region32
        $region31: #{tpu_custom_call.1} parent=23 // pred_region
          %p186 = scmp.lt.s32.totalorder %s16, 1
          %s187 = scalar_select %p186, %s16, 1
          %s188 = smul.addr %s187, 16
          %s189 = smul.addr %s188, 8
          %s190 = scalar_lea.vmem %s1, %s189
        $region32: #{tpu_custom_call.1} parent=23 // pred_fallthru
          _
      $region24: #{tpu_custom_call.1} parent=5 // pred_fallthru
        _
      %p191 = scmp.le.s32.totalorder 1, %s16
      %p192 = scmp.lt.s32.totalorder %s16, 3
      %p193 = pnand %p191, %p192
      %p194 = pneg %p193
      // Predicated region
      $region33: #{tpu_custom_call.1} parent=5 // pred_check
        _
      $region34: #{tpu_custom_call.1} parent=5 // pred_check_branch
        %196 = sbr.rel (%p193) target = $region36
      $region35: #{tpu_custom_call.1} parent=5 // pred_region
        %s197 = ssub.s32 %s16, 1
        %s198 = sand.u32 %s29, 1
        %s199 = scalar_lea.sflag [#allocation3], %s198
        %s200 = sand.u32 %s29, 1
        %s201 = smul.addr %s200, 1024
        %s202 = scalar_lea.vmem [#allocation2], %s201
        // Predicated region
        $region37: #{tpu_custom_call.1} parent=35 // pred_check
          %p203 = pneg %p42
        $region38: #{tpu_custom_call.1} parent=35 // pred_check_branch
          %205 = sbr.rel (%p203) target = $region40
        $region39: #{tpu_custom_call.1} parent=35 // pred_region
          %206 = dma.done %s199, 16384
        $region40: #{tpu_custom_call.1} parent=35 // pred_fallthru
          _
        %s207 = sand.u32 %s29, 1
        %s208 = scalar_lea.sflag [#allocation3], %s207
        %s209 = sand.u32 %s29, 1
        %s210 = smul.addr %s209, 1024
        %s211 = scalar_lea.vmem [#allocation2], %s210
        %p212 = pneg %p42
        %p213 = pneg %p39
        %p214 = scmp.lt.s32.totalorder %s21, 1
        %s215 = scalar_select %p214, %s21, 1
        %s216 = smul.addr %s215, 16
        %s217 = smul.addr %s216, 8
        %s218 = scalar_lea.vmem %s1, %s217
        %p219 = pneg %p68
        %p220 = pneg %p65
        %p221 = pneg %p89
        %p222 = pneg %p86
        %p223 = pneg %p110
        %p224 = pneg %p107
        %p225 = pneg %p136
        %p226 = pneg %p133
        %s227 = sand.u32 %s123, 1
        %s228 = scalar_lea.sflag [#allocation4], %s227
        %s229 = sand.u32 %s123, 1
        %s230 = smul.addr %s229, 8
        %s231 = scalar_lea.vmem [#allocation5], %s230
        %s232 = smul.u32 8, %s21
        %p233 = scmp.lt.s32.totalorder %s21, 1
        %s234 = scalar_select %p233, %s21, 1
        %s235 = smul.addr %s234, 16
        %s236 = smul.addr %s235, 8
        %s237 = scalar_lea.vmem %s1, %s236
        %v239 = vld [vmem:[%s202] sm:$0xff]
        %v240 = vld [vmem:[%s202 + $0x8] sm:$0xff]
        %v241 = vld [vmem:[%s202 + $0x10] sm:$0xff]
        %v242 = vld [vmem:[%s202 + $0x18] sm:$0xff]
        %v243 = vld [vmem:[%s202 + $0x20] sm:$0xff]
        %v244 = vld [vmem:[%s202 + $0x28] sm:$0xff]
        %v245 = vld [vmem:[%s202 + $0x30] sm:$0xff]
        %v246 = vld [vmem:[%s202 + $0x38] sm:$0xff]
        %v247 = vld [vmem:[%s202 + $0x40] sm:$0xff]
        %v248 = vld [vmem:[%s202 + $0x48] sm:$0xff]
        %v249 = vld [vmem:[%s202 + $0x50] sm:$0xff]
        %v250 = vld [vmem:[%s202 + $0x58] sm:$0xff]
        %v251 = vld [vmem:[%s202 + $0x60] sm:$0xff]
        %v252 = vld [vmem:[%s202 + $0x68] sm:$0xff]
        %v253 = vld [vmem:[%s202 + $0x70] sm:$0xff]
        %v254 = vld [vmem:[%s202 + $0x78] sm:$0xff]
        %v255 = vld [vmem:[%s202 + $0x80] sm:$0xff]
        %v256 = vld [vmem:[%s202 + $0x88] sm:$0xff]
        %v257 = vld [vmem:[%s202 + $0x90] sm:$0xff]
        %v258 = vld [vmem:[%s202 + $0x98] sm:$0xff]
        %v259 = vld [vmem:[%s202 + $0xa0] sm:$0xff]
        %v260 = vld [vmem:[%s202 + $0xa8] sm:$0xff]
        %v261 = vld [vmem:[%s202 + $0xb0] sm:$0xff]
        %v262 = vld [vmem:[%s202 + $0xb8] sm:$0xff]
        %v263 = vld [vmem:[%s202 + $0xc0] sm:$0xff]
        %v264 = vld [vmem:[%s202 + $0xc8] sm:$0xff]
        %v265 = vld [vmem:[%s202 + $0xd0] sm:$0xff]
        %v266 = vld [vmem:[%s202 + $0xd8] sm:$0xff]
        %v267 = vld [vmem:[%s202 + $0xe0] sm:$0xff]
        %v268 = vld [vmem:[%s202 + $0xe8] sm:$0xff]
        %v269 = vld [vmem:[%s202 + $0xf0] sm:$0xff]
        %v270 = vld [vmem:[%s202 + $0xf8] sm:$0xff]
        %v271 = vld [vmem:[%s202 + $0x100] sm:$0xff]
        %v272 = vld [vmem:[%s202 + $0x108] sm:$0xff]
        %v273 = vld [vmem:[%s202 + $0x110] sm:$0xff]
        %v274 = vld [vmem:[%s202 + $0x118] sm:$0xff]
        %v275 = vld [vmem:[%s202 + $0x120] sm:$0xff]
        %v276 = vld [vmem:[%s202 + $0x128] sm:$0xff]
        %v277 = vld [vmem:[%s202 + $0x130] sm:$0xff]
        %v278 = vld [vmem:[%s202 + $0x138] sm:$0xff]
        %v279 = vld [vmem:[%s202 + $0x140] sm:$0xff]
        %v280 = vld [vmem:[%s202 + $0x148] sm:$0xff]
        %v281 = vld [vmem:[%s202 + $0x150] sm:$0xff]
        %v282 = vld [vmem:[%s202 + $0x158] sm:$0xff]
        %v283 = vld [vmem:[%s202 + $0x160] sm:$0xff]
        %v284 = vld [vmem:[%s202 + $0x168] sm:$0xff]
        %v285 = vld [vmem:[%s202 + $0x170] sm:$0xff]
        %v286 = vld [vmem:[%s202 + $0x178] sm:$0xff]
        %v287 = vld [vmem:[%s202 + $0x180] sm:$0xff]
        %v288 = vld [vmem:[%s202 + $0x188] sm:$0xff]
        %v289 = vld [vmem:[%s202 + $0x190] sm:$0xff]
        %v290 = vld [vmem:[%s202 + $0x198] sm:$0xff]
        %v291 = vld [vmem:[%s202 + $0x1a0] sm:$0xff]
        %v292 = vld [vmem:[%s202 + $0x1a8] sm:$0xff]
        %v293 = vld [vmem:[%s202 + $0x1b0] sm:$0xff]
        %v294 = vld [vmem:[%s202 + $0x1b8] sm:$0xff]
        %v295 = vld [vmem:[%s202 + $0x1c0] sm:$0xff]
        %v296 = vld [vmem:[%s202 + $0x1c8] sm:$0xff]
        %v297 = vld [vmem:[%s202 + $0x1d0] sm:$0xff]
        %v298 = vld [vmem:[%s202 + $0x1d8] sm:$0xff]
        %v299 = vld [vmem:[%s202 + $0x1e0] sm:$0xff]
        %v300 = vld [vmem:[%s202 + $0x1e8] sm:$0xff]
        %v301 = vld [vmem:[%s202 + $0x1f0] sm:$0xff]
        %v302 = vld [vmem:[%s202 + $0x1f8] sm:$0xff]
        %v303 = vld [vmem:[%s202 + $0x200] sm:$0xff]
        %v304 = vld [vmem:[%s202 + $0x208] sm:$0xff]
        %v305 = vld [vmem:[%s202 + $0x210] sm:$0xff]
        %v306 = vld [vmem:[%s202 + $0x218] sm:$0xff]
        %v307 = vld [vmem:[%s202 + $0x220] sm:$0xff]
        %v308 = vld [vmem:[%s202 + $0x228] sm:$0xff]
        %v309 = vld [vmem:[%s202 + $0x230] sm:$0xff]
        %v310 = vld [vmem:[%s202 + $0x238] sm:$0xff]
        %v311 = vld [vmem:[%s202 + $0x240] sm:$0xff]
        %v312 = vld [vmem:[%s202 + $0x248] sm:$0xff]
        %v313 = vld [vmem:[%s202 + $0x250] sm:$0xff]
        %v314 = vld [vmem:[%s202 + $0x258] sm:$0xff]
        %v315 = vld [vmem:[%s202 + $0x260] sm:$0xff]
        %v316 = vld [vmem:[%s202 + $0x268] sm:$0xff]
        %v317 = vld [vmem:[%s202 + $0x270] sm:$0xff]
        %v318 = vld [vmem:[%s202 + $0x278] sm:$0xff]
        %v319 = vld [vmem:[%s202 + $0x280] sm:$0xff]
        %v320 = vld [vmem:[%s202 + $0x288] sm:$0xff]
        %v321 = vld [vmem:[%s202 + $0x290] sm:$0xff]
        %v322 = vld [vmem:[%s202 + $0x298] sm:$0xff]
        %v323 = vld [vmem:[%s202 + $0x2a0] sm:$0xff]
        %v324 = vld [vmem:[%s202 + $0x2a8] sm:$0xff]
        %v325 = vld [vmem:[%s202 + $0x2b0] sm:$0xff]
        %v326 = vld [vmem:[%s202 + $0x2b8] sm:$0xff]
        %v327 = vld [vmem:[%s202 + $0x2c0] sm:$0xff]
        %v328 = vld [vmem:[%s202 + $0x2c8] sm:$0xff]
        %v329 = vld [vmem:[%s202 + $0x2d0] sm:$0xff]
        %v330 = vld [vmem:[%s202 + $0x2d8] sm:$0xff]
        %v331 = vld [vmem:[%s202 + $0x2e0] sm:$0xff]
        %v332 = vld [vmem:[%s202 + $0x2e8] sm:$0xff]
        %v333 = vld [vmem:[%s202 + $0x2f0] sm:$0xff]
        %v334 = vld [vmem:[%s202 + $0x2f8] sm:$0xff]
        %v335 = vld [vmem:[%s202 + $0x300] sm:$0xff]
        %v336 = vld [vmem:[%s202 + $0x308] sm:$0xff]
        %v337 = vld [vmem:[%s202 + $0x310] sm:$0xff]
        %v338 = vld [vmem:[%s202 + $0x318] sm:$0xff]
        %v339 = vld [vmem:[%s202 + $0x320] sm:$0xff]
        %v340 = vld [vmem:[%s202 + $0x328] sm:$0xff]
        %v341 = vld [vmem:[%s202 + $0x330] sm:$0xff]
        %v342 = vld [vmem:[%s202 + $0x338] sm:$0xff]
        %v343 = vld [vmem:[%s202 + $0x340] sm:$0xff]
        %v344 = vld [vmem:[%s202 + $0x348] sm:$0xff]
        %v345 = vld [vmem:[%s202 + $0x350] sm:$0xff]
        %v346 = vld [vmem:[%s202 + $0x358] sm:$0xff]
        %v347 = vld [vmem:[%s202 + $0x360] sm:$0xff]
        %v348 = vld [vmem:[%s202 + $0x368] sm:$0xff]
        %v349 = vld [vmem:[%s202 + $0x370] sm:$0xff]
        %v350 = vld [vmem:[%s202 + $0x378] sm:$0xff]
        %v351 = vld [vmem:[%s202 + $0x380] sm:$0xff]
        %v352 = vld [vmem:[%s202 + $0x388] sm:$0xff]
        %v353 = vld [vmem:[%s202 + $0x390] sm:$0xff]
        %v354 = vld [vmem:[%s202 + $0x398] sm:$0xff]
        %v355 = vld [vmem:[%s202 + $0x3a0] sm:$0xff]
        %v356 = vld [vmem:[%s202 + $0x3a8] sm:$0xff]
        %v357 = vld [vmem:[%s202 + $0x3b0] sm:$0xff]
        %v358 = vld [vmem:[%s202 + $0x3b8] sm:$0xff]
        %v359 = vld [vmem:[%s202 + $0x3c0] sm:$0xff]
        %v360 = vld [vmem:[%s202 + $0x3c8] sm:$0xff]
        %v361 = vld [vmem:[%s202 + $0x3d0] sm:$0xff]
        %v362 = vld [vmem:[%s202 + $0x3d8] sm:$0xff]
        %v363 = vld [vmem:[%s202 + $0x3e0] sm:$0xff]
        %v364 = vld [vmem:[%s202 + $0x3e8] sm:$0xff]
        %v365 = vld [vmem:[%s202 + $0x3f0] sm:$0xff]
        %v366 = vld [vmem:[%s202 + $0x3f8] sm:$0xff]
        %v367 = vunpack.c.l.bf16 %v239
        %v368 = vunpack.c.h.bf16 %v239
        %v369 = vunpack.c.l.bf16 %v240
        %v370 = vunpack.c.h.bf16 %v240
        %v371 = vunpack.c.l.bf16 %v241
        %v372 = vunpack.c.h.bf16 %v241
        %v373 = vunpack.c.l.bf16 %v242
        %v374 = vunpack.c.h.bf16 %v242
        %v375 = vunpack.c.l.bf16 %v243
        %v376 = vunpack.c.h.bf16 %v243
        %v377 = vunpack.c.l.bf16 %v244
        %v378 = vunpack.c.h.bf16 %v244
        %v379 = vunpack.c.l.bf16 %v245
        %v380 = vunpack.c.h.bf16 %v245
        %v381 = vunpack.c.l.bf16 %v246
        %v382 = vunpack.c.h.bf16 %v246
        %v383 = vunpack.c.l.bf16 %v247
        %v384 = vunpack.c.h.bf16 %v247
        %v385 = vunpack.c.l.bf16 %v248
        %v386 = vunpack.c.h.bf16 %v248
        %v387 = vunpack.c.l.bf16 %v249
        %v388 = vunpack.c.h.bf16 %v249
        %v389 = vunpack.c.l.bf16 %v250
        %v390 = vunpack.c.h.bf16 %v250
        %v391 = vunpack.c.l.bf16 %v251
        %v392 = vunpack.c.h.bf16 %v251
        %v393 = vunpack.c.l.bf16 %v252
        %v394 = vunpack.c.h.bf16 %v252
        %v395 = vunpack.c.l.bf16 %v253
        %v396 = vunpack.c.h.bf16 %v253
        %v397 = vunpack.c.l.bf16 %v254
        %v398 = vunpack.c.h.bf16 %v254
        %v399 = vunpack.c.l.bf16 %v255
        %v400 = vunpack.c.h.bf16 %v255
        %v401 = vunpack.c.l.bf16 %v256
        %v402 = vunpack.c.h.bf16 %v256
        %v403 = vunpack.c.l.bf16 %v257
        %v404 = vunpack.c.h.bf16 %v257
        %v405 = vunpack.c.l.bf16 %v258
        %v406 = vunpack.c.h.bf16 %v258
        %v407 = vunpack.c.l.bf16 %v259
        %v408 = vunpack.c.h.bf16 %v259
        %v409 = vunpack.c.l.bf16 %v260
        %v410 = vunpack.c.h.bf16 %v260
        %v411 = vunpack.c.l.bf16 %v261
        %v412 = vunpack.c.h.bf16 %v261
        %v413 = vunpack.c.l.bf16 %v262
        %v414 = vunpack.c.h.bf16 %v262
        %v415 = vunpack.c.l.bf16 %v263
        %v416 = vunpack.c.h.bf16 %v263
        %v417 = vunpack.c.l.bf16 %v264
        %v418 = vunpack.c.h.bf16 %v264
        %v419 = vunpack.c.l.bf16 %v265
        %v420 = vunpack.c.h.bf16 %v265
        %v421 = vunpack.c.l.bf16 %v266
        %v422 = vunpack.c.h.bf16 %v266
        %v423 = vunpack.c.l.bf16 %v267
        %v424 = vunpack.c.h.bf16 %v267
        %v425 = vunpack.c.l.bf16 %v268
        %v426 = vunpack.c.h.bf16 %v268
        %v427 = vunpack.c.l.bf16 %v269
        %v428 = vunpack.c.h.bf16 %v269
        %v429 = vunpack.c.l.bf16 %v270
        %v430 = vunpack.c.h.bf16 %v270
        %v431 = vunpack.c.l.bf16 %v271
        %v432 = vunpack.c.h.bf16 %v271
        %v433 = vunpack.c.l.bf16 %v272
        %v434 = vunpack.c.h.bf16 %v272
        %v435 = vunpack.c.l.bf16 %v273
        %v436 = vunpack.c.h.bf16 %v273
        %v437 = vunpack.c.l.bf16 %v274
        %v438 = vunpack.c.h.bf16 %v274
        %v439 = vunpack.c.l.bf16 %v275
        %v440 = vunpack.c.h.bf16 %v275
        %v441 = vunpack.c.l.bf16 %v276
        %v442 = vunpack.c.h.bf16 %v276
        %v443 = vunpack.c.l.bf16 %v277
        %v444 = vunpack.c.h.bf16 %v277
        %v445 = vunpack.c.l.bf16 %v278
        %v446 = vunpack.c.h.bf16 %v278
        %v447 = vunpack.c.l.bf16 %v279
        %v448 = vunpack.c.h.bf16 %v279
        %v449 = vunpack.c.l.bf16 %v280
        %v450 = vunpack.c.h.bf16 %v280
        %v451 = vunpack.c.l.bf16 %v281
        %v452 = vunpack.c.h.bf16 %v281
        %v453 = vunpack.c.l.bf16 %v282
        %v454 = vunpack.c.h.bf16 %v282
        %v455 = vunpack.c.l.bf16 %v283
        %v456 = vunpack.c.h.bf16 %v283
        %v457 = vunpack.c.l.bf16 %v284
        %v458 = vunpack.c.h.bf16 %v284
        %v459 = vunpack.c.l.bf16 %v285
        %v460 = vunpack.c.h.bf16 %v285
        %v461 = vunpack.c.l.bf16 %v286
        %v462 = vunpack.c.h.bf16 %v286
        %v463 = vunpack.c.l.bf16 %v287
        %v464 = vunpack.c.h.bf16 %v287
        %v465 = vunpack.c.l.bf16 %v288
        %v466 = vunpack.c.h.bf16 %v288
        %v467 = vunpack.c.l.bf16 %v289
        %v468 = vunpack.c.h.bf16 %v289
        %v469 = vunpack.c.l.bf16 %v290
        %v470 = vunpack.c.h.bf16 %v290
        %v471 = vunpack.c.l.bf16 %v291
        %v472 = vunpack.c.h.bf16 %v291
        %v473 = vunpack.c.l.bf16 %v292
        %v474 = vunpack.c.h.bf16 %v292
        %v475 = vunpack.c.l.bf16 %v293
        %v476 = vunpack.c.h.bf16 %v293
        %v477 = vunpack.c.l.bf16 %v294
        %v478 = vunpack.c.h.bf16 %v294
        %v479 = vunpack.c.l.bf16 %v295
        %v480 = vunpack.c.h.bf16 %v295
        %v481 = vunpack.c.l.bf16 %v296
        %v482 = vunpack.c.h.bf16 %v296
        %v483 = vunpack.c.l.bf16 %v297
        %v484 = vunpack.c.h.bf16 %v297
        %v485 = vunpack.c.l.bf16 %v298
        %v486 = vunpack.c.h.bf16 %v298
        %v487 = vunpack.c.l.bf16 %v299
        %v488 = vunpack.c.h.bf16 %v299
        %v489 = vunpack.c.l.bf16 %v300
        %v490 = vunpack.c.h.bf16 %v300
        %v491 = vunpack.c.l.bf16 %v301
        %v492 = vunpack.c.h.bf16 %v301
        %v493 = vunpack.c.l.bf16 %v302
        %v494 = vunpack.c.h.bf16 %v302
        %v495 = vunpack.c.l.bf16 %v303
        %v496 = vunpack.c.h.bf16 %v303
        %v497 = vunpack.c.l.bf16 %v304
        %v498 = vunpack.c.h.bf16 %v304
        %v499 = vunpack.c.l.bf16 %v305
        %v500 = vunpack.c.h.bf16 %v305
        %v501 = vunpack.c.l.bf16 %v306
        %v502 = vunpack.c.h.bf16 %v306
        %v503 = vunpack.c.l.bf16 %v307
        %v504 = vunpack.c.h.bf16 %v307
        %v505 = vunpack.c.l.bf16 %v308
        %v506 = vunpack.c.h.bf16 %v308
        %v507 = vunpack.c.l.bf16 %v309
        %v508 = vunpack.c.h.bf16 %v309
        %v509 = vunpack.c.l.bf16 %v310
        %v510 = vunpack.c.h.bf16 %v310
        %v511 = vunpack.c.l.bf16 %v311
        %v512 = vunpack.c.h.bf16 %v311
        %v513 = vunpack.c.l.bf16 %v312
        %v514 = vunpack.c.h.bf16 %v312
        %v515 = vunpack.c.l.bf16 %v313
        %v516 = vunpack.c.h.bf16 %v313
        %v517 = vunpack.c.l.bf16 %v314
        %v518 = vunpack.c.h.bf16 %v314
        %v519 = vunpack.c.l.bf16 %v315
        %v520 = vunpack.c.h.bf16 %v315
        %v521 = vunpack.c.l.bf16 %v316
        %v522 = vunpack.c.h.bf16 %v316
        %v523 = vunpack.c.l.bf16 %v317
        %v524 = vunpack.c.h.bf16 %v317
        %v525 = vunpack.c.l.bf16 %v318
        %v526 = vunpack.c.h.bf16 %v318
        %v527 = vunpack.c.l.bf16 %v319
        %v528 = vunpack.c.h.bf16 %v319
        %v529 = vunpack.c.l.bf16 %v320
        %v530 = vunpack.c.h.bf16 %v320
        %v531 = vunpack.c.l.bf16 %v321
        %v532 = vunpack.c.h.bf16 %v321
        %v533 = vunpack.c.l.bf16 %v322
        %v534 = vunpack.c.h.bf16 %v322
        %v535 = vunpack.c.l.bf16 %v323
        %v536 = vunpack.c.h.bf16 %v323
        %v537 = vunpack.c.l.bf16 %v324
        %v538 = vunpack.c.h.bf16 %v324
        %v539 = vunpack.c.l.bf16 %v325
        %v540 = vunpack.c.h.bf16 %v325
        %v541 = vunpack.c.l.bf16 %v326
        %v542 = vunpack.c.h.bf16 %v326
        %v543 = vunpack.c.l.bf16 %v327
        %v544 = vunpack.c.h.bf16 %v327
        %v545 = vunpack.c.l.bf16 %v328
        %v546 = vunpack.c.h.bf16 %v328
        %v547 = vunpack.c.l.bf16 %v329
        %v548 = vunpack.c.h.bf16 %v329
        %v549 = vunpack.c.l.bf16 %v330
        %v550 = vunpack.c.h.bf16 %v330
        %v551 = vunpack.c.l.bf16 %v331
        %v552 = vunpack.c.h.bf16 %v331
        %v553 = vunpack.c.l.bf16 %v332
        %v554 = vunpack.c.h.bf16 %v332
        %v555 = vunpack.c.l.bf16 %v333
        %v556 = vunpack.c.h.bf16 %v333
        %v557 = vunpack.c.l.bf16 %v334
        %v558 = vunpack.c.h.bf16 %v334
        %v559 = vunpack.c.l.bf16 %v335
        %v560 = vunpack.c.h.bf16 %v335
        %v561 = vunpack.c.l.bf16 %v336
        %v562 = vunpack.c.h.bf16 %v336
        %v563 = vunpack.c.l.bf16 %v337
        %v564 = vunpack.c.h.bf16 %v337
        %v565 = vunpack.c.l.bf16 %v338
        %v566 = vunpack.c.h.bf16 %v338
        %v567 = vunpack.c.l.bf16 %v339
        %v568 = vunpack.c.h.bf16 %v339
        %v569 = vunpack.c.l.bf16 %v340
        %v570 = vunpack.c.h.bf16 %v340
        %v571 = vunpack.c.l.bf16 %v341
        %v572 = vunpack.c.h.bf16 %v341
        %v573 = vunpack.c.l.bf16 %v342
        %v574 = vunpack.c.h.bf16 %v342
        %v575 = vunpack.c.l.bf16 %v343
        %v576 = vunpack.c.h.bf16 %v343
        %v577 = vunpack.c.l.bf16 %v344
        %v578 = vunpack.c.h.bf16 %v344
        %v579 = vunpack.c.l.bf16 %v345
        %v580 = vunpack.c.h.bf16 %v345
        %v581 = vunpack.c.l.bf16 %v346
        %v582 = vunpack.c.h.bf16 %v346
        %v583 = vunpack.c.l.bf16 %v347
        %v584 = vunpack.c.h.bf16 %v347
        %v585 = vunpack.c.l.bf16 %v348
        %v586 = vunpack.c.h.bf16 %v348
        %v587 = vunpack.c.l.bf16 %v349
        %v588 = vunpack.c.h.bf16 %v349
        %v589 = vunpack.c.l.bf16 %v350
        %v590 = vunpack.c.h.bf16 %v350
        %v591 = vunpack.c.l.bf16 %v351
        %v592 = vunpack.c.h.bf16 %v351
        %v593 = vunpack.c.l.bf16 %v352
        %v594 = vunpack.c.h.bf16 %v352
        %v595 = vunpack.c.l.bf16 %v353
        %v596 = vunpack.c.h.bf16 %v353
        %v597 = vunpack.c.l.bf16 %v354
        %v598 = vunpack.c.h.bf16 %v354
        %v599 = vunpack.c.l.bf16 %v355
        %v600 = vunpack.c.h.bf16 %v355
        %v601 = vunpack.c.l.bf16 %v356
        %v602 = vunpack.c.h.bf16 %v356
        %v603 = vunpack.c.l.bf16 %v357
        %v604 = vunpack.c.h.bf16 %v357
        %v605 = vunpack.c.l.bf16 %v358
        %v606 = vunpack.c.h.bf16 %v358
        %v607 = vunpack.c.l.bf16 %v359
        %v608 = vunpack.c.h.bf16 %v359
        %v609 = vunpack.c.l.bf16 %v360
        %v610 = vunpack.c.h.bf16 %v360
        %v611 = vunpack.c.l.bf16 %v361
        %v612 = vunpack.c.h.bf16 %v361
        %v613 = vunpack.c.l.bf16 %v362
        %v614 = vunpack.c.h.bf16 %v362
        %v615 = vunpack.c.l.bf16 %v363
        %v616 = vunpack.c.h.bf16 %v363
        %v617 = vunpack.c.l.bf16 %v364
        %v618 = vunpack.c.h.bf16 %v364
        %v619 = vunpack.c.l.bf16 %v365
        %v620 = vunpack.c.h.bf16 %v365
        %v621 = vunpack.c.l.bf16 %v366
        %v622 = vunpack.c.h.bf16 %v366
        %v623 = vadd.f32 %v367, %v383
        %v624 = vrot.slane %v623, 4
        %v625 = vadd.f32 %v623, %v624
        %v626 = vrot.slane %v625, 2
        %v627 = vadd.f32 %v625, %v626
        %v628 = vrot.slane %v627, 1
        %v629 = vadd.f32 %v627, %v628
        %v630 = vadd.f32 %v368, %v384
        %v631 = vrot.slane %v630, 4
        %v632 = vadd.f32 %v630, %v631
        %v633 = vrot.slane %v632, 2
        %v634 = vadd.f32 %v632, %v633
        %v635 = vrot.slane %v634, 1
        %v636 = vadd.f32 %v634, %v635
        %v637 = vadd.f32 %v369, %v385
        %v638 = vrot.slane %v637, 4
        %v639 = vadd.f32 %v637, %v638
        %v640 = vrot.slane %v639, 2
        %v641 = vadd.f32 %v639, %v640
        %v642 = vrot.slane %v641, 1
        %v643 = vadd.f32 %v641, %v642
        %v644 = vadd.f32 %v370, %v386
        %v645 = vrot.slane %v644, 4
        %v646 = vadd.f32 %v644, %v645
        %v647 = vrot.slane %v646, 2
        %v648 = vadd.f32 %v646, %v647
        %v649 = vrot.slane %v648, 1
        %v650 = vadd.f32 %v648, %v649
        %v651 = vadd.f32 %v371, %v387
        %v652 = vrot.slane %v651, 4
        %v653 = vadd.f32 %v651, %v652
        %v654 = vrot.slane %v653, 2
        %v655 = vadd.f32 %v653, %v654
        %v656 = vrot.slane %v655, 1
        %v657 = vadd.f32 %v655, %v656
        %v658 = vadd.f32 %v372, %v388
        %v659 = vrot.slane %v658, 4
        %v660 = vadd.f32 %v658, %v659
        %v661 = vrot.slane %v660, 2
        %v662 = vadd.f32 %v660, %v661
        %v663 = vrot.slane %v662, 1
        %v664 = vadd.f32 %v662, %v663
        %v665 = vadd.f32 %v373, %v389
        %v666 = vrot.slane %v665, 4
        %v667 = vadd.f32 %v665, %v666
        %v668 = vrot.slane %v667, 2
        %v669 = vadd.f32 %v667, %v668
        %v670 = vrot.slane %v669, 1
        %v671 = vadd.f32 %v669, %v670
        %v672 = vadd.f32 %v374, %v390
        %v673 = vrot.slane %v672, 4
        %v674 = vadd.f32 %v672, %v673
        %v675 = vrot.slane %v674, 2
        %v676 = vadd.f32 %v674, %v675
        %v677 = vrot.slane %v676, 1
        %v678 = vadd.f32 %v676, %v677
        %v679 = vadd.f32 %v375, %v391
        %v680 = vrot.slane %v679, 4
        %v681 = vadd.f32 %v679, %v680
        %v682 = vrot.slane %v681, 2
        %v683 = vadd.f32 %v681, %v682
        %v684 = vrot.slane %v683, 1
        %v685 = vadd.f32 %v683, %v684
        %v686 = vadd.f32 %v376, %v392
        %v687 = vrot.slane %v686, 4
        %v688 = vadd.f32 %v686, %v687
        %v689 = vrot.slane %v688, 2
        %v690 = vadd.f32 %v688, %v689
        %v691 = vrot.slane %v690, 1
        %v692 = vadd.f32 %v690, %v691
        %v693 = vadd.f32 %v377, %v393
        %v694 = vrot.slane %v693, 4
        %v695 = vadd.f32 %v693, %v694
        %v696 = vrot.slane %v695, 2
        %v697 = vadd.f32 %v695, %v696
        %v698 = vrot.slane %v697, 1
        %v699 = vadd.f32 %v697, %v698
        %v700 = vadd.f32 %v378, %v394
        %v701 = vrot.slane %v700, 4
        %v702 = vadd.f32 %v700, %v701
        %v703 = vrot.slane %v702, 2
        %v704 = vadd.f32 %v702, %v703
        %v705 = vrot.slane %v704, 1
        %v706 = vadd.f32 %v704, %v705
        %v707 = vadd.f32 %v379, %v395
        %v708 = vrot.slane %v707, 4
        %v709 = vadd.f32 %v707, %v708
        %v710 = vrot.slane %v709, 2
        %v711 = vadd.f32 %v709, %v710
        %v712 = vrot.slane %v711, 1
        %v713 = vadd.f32 %v711, %v712
        %v714 = vadd.f32 %v380, %v396
        %v715 = vrot.slane %v714, 4
        %v716 = vadd.f32 %v714, %v715
        %v717 = vrot.slane %v716, 2
        %v718 = vadd.f32 %v716, %v717
        %v719 = vrot.slane %v718, 1
        %v720 = vadd.f32 %v718, %v719
        %v721 = vadd.f32 %v381, %v397
        %v722 = vrot.slane %v721, 4
        %v723 = vadd.f32 %v721, %v722
        %v724 = vrot.slane %v723, 2
        %v725 = vadd.f32 %v723, %v724
        %v726 = vrot.slane %v725, 1
        %v727 = vadd.f32 %v725, %v726
        %v728 = vadd.f32 %v382, %v398
        %v729 = vrot.slane %v728, 4
        %v730 = vadd.f32 %v728, %v729
        %v731 = vrot.slane %v730, 2
        %v732 = vadd.f32 %v730, %v731
        %v733 = vrot.slane %v732, 1
        %v734 = vadd.f32 %v732, %v733
        %v735 = vadd.f32 %v399, %v415
        %v736 = vrot.slane %v735, 4
        %v737 = vadd.f32 %v735, %v736
        %v738 = vrot.slane %v737, 2
        %v739 = vadd.f32 %v737, %v738
        %v740 = vrot.slane %v739, 1
        %v741 = vadd.f32 %v739, %v740
        %v742 = vadd.f32 %v400, %v416
        %v743 = vrot.slane %v742, 4
        %v744 = vadd.f32 %v742, %v743
        %v745 = vrot.slane %v744, 2
        %v746 = vadd.f32 %v744, %v745
        %v747 = vrot.slane %v746, 1
        %v748 = vadd.f32 %v746, %v747
        %v749 = vadd.f32 %v401, %v417
        %v750 = vrot.slane %v749, 4
        %v751 = vadd.f32 %v749, %v750
        %v752 = vrot.slane %v751, 2
        %v753 = vadd.f32 %v751, %v752
        %v754 = vrot.slane %v753, 1
        %v755 = vadd.f32 %v753, %v754
        %v756 = vadd.f32 %v402, %v418
        %v757 = vrot.slane %v756, 4
        %v758 = vadd.f32 %v756, %v757
        %v759 = vrot.slane %v758, 2
        %v760 = vadd.f32 %v758, %v759
        %v761 = vrot.slane %v760, 1
        %v762 = vadd.f32 %v760, %v761
        %v763 = vadd.f32 %v403, %v419
        %v764 = vrot.slane %v763, 4
        %v765 = vadd.f32 %v763, %v764
        %v766 = vrot.slane %v765, 2
        %v767 = vadd.f32 %v765, %v766
        %v768 = vrot.slane %v767, 1
        %v769 = vadd.f32 %v767, %v768
        %v770 = vadd.f32 %v404, %v420
        %v771 = vrot.slane %v770, 4
        %v772 = vadd.f32 %v770, %v771
        %v773 = vrot.slane %v772, 2
        %v774 = vadd.f32 %v772, %v773
        %v775 = vrot.slane %v774, 1
        %v776 = vadd.f32 %v774, %v775
        %v777 = vadd.f32 %v405, %v421
        %v778 = vrot.slane %v777, 4
        %v779 = vadd.f32 %v777, %v778
        %v780 = vrot.slane %v779, 2
        %v781 = vadd.f32 %v779, %v780
        %v782 = vrot.slane %v781, 1
        %v783 = vadd.f32 %v781, %v782
        %v784 = vadd.f32 %v406, %v422
        %v785 = vrot.slane %v784, 4
        %v786 = vadd.f32 %v784, %v785
        %v787 = vrot.slane %v786, 2
        %v788 = vadd.f32 %v786, %v787
        %v789 = vrot.slane %v788, 1
        %v790 = vadd.f32 %v788, %v789
        %v791 = vadd.f32 %v407, %v423
        %v792 = vrot.slane %v791, 4
        %v793 = vadd.f32 %v791, %v792
        %v794 = vrot.slane %v793, 2
        %v795 = vadd.f32 %v793, %v794
        %v796 = vrot.slane %v795, 1
        %v797 = vadd.f32 %v795, %v796
        %v798 = vadd.f32 %v408, %v424
        %v799 = vrot.slane %v798, 4
        %v800 = vadd.f32 %v798, %v799
        %v801 = vrot.slane %v800, 2
        %v802 = vadd.f32 %v800, %v801
        %v803 = vrot.slane %v802, 1
        %v804 = vadd.f32 %v802, %v803
        %v805 = vadd.f32 %v409, %v425
        %v806 = vrot.slane %v805, 4
        %v807 = vadd.f32 %v805, %v806
        %v808 = vrot.slane %v807, 2
        %v809 = vadd.f32 %v807, %v808
        %v810 = vrot.slane %v809, 1
        %v811 = vadd.f32 %v809, %v810
        %v812 = vadd.f32 %v410, %v426
        %v813 = vrot.slane %v812, 4
        %v814 = vadd.f32 %v812, %v813
        %v815 = vrot.slane %v814, 2
        %v816 = vadd.f32 %v814, %v815
        %v817 = vrot.slane %v816, 1
        %v818 = vadd.f32 %v816, %v817
        %v819 = vadd.f32 %v411, %v427
        %v820 = vrot.slane %v819, 4
        %v821 = vadd.f32 %v819, %v820
        %v822 = vrot.slane %v821, 2
        %v823 = vadd.f32 %v821, %v822
        %v824 = vrot.slane %v823, 1
        %v825 = vadd.f32 %v823, %v824
        %v826 = vadd.f32 %v412, %v428
        %v827 = vrot.slane %v826, 4
        %v828 = vadd.f32 %v826, %v827
        %v829 = vrot.slane %v828, 2
        %v830 = vadd.f32 %v828, %v829
        %v831 = vrot.slane %v830, 1
        %v832 = vadd.f32 %v830, %v831
        %v833 = vadd.f32 %v413, %v429
        %v834 = vrot.slane %v833, 4
        %v835 = vadd.f32 %v833, %v834
        %v836 = vrot.slane %v835, 2
        %v837 = vadd.f32 %v835, %v836
        %v838 = vrot.slane %v837, 1
        %v839 = vadd.f32 %v837, %v838
        %v840 = vadd.f32 %v414, %v430
        %v841 = vrot.slane %v840, 4
        %v842 = vadd.f32 %v840, %v841
        %v843 = vrot.slane %v842, 2
        %v844 = vadd.f32 %v842, %v843
        %v845 = vrot.slane %v844, 1
        %v846 = vadd.f32 %v844, %v845
        %v847 = vadd.f32 %v431, %v447
        %v848 = vrot.slane %v847, 4
        %v849 = vadd.f32 %v847, %v848
        %v850 = vrot.slane %v849, 2
        %v851 = vadd.f32 %v849, %v850
        %v852 = vrot.slane %v851, 1
        %v853 = vadd.f32 %v851, %v852
        %v854 = vadd.f32 %v432, %v448
        %v855 = vrot.slane %v854, 4
        %v856 = vadd.f32 %v854, %v855
        %v857 = vrot.slane %v856, 2
        %v858 = vadd.f32 %v856, %v857
        %v859 = vrot.slane %v858, 1
        %v860 = vadd.f32 %v858, %v859
        %v861 = vadd.f32 %v433, %v449
        %v862 = vrot.slane %v861, 4
        %v863 = vadd.f32 %v861, %v862
        %v864 = vrot.slane %v863, 2
        %v865 = vadd.f32 %v863, %v864
        %v866 = vrot.slane %v865, 1
        %v867 = vadd.f32 %v865, %v866
        %v868 = vadd.f32 %v434, %v450
        %v869 = vrot.slane %v868, 4
        %v870 = vadd.f32 %v868, %v869
        %v871 = vrot.slane %v870, 2
        %v872 = vadd.f32 %v870, %v871
        %v873 = vrot.slane %v872, 1
        %v874 = vadd.f32 %v872, %v873
        %v875 = vadd.f32 %v435, %v451
        %v876 = vrot.slane %v875, 4
        %v877 = vadd.f32 %v875, %v876
        %v878 = vrot.slane %v877, 2
        %v879 = vadd.f32 %v877, %v878
        %v880 = vrot.slane %v879, 1
        %v881 = vadd.f32 %v879, %v880
        %v882 = vadd.f32 %v436, %v452
        %v883 = vrot.slane %v882, 4
        %v884 = vadd.f32 %v882, %v883
        %v885 = vrot.slane %v884, 2
        %v886 = vadd.f32 %v884, %v885
        %v887 = vrot.slane %v886, 1
        %v888 = vadd.f32 %v886, %v887
        %v889 = vadd.f32 %v437, %v453
        %v890 = vrot.slane %v889, 4
        %v891 = vadd.f32 %v889, %v890
        %v892 = vrot.slane %v891, 2
        %v893 = vadd.f32 %v891, %v892
        %v894 = vrot.slane %v893, 1
        %v895 = vadd.f32 %v893, %v894
        %v896 = vadd.f32 %v438, %v454
        %v897 = vrot.slane %v896, 4
        %v898 = vadd.f32 %v896, %v897
        %v899 = vrot.slane %v898, 2
        %v900 = vadd.f32 %v898, %v899
        %v901 = vrot.slane %v900, 1
        %v902 = vadd.f32 %v900, %v901
        %v903 = vadd.f32 %v439, %v455
        %v904 = vrot.slane %v903, 4
        %v905 = vadd.f32 %v903, %v904
        %v906 = vrot.slane %v905, 2
        %v907 = vadd.f32 %v905, %v906
        %v908 = vrot.slane %v907, 1
        %v909 = vadd.f32 %v907, %v908
        %v910 = vadd.f32 %v440, %v456
        %v911 = vrot.slane %v910, 4
        %v912 = vadd.f32 %v910, %v911
        %v913 = vrot.slane %v912, 2
        %v914 = vadd.f32 %v912, %v913
        %v915 = vrot.slane %v914, 1
        %v916 = vadd.f32 %v914, %v915
        %v917 = vadd.f32 %v441, %v457
        %v918 = vrot.slane %v917, 4
        %v919 = vadd.f32 %v917, %v918
        %v920 = vrot.slane %v919, 2
        %v921 = vadd.f32 %v919, %v920
        %v922 = vrot.slane %v921, 1
        %v923 = vadd.f32 %v921, %v922
        %v924 = vadd.f32 %v442, %v458
        %v925 = vrot.slane %v924, 4
        %v926 = vadd.f32 %v924, %v925
        %v927 = vrot.slane %v926, 2
        %v928 = vadd.f32 %v926, %v927
        %v929 = vrot.slane %v928, 1
        %v930 = vadd.f32 %v928, %v929
        %v931 = vadd.f32 %v443, %v459
        %v932 = vrot.slane %v931, 4
        %v933 = vadd.f32 %v931, %v932
        %v934 = vrot.slane %v933, 2
        %v935 = vadd.f32 %v933, %v934
        %v936 = vrot.slane %v935, 1
        %v937 = vadd.f32 %v935, %v936
        %v938 = vadd.f32 %v444, %v460
        %v939 = vrot.slane %v938, 4
        %v940 = vadd.f32 %v938, %v939
        %v941 = vrot.slane %v940, 2
        %v942 = vadd.f32 %v940, %v941
        %v943 = vrot.slane %v942, 1
        %v944 = vadd.f32 %v942, %v943
        %v945 = vadd.f32 %v445, %v461
        %v946 = vrot.slane %v945, 4
        %v947 = vadd.f32 %v945, %v946
        %v948 = vrot.slane %v947, 2
        %v949 = vadd.f32 %v947, %v948
        %v950 = vrot.slane %v949, 1
        %v951 = vadd.f32 %v949, %v950
        %v952 = vadd.f32 %v446, %v462
        %v953 = vrot.slane %v952, 4
        %v954 = vadd.f32 %v952, %v953
        %v955 = vrot.slane %v954, 2
        %v956 = vadd.f32 %v954, %v955
        %v957 = vrot.slane %v956, 1
        %v958 = vadd.f32 %v956, %v957
        %v959 = vadd.f32 %v463, %v479
        %v960 = vrot.slane %v959, 4
        %v961 = vadd.f32 %v959, %v960
        %v962 = vrot.slane %v961, 2
        %v963 = vadd.f32 %v961, %v962
        %v964 = vrot.slane %v963, 1
        %v965 = vadd.f32 %v963, %v964
        %v966 = vadd.f32 %v464, %v480
        %v967 = vrot.slane %v966, 4
        %v968 = vadd.f32 %v966, %v967
        %v969 = vrot.slane %v968, 2
        %v970 = vadd.f32 %v968, %v969
        %v971 = vrot.slane %v970, 1
        %v972 = vadd.f32 %v970, %v971
        %v973 = vadd.f32 %v465, %v481
        %v974 = vrot.slane %v973, 4
        %v975 = vadd.f32 %v973, %v974
        %v976 = vrot.slane %v975, 2
        %v977 = vadd.f32 %v975, %v976
        %v978 = vrot.slane %v977, 1
        %v979 = vadd.f32 %v977, %v978
        %v980 = vadd.f32 %v466, %v482
        %v981 = vrot.slane %v980, 4
        %v982 = vadd.f32 %v980, %v981
        %v983 = vrot.slane %v982, 2
        %v984 = vadd.f32 %v982, %v983
        %v985 = vrot.slane %v984, 1
        %v986 = vadd.f32 %v984, %v985
        %v987 = vadd.f32 %v467, %v483
        %v988 = vrot.slane %v987, 4
        %v989 = vadd.f32 %v987, %v988
        %v990 = vrot.slane %v989, 2
        %v991 = vadd.f32 %v989, %v990
        %v992 = vrot.slane %v991, 1
        %v993 = vadd.f32 %v991, %v992
        %v994 = vadd.f32 %v468, %v484
        %v995 = vrot.slane %v994, 4
        %v996 = vadd.f32 %v994, %v995
        %v997 = vrot.slane %v996, 2
        %v998 = vadd.f32 %v996, %v997
        %v999 = vrot.slane %v998, 1
        %v1000 = vadd.f32 %v998, %v999
        %v1001 = vadd.f32 %v469, %v485
        %v1002 = vrot.slane %v1001, 4
        %v1003 = vadd.f32 %v1001, %v1002
        %v1004 = vrot.slane %v1003, 2
        %v1005 = vadd.f32 %v1003, %v1004
        %v1006 = vrot.slane %v1005, 1
        %v1007 = vadd.f32 %v1005, %v1006
        %v1008 = vadd.f32 %v470, %v486
        %v1009 = vrot.slane %v1008, 4
        %v1010 = vadd.f32 %v1008, %v1009
        %v1011 = vrot.slane %v1010, 2
        %v1012 = vadd.f32 %v1010, %v1011
        %v1013 = vrot.slane %v1012, 1
        %v1014 = vadd.f32 %v1012, %v1013
        %v1015 = vadd.f32 %v471, %v487
        %v1016 = vrot.slane %v1015, 4
        %v1017 = vadd.f32 %v1015, %v1016
        %v1018 = vrot.slane %v1017, 2
        %v1019 = vadd.f32 %v1017, %v1018
        %v1020 = vrot.slane %v1019, 1
        %v1021 = vadd.f32 %v1019, %v1020
        %v1022 = vadd.f32 %v472, %v488
        %v1023 = vrot.slane %v1022, 4
        %v1024 = vadd.f32 %v1022, %v1023
        %v1025 = vrot.slane %v1024, 2
        %v1026 = vadd.f32 %v1024, %v1025
        %v1027 = vrot.slane %v1026, 1
        %v1028 = vadd.f32 %v1026, %v1027
        %v1029 = vadd.f32 %v473, %v489
        %v1030 = vrot.slane %v1029, 4
        %v1031 = vadd.f32 %v1029, %v1030
        %v1032 = vrot.slane %v1031, 2
        %v1033 = vadd.f32 %v1031, %v1032
        %v1034 = vrot.slane %v1033, 1
        %v1035 = vadd.f32 %v1033, %v1034
        %v1036 = vadd.f32 %v474, %v490
        %v1037 = vrot.slane %v1036, 4
        %v1038 = vadd.f32 %v1036, %v1037
        %v1039 = vrot.slane %v1038, 2
        %v1040 = vadd.f32 %v1038, %v1039
        %v1041 = vrot.slane %v1040, 1
        %v1042 = vadd.f32 %v1040, %v1041
        %v1043 = vadd.f32 %v475, %v491
        %v1044 = vrot.slane %v1043, 4
        %v1045 = vadd.f32 %v1043, %v1044
        %v1046 = vrot.slane %v1045, 2
        %v1047 = vadd.f32 %v1045, %v1046
        %v1048 = vrot.slane %v1047, 1
        %v1049 = vadd.f32 %v1047, %v1048
        %v1050 = vadd.f32 %v476, %v492
        %v1051 = vrot.slane %v1050, 4
        %v1052 = vadd.f32 %v1050, %v1051
        %v1053 = vrot.slane %v1052, 2
        %v1054 = vadd.f32 %v1052, %v1053
        %v1055 = vrot.slane %v1054, 1
        %v1056 = vadd.f32 %v1054, %v1055
        %v1057 = vadd.f32 %v477, %v493
        %v1058 = vrot.slane %v1057, 4
        %v1059 = vadd.f32 %v1057, %v1058
        %v1060 = vrot.slane %v1059, 2
        %v1061 = vadd.f32 %v1059, %v1060
        %v1062 = vrot.slane %v1061, 1
        %v1063 = vadd.f32 %v1061, %v1062
        %v1064 = vadd.f32 %v478, %v494
        %v1065 = vrot.slane %v1064, 4
        %v1066 = vadd.f32 %v1064, %v1065
        %v1067 = vrot.slane %v1066, 2
        %v1068 = vadd.f32 %v1066, %v1067
        %v1069 = vrot.slane %v1068, 1
        %v1070 = vadd.f32 %v1068, %v1069
        %v1071 = vadd.f32 %v495, %v511
        %v1072 = vrot.slane %v1071, 4
        %v1073 = vadd.f32 %v1071, %v1072
        %v1074 = vrot.slane %v1073, 2
        %v1075 = vadd.f32 %v1073, %v1074
        %v1076 = vrot.slane %v1075, 1
        %v1077 = vadd.f32 %v1075, %v1076
        %v1078 = vadd.f32 %v496, %v512
        %v1079 = vrot.slane %v1078, 4
        %v1080 = vadd.f32 %v1078, %v1079
        %v1081 = vrot.slane %v1080, 2
        %v1082 = vadd.f32 %v1080, %v1081
        %v1083 = vrot.slane %v1082, 1
        %v1084 = vadd.f32 %v1082, %v1083
        %v1085 = vadd.f32 %v497, %v513
        %v1086 = vrot.slane %v1085, 4
        %v1087 = vadd.f32 %v1085, %v1086
        %v1088 = vrot.slane %v1087, 2
        %v1089 = vadd.f32 %v1087, %v1088
        %v1090 = vrot.slane %v1089, 1
        %v1091 = vadd.f32 %v1089, %v1090
        %v1092 = vadd.f32 %v498, %v514
        %v1093 = vrot.slane %v1092, 4
        %v1094 = vadd.f32 %v1092, %v1093
        %v1095 = vrot.slane %v1094, 2
        %v1096 = vadd.f32 %v1094, %v1095
        %v1097 = vrot.slane %v1096, 1
        %v1098 = vadd.f32 %v1096, %v1097
        %v1099 = vadd.f32 %v499, %v515
        %v1100 = vrot.slane %v1099, 4
        %v1101 = vadd.f32 %v1099, %v1100
        %v1102 = vrot.slane %v1101, 2
        %v1103 = vadd.f32 %v1101, %v1102
        %v1104 = vrot.slane %v1103, 1
        %v1105 = vadd.f32 %v1103, %v1104
        %v1106 = vadd.f32 %v500, %v516
        %v1107 = vrot.slane %v1106, 4
        %v1108 = vadd.f32 %v1106, %v1107
        %v1109 = vrot.slane %v1108, 2
        %v1110 = vadd.f32 %v1108, %v1109
        %v1111 = vrot.slane %v1110, 1
        %v1112 = vadd.f32 %v1110, %v1111
        %v1113 = vadd.f32 %v501, %v517
        %v1114 = vrot.slane %v1113, 4
        %v1115 = vadd.f32 %v1113, %v1114
        %v1116 = vrot.slane %v1115, 2
        %v1117 = vadd.f32 %v1115, %v1116
        %v1118 = vrot.slane %v1117, 1
        %v1119 = vadd.f32 %v1117, %v1118
        %v1120 = vadd.f32 %v502, %v518
        %v1121 = vrot.slane %v1120, 4
        %v1122 = vadd.f32 %v1120, %v1121
        %v1123 = vrot.slane %v1122, 2
        %v1124 = vadd.f32 %v1122, %v1123
        %v1125 = vrot.slane %v1124, 1
        %v1126 = vadd.f32 %v1124, %v1125
        %v1127 = vadd.f32 %v503, %v519
        %v1128 = vrot.slane %v1127, 4
        %v1129 = vadd.f32 %v1127, %v1128
        %v1130 = vrot.slane %v1129, 2
        %v1131 = vadd.f32 %v1129, %v1130
        %v1132 = vrot.slane %v1131, 1
        %v1133 = vadd.f32 %v1131, %v1132
        %v1134 = vadd.f32 %v504, %v520
        %v1135 = vrot.slane %v1134, 4
        %v1136 = vadd.f32 %v1134, %v1135
        %v1137 = vrot.slane %v1136, 2
        %v1138 = vadd.f32 %v1136, %v1137
        %v1139 = vrot.slane %v1138, 1
        %v1140 = vadd.f32 %v1138, %v1139
        %v1141 = vadd.f32 %v505, %v521
        %v1142 = vrot.slane %v1141, 4
        %v1143 = vadd.f32 %v1141, %v1142
        %v1144 = vrot.slane %v1143, 2
        %v1145 = vadd.f32 %v1143, %v1144
        %v1146 = vrot.slane %v1145, 1
        %v1147 = vadd.f32 %v1145, %v1146
        %v1148 = vadd.f32 %v506, %v522
        %v1149 = vrot.slane %v1148, 4
        %v1150 = vadd.f32 %v1148, %v1149
        %v1151 = vrot.slane %v1150, 2
        %v1152 = vadd.f32 %v1150, %v1151
        %v1153 = vrot.slane %v1152, 1
        %v1154 = vadd.f32 %v1152, %v1153
        %v1155 = vadd.f32 %v507, %v523
        %v1156 = vrot.slane %v1155, 4
        %v1157 = vadd.f32 %v1155, %v1156
        %v1158 = vrot.slane %v1157, 2
        %v1159 = vadd.f32 %v1157, %v1158
        %v1160 = vrot.slane %v1159, 1
        %v1161 = vadd.f32 %v1159, %v1160
        %v1162 = vadd.f32 %v508, %v524
        %v1163 = vrot.slane %v1162, 4
        %v1164 = vadd.f32 %v1162, %v1163
        %v1165 = vrot.slane %v1164, 2
        %v1166 = vadd.f32 %v1164, %v1165
        %v1167 = vrot.slane %v1166, 1
        %v1168 = vadd.f32 %v1166, %v1167
        %v1169 = vadd.f32 %v509, %v525
        %v1170 = vrot.slane %v1169, 4
        %v1171 = vadd.f32 %v1169, %v1170
        %v1172 = vrot.slane %v1171, 2
        %v1173 = vadd.f32 %v1171, %v1172
        %v1174 = vrot.slane %v1173, 1
        %v1175 = vadd.f32 %v1173, %v1174
        %v1176 = vadd.f32 %v510, %v526
        %v1177 = vrot.slane %v1176, 4
        %v1178 = vadd.f32 %v1176, %v1177
        %v1179 = vrot.slane %v1178, 2
        %v1180 = vadd.f32 %v1178, %v1179
        %v1181 = vrot.slane %v1180, 1
        %v1182 = vadd.f32 %v1180, %v1181
        %v1183 = vadd.f32 %v527, %v543
        %v1184 = vrot.slane %v1183, 4
        %v1185 = vadd.f32 %v1183, %v1184
        %v1186 = vrot.slane %v1185, 2
        %v1187 = vadd.f32 %v1185, %v1186
        %v1188 = vrot.slane %v1187, 1
        %v1189 = vadd.f32 %v1187, %v1188
        %v1190 = vadd.f32 %v528, %v544
        %v1191 = vrot.slane %v1190, 4
        %v1192 = vadd.f32 %v1190, %v1191
        %v1193 = vrot.slane %v1192, 2
        %v1194 = vadd.f32 %v1192, %v1193
        %v1195 = vrot.slane %v1194, 1
        %v1196 = vadd.f32 %v1194, %v1195
        %v1197 = vadd.f32 %v529, %v545
        %v1198 = vrot.slane %v1197, 4
        %v1199 = vadd.f32 %v1197, %v1198
        %v1200 = vrot.slane %v1199, 2
        %v1201 = vadd.f32 %v1199, %v1200
        %v1202 = vrot.slane %v1201, 1
        %v1203 = vadd.f32 %v1201, %v1202
        %v1204 = vadd.f32 %v530, %v546
        %v1205 = vrot.slane %v1204, 4
        %v1206 = vadd.f32 %v1204, %v1205
        %v1207 = vrot.slane %v1206, 2
        %v1208 = vadd.f32 %v1206, %v1207
        %v1209 = vrot.slane %v1208, 1
        %v1210 = vadd.f32 %v1208, %v1209
        %v1211 = vadd.f32 %v531, %v547
        %v1212 = vrot.slane %v1211, 4
        %v1213 = vadd.f32 %v1211, %v1212
        %v1214 = vrot.slane %v1213, 2
        %v1215 = vadd.f32 %v1213, %v1214
        %v1216 = vrot.slane %v1215, 1
        %v1217 = vadd.f32 %v1215, %v1216
        %v1218 = vadd.f32 %v532, %v548
        %v1219 = vrot.slane %v1218, 4
        %v1220 = vadd.f32 %v1218, %v1219
        %v1221 = vrot.slane %v1220, 2
        %v1222 = vadd.f32 %v1220, %v1221
        %v1223 = vrot.slane %v1222, 1
        %v1224 = vadd.f32 %v1222, %v1223
        %v1225 = vadd.f32 %v533, %v549
        %v1226 = vrot.slane %v1225, 4
        %v1227 = vadd.f32 %v1225, %v1226
        %v1228 = vrot.slane %v1227, 2
        %v1229 = vadd.f32 %v1227, %v1228
        %v1230 = vrot.slane %v1229, 1
        %v1231 = vadd.f32 %v1229, %v1230
        %v1232 = vadd.f32 %v534, %v550
        %v1233 = vrot.slane %v1232, 4
        %v1234 = vadd.f32 %v1232, %v1233
        %v1235 = vrot.slane %v1234, 2
        %v1236 = vadd.f32 %v1234, %v1235
        %v1237 = vrot.slane %v1236, 1
        %v1238 = vadd.f32 %v1236, %v1237
        %v1239 = vadd.f32 %v535, %v551
        %v1240 = vrot.slane %v1239, 4
        %v1241 = vadd.f32 %v1239, %v1240
        %v1242 = vrot.slane %v1241, 2
        %v1243 = vadd.f32 %v1241, %v1242
        %v1244 = vrot.slane %v1243, 1
        %v1245 = vadd.f32 %v1243, %v1244
        %v1246 = vadd.f32 %v536, %v552
        %v1247 = vrot.slane %v1246, 4
        %v1248 = vadd.f32 %v1246, %v1247
        %v1249 = vrot.slane %v1248, 2
        %v1250 = vadd.f32 %v1248, %v1249
        %v1251 = vrot.slane %v1250, 1
        %v1252 = vadd.f32 %v1250, %v1251
        %v1253 = vadd.f32 %v537, %v553
        %v1254 = vrot.slane %v1253, 4
        %v1255 = vadd.f32 %v1253, %v1254
        %v1256 = vrot.slane %v1255, 2
        %v1257 = vadd.f32 %v1255, %v1256
        %v1258 = vrot.slane %v1257, 1
        %v1259 = vadd.f32 %v1257, %v1258
        %v1260 = vadd.f32 %v538, %v554
        %v1261 = vrot.slane %v1260, 4
        %v1262 = vadd.f32 %v1260, %v1261
        %v1263 = vrot.slane %v1262, 2
        %v1264 = vadd.f32 %v1262, %v1263
        %v1265 = vrot.slane %v1264, 1
        %v1266 = vadd.f32 %v1264, %v1265
        %v1267 = vadd.f32 %v539, %v555
        %v1268 = vrot.slane %v1267, 4
        %v1269 = vadd.f32 %v1267, %v1268
        %v1270 = vrot.slane %v1269, 2
        %v1271 = vadd.f32 %v1269, %v1270
        %v1272 = vrot.slane %v1271, 1
        %v1273 = vadd.f32 %v1271, %v1272
        %v1274 = vadd.f32 %v540, %v556
        %v1275 = vrot.slane %v1274, 4
        %v1276 = vadd.f32 %v1274, %v1275
        %v1277 = vrot.slane %v1276, 2
        %v1278 = vadd.f32 %v1276, %v1277
        %v1279 = vrot.slane %v1278, 1
        %v1280 = vadd.f32 %v1278, %v1279
        %v1281 = vadd.f32 %v541, %v557
        %v1282 = vrot.slane %v1281, 4
        %v1283 = vadd.f32 %v1281, %v1282
        %v1284 = vrot.slane %v1283, 2
        %v1285 = vadd.f32 %v1283, %v1284
        %v1286 = vrot.slane %v1285, 1
        %v1287 = vadd.f32 %v1285, %v1286
        %v1288 = vadd.f32 %v542, %v558
        %v1289 = vrot.slane %v1288, 4
        %v1290 = vadd.f32 %v1288, %v1289
        %v1291 = vrot.slane %v1290, 2
        %v1292 = vadd.f32 %v1290, %v1291
        %v1293 = vrot.slane %v1292, 1
        %v1294 = vadd.f32 %v1292, %v1293
        %v1295 = vadd.f32 %v559, %v575
        %v1296 = vrot.slane %v1295, 4
        %v1297 = vadd.f32 %v1295, %v1296
        %v1298 = vrot.slane %v1297, 2
        %v1299 = vadd.f32 %v1297, %v1298
        %v1300 = vrot.slane %v1299, 1
        %v1301 = vadd.f32 %v1299, %v1300
        %v1302 = vadd.f32 %v560, %v576
        %v1303 = vrot.slane %v1302, 4
        %v1304 = vadd.f32 %v1302, %v1303
        %v1305 = vrot.slane %v1304, 2
        %v1306 = vadd.f32 %v1304, %v1305
        %v1307 = vrot.slane %v1306, 1
        %v1308 = vadd.f32 %v1306, %v1307
        %v1309 = vadd.f32 %v561, %v577
        %v1310 = vrot.slane %v1309, 4
        %v1311 = vadd.f32 %v1309, %v1310
        %v1312 = vrot.slane %v1311, 2
        %v1313 = vadd.f32 %v1311, %v1312
        %v1314 = vrot.slane %v1313, 1
        %v1315 = vadd.f32 %v1313, %v1314
        %v1316 = vadd.f32 %v562, %v578
        %v1317 = vrot.slane %v1316, 4
        %v1318 = vadd.f32 %v1316, %v1317
        %v1319 = vrot.slane %v1318, 2
        %v1320 = vadd.f32 %v1318, %v1319
        %v1321 = vrot.slane %v1320, 1
        %v1322 = vadd.f32 %v1320, %v1321
        %v1323 = vadd.f32 %v563, %v579
        %v1324 = vrot.slane %v1323, 4
        %v1325 = vadd.f32 %v1323, %v1324
        %v1326 = vrot.slane %v1325, 2
        %v1327 = vadd.f32 %v1325, %v1326
        %v1328 = vrot.slane %v1327, 1
        %v1329 = vadd.f32 %v1327, %v1328
        %v1330 = vadd.f32 %v564, %v580
        %v1331 = vrot.slane %v1330, 4
        %v1332 = vadd.f32 %v1330, %v1331
        %v1333 = vrot.slane %v1332, 2
        %v1334 = vadd.f32 %v1332, %v1333
        %v1335 = vrot.slane %v1334, 1
        %v1336 = vadd.f32 %v1334, %v1335
        %v1337 = vadd.f32 %v565, %v581
        %v1338 = vrot.slane %v1337, 4
        %v1339 = vadd.f32 %v1337, %v1338
        %v1340 = vrot.slane %v1339, 2
        %v1341 = vadd.f32 %v1339, %v1340
        %v1342 = vrot.slane %v1341, 1
        %v1343 = vadd.f32 %v1341, %v1342
        %v1344 = vadd.f32 %v566, %v582
        %v1345 = vrot.slane %v1344, 4
        %v1346 = vadd.f32 %v1344, %v1345
        %v1347 = vrot.slane %v1346, 2
        %v1348 = vadd.f32 %v1346, %v1347
        %v1349 = vrot.slane %v1348, 1
        %v1350 = vadd.f32 %v1348, %v1349
        %v1351 = vadd.f32 %v567, %v583
        %v1352 = vrot.slane %v1351, 4
        %v1353 = vadd.f32 %v1351, %v1352
        %v1354 = vrot.slane %v1353, 2
        %v1355 = vadd.f32 %v1353, %v1354
        %v1356 = vrot.slane %v1355, 1
        %v1357 = vadd.f32 %v1355, %v1356
        %v1358 = vadd.f32 %v568, %v584
        %v1359 = vrot.slane %v1358, 4
        %v1360 = vadd.f32 %v1358, %v1359
        %v1361 = vrot.slane %v1360, 2
        %v1362 = vadd.f32 %v1360, %v1361
        %v1363 = vrot.slane %v1362, 1
        %v1364 = vadd.f32 %v1362, %v1363
        %v1365 = vadd.f32 %v569, %v585
        %v1366 = vrot.slane %v1365, 4
        %v1367 = vadd.f32 %v1365, %v1366
        %v1368 = vrot.slane %v1367, 2
        %v1369 = vadd.f32 %v1367, %v1368
        %v1370 = vrot.slane %v1369, 1
        %v1371 = vadd.f32 %v1369, %v1370
        %v1372 = vadd.f32 %v570, %v586
        %v1373 = vrot.slane %v1372, 4
        %v1374 = vadd.f32 %v1372, %v1373
        %v1375 = vrot.slane %v1374, 2
        %v1376 = vadd.f32 %v1374, %v1375
        %v1377 = vrot.slane %v1376, 1
        %v1378 = vadd.f32 %v1376, %v1377
        %v1379 = vadd.f32 %v571, %v587
        %v1380 = vrot.slane %v1379, 4
        %v1381 = vadd.f32 %v1379, %v1380
        %v1382 = vrot.slane %v1381, 2
        %v1383 = vadd.f32 %v1381, %v1382
        %v1384 = vrot.slane %v1383, 1
        %v1385 = vadd.f32 %v1383, %v1384
        %v1386 = vadd.f32 %v572, %v588
        %v1387 = vrot.slane %v1386, 4
        %v1388 = vadd.f32 %v1386, %v1387
        %v1389 = vrot.slane %v1388, 2
        %v1390 = vadd.f32 %v1388, %v1389
        %v1391 = vrot.slane %v1390, 1
        %v1392 = vadd.f32 %v1390, %v1391
        %v1393 = vadd.f32 %v573, %v589
        %v1394 = vrot.slane %v1393, 4
        %v1395 = vadd.f32 %v1393, %v1394
        %v1396 = vrot.slane %v1395, 2
        %v1397 = vadd.f32 %v1395, %v1396
        %v1398 = vrot.slane %v1397, 1
        %v1399 = vadd.f32 %v1397, %v1398
        %v1400 = vadd.f32 %v574, %v590
        %v1401 = vrot.slane %v1400, 4
        %v1402 = vadd.f32 %v1400, %v1401
        %v1403 = vrot.slane %v1402, 2
        %v1404 = vadd.f32 %v1402, %v1403
        %v1405 = vrot.slane %v1404, 1
        %v1406 = vadd.f32 %v1404, %v1405
        %v1407 = vadd.f32 %v591, %v607
        %v1408 = vrot.slane %v1407, 4
        %v1409 = vadd.f32 %v1407, %v1408
        %v1410 = vrot.slane %v1409, 2
        %v1411 = vadd.f32 %v1409, %v1410
        %v1412 = vrot.slane %v1411, 1
        %v1413 = vadd.f32 %v1411, %v1412
        %v1414 = vadd.f32 %v592, %v608
        %v1415 = vrot.slane %v1414, 4
        %v1416 = vadd.f32 %v1414, %v1415
        %v1417 = vrot.slane %v1416, 2
        %v1418 = vadd.f32 %v1416, %v1417
        %v1419 = vrot.slane %v1418, 1
        %v1420 = vadd.f32 %v1418, %v1419
        %v1421 = vadd.f32 %v593, %v609
        %v1422 = vrot.slane %v1421, 4
        %v1423 = vadd.f32 %v1421, %v1422
        %v1424 = vrot.slane %v1423, 2
        %v1425 = vadd.f32 %v1423, %v1424
        %v1426 = vrot.slane %v1425, 1
        %v1427 = vadd.f32 %v1425, %v1426
        %v1428 = vadd.f32 %v594, %v610
        %v1429 = vrot.slane %v1428, 4
        %v1430 = vadd.f32 %v1428, %v1429
        %v1431 = vrot.slane %v1430, 2
        %v1432 = vadd.f32 %v1430, %v1431
        %v1433 = vrot.slane %v1432, 1
        %v1434 = vadd.f32 %v1432, %v1433
        %v1435 = vadd.f32 %v595, %v611
        %v1436 = vrot.slane %v1435, 4
        %v1437 = vadd.f32 %v1435, %v1436
        %v1438 = vrot.slane %v1437, 2
        %v1439 = vadd.f32 %v1437, %v1438
        %v1440 = vrot.slane %v1439, 1
        %v1441 = vadd.f32 %v1439, %v1440
        %v1442 = vadd.f32 %v596, %v612
        %v1443 = vrot.slane %v1442, 4
        %v1444 = vadd.f32 %v1442, %v1443
        %v1445 = vrot.slane %v1444, 2
        %v1446 = vadd.f32 %v1444, %v1445
        %v1447 = vrot.slane %v1446, 1
        %v1448 = vadd.f32 %v1446, %v1447
        %v1449 = vadd.f32 %v597, %v613
        %v1450 = vrot.slane %v1449, 4
        %v1451 = vadd.f32 %v1449, %v1450
        %v1452 = vrot.slane %v1451, 2
        %v1453 = vadd.f32 %v1451, %v1452
        %v1454 = vrot.slane %v1453, 1
        %v1455 = vadd.f32 %v1453, %v1454
        %v1456 = vadd.f32 %v598, %v614
        %v1457 = vrot.slane %v1456, 4
        %v1458 = vadd.f32 %v1456, %v1457
        %v1459 = vrot.slane %v1458, 2
        %v1460 = vadd.f32 %v1458, %v1459
        %v1461 = vrot.slane %v1460, 1
        %v1462 = vadd.f32 %v1460, %v1461
        %v1463 = vadd.f32 %v599, %v615
        %v1464 = vrot.slane %v1463, 4
        %v1465 = vadd.f32 %v1463, %v1464
        %v1466 = vrot.slane %v1465, 2
        %v1467 = vadd.f32 %v1465, %v1466
        %v1468 = vrot.slane %v1467, 1
        %v1469 = vadd.f32 %v1467, %v1468
        %v1470 = vadd.f32 %v600, %v616
        %v1471 = vrot.slane %v1470, 4
        %v1472 = vadd.f32 %v1470, %v1471
        %v1473 = vrot.slane %v1472, 2
        %v1474 = vadd.f32 %v1472, %v1473
        %v1475 = vrot.slane %v1474, 1
        %v1476 = vadd.f32 %v1474, %v1475
        %v1477 = vadd.f32 %v601, %v617
        %v1478 = vrot.slane %v1477, 4
        %v1479 = vadd.f32 %v1477, %v1478
        %v1480 = vrot.slane %v1479, 2
        %v1481 = vadd.f32 %v1479, %v1480
        %v1482 = vrot.slane %v1481, 1
        %v1483 = vadd.f32 %v1481, %v1482
        %v1484 = vadd.f32 %v602, %v618
        %v1485 = vrot.slane %v1484, 4
        %v1486 = vadd.f32 %v1484, %v1485
        %v1487 = vrot.slane %v1486, 2
        %v1488 = vadd.f32 %v1486, %v1487
        %v1489 = vrot.slane %v1488, 1
        %v1490 = vadd.f32 %v1488, %v1489
        %v1491 = vadd.f32 %v603, %v619
        %v1492 = vrot.slane %v1491, 4
        %v1493 = vadd.f32 %v1491, %v1492
        %v1494 = vrot.slane %v1493, 2
        %v1495 = vadd.f32 %v1493, %v1494
        %v1496 = vrot.slane %v1495, 1
        %v1497 = vadd.f32 %v1495, %v1496
        %v1498 = vadd.f32 %v604, %v620
        %v1499 = vrot.slane %v1498, 4
        %v1500 = vadd.f32 %v1498, %v1499
        %v1501 = vrot.slane %v1500, 2
        %v1502 = vadd.f32 %v1500, %v1501
        %v1503 = vrot.slane %v1502, 1
        %v1504 = vadd.f32 %v1502, %v1503
        %v1505 = vadd.f32 %v605, %v621
        %v1506 = vrot.slane %v1505, 4
        %v1507 = vadd.f32 %v1505, %v1506
        %v1508 = vrot.slane %v1507, 2
        %v1509 = vadd.f32 %v1507, %v1508
        %v1510 = vrot.slane %v1509, 1
        %v1511 = vadd.f32 %v1509, %v1510
        %v1512 = vadd.f32 %v606, %v622
        %v1513 = vrot.slane %v1512, 4
        %v1514 = vadd.f32 %v1512, %v1513
        %v1515 = vrot.slane %v1514, 2
        %v1516 = vadd.f32 %v1514, %v1515
        %v1517 = vrot.slane %v1516, 1
        %v1518 = vadd.f32 %v1516, %v1517
        %v1519 = vmax.f32 %v629, 0.0
        %v1520 = vmax.f32 %v636, 0.0
        %v1521 = vmax.f32 %v643, 0.0
        %v1522 = vmax.f32 %v650, 0.0
        %v1523 = vmax.f32 %v657, 0.0
        %v1524 = vmax.f32 %v664, 0.0
        %v1525 = vmax.f32 %v671, 0.0
        %v1526 = vmax.f32 %v678, 0.0
        %v1527 = vmax.f32 %v685, 0.0
        %v1528 = vmax.f32 %v692, 0.0
        %v1529 = vmax.f32 %v699, 0.0
        %v1530 = vmax.f32 %v706, 0.0
        %v1531 = vmax.f32 %v713, 0.0
        %v1532 = vmax.f32 %v720, 0.0
        %v1533 = vmax.f32 %v727, 0.0
        %v1534 = vmax.f32 %v734, 0.0
        %v1535 = vmax.f32 %v741, 0.0
        %v1536 = vmax.f32 %v748, 0.0
        %v1537 = vmax.f32 %v755, 0.0
        %v1538 = vmax.f32 %v762, 0.0
        %v1539 = vmax.f32 %v769, 0.0
        %v1540 = vmax.f32 %v776, 0.0
        %v1541 = vmax.f32 %v783, 0.0
        %v1542 = vmax.f32 %v790, 0.0
        %v1543 = vmax.f32 %v797, 0.0
        %v1544 = vmax.f32 %v804, 0.0
        %v1545 = vmax.f32 %v811, 0.0
        %v1546 = vmax.f32 %v818, 0.0
        %v1547 = vmax.f32 %v825, 0.0
        %v1548 = vmax.f32 %v832, 0.0
        %v1549 = vmax.f32 %v839, 0.0
        %v1550 = vmax.f32 %v846, 0.0
        %v1551 = vmax.f32 %v853, 0.0
        %v1552 = vmax.f32 %v860, 0.0
        %v1553 = vmax.f32 %v867, 0.0
        %v1554 = vmax.f32 %v874, 0.0
        %v1555 = vmax.f32 %v881, 0.0
        %v1556 = vmax.f32 %v888, 0.0
        %v1557 = vmax.f32 %v895, 0.0
        %v1558 = vmax.f32 %v902, 0.0
        %v1559 = vmax.f32 %v909, 0.0
        %v1560 = vmax.f32 %v916, 0.0
        %v1561 = vmax.f32 %v923, 0.0
        %v1562 = vmax.f32 %v930, 0.0
        %v1563 = vmax.f32 %v937, 0.0
        %v1564 = vmax.f32 %v944, 0.0
        %v1565 = vmax.f32 %v951, 0.0
        %v1566 = vmax.f32 %v958, 0.0
        %v1567 = vmax.f32 %v965, 0.0
        %v1568 = vmax.f32 %v972, 0.0
        %v1569 = vmax.f32 %v979, 0.0
        %v1570 = vmax.f32 %v986, 0.0
        %v1571 = vmax.f32 %v993, 0.0
        %v1572 = vmax.f32 %v1000, 0.0
        %v1573 = vmax.f32 %v1007, 0.0
        %v1574 = vmax.f32 %v1014, 0.0
        %v1575 = vmax.f32 %v1021, 0.0
        %v1576 = vmax.f32 %v1028, 0.0
        %v1577 = vmax.f32 %v1035, 0.0
        %v1578 = vmax.f32 %v1042, 0.0
        %v1579 = vmax.f32 %v1049, 0.0
        %v1580 = vmax.f32 %v1056, 0.0
        %v1581 = vmax.f32 %v1063, 0.0
        %v1582 = vmax.f32 %v1070, 0.0
        %v1583 = vmax.f32 %v1077, 0.0
        %v1584 = vmax.f32 %v1084, 0.0
        %v1585 = vmax.f32 %v1091, 0.0
        %v1586 = vmax.f32 %v1098, 0.0
        %v1587 = vmax.f32 %v1105, 0.0
        %v1588 = vmax.f32 %v1112, 0.0
        %v1589 = vmax.f32 %v1119, 0.0
        %v1590 = vmax.f32 %v1126, 0.0
        %v1591 = vmax.f32 %v1133, 0.0
        %v1592 = vmax.f32 %v1140, 0.0
        %v1593 = vmax.f32 %v1147, 0.0
        %v1594 = vmax.f32 %v1154, 0.0
        %v1595 = vmax.f32 %v1161, 0.0
        %v1596 = vmax.f32 %v1168, 0.0
        %v1597 = vmax.f32 %v1175, 0.0
        %v1598 = vmax.f32 %v1182, 0.0
        %v1599 = vmax.f32 %v1189, 0.0
        %v1600 = vmax.f32 %v1196, 0.0
        %v1601 = vmax.f32 %v1203, 0.0
        %v1602 = vmax.f32 %v1210, 0.0
        %v1603 = vmax.f32 %v1217, 0.0
        %v1604 = vmax.f32 %v1224, 0.0
        %v1605 = vmax.f32 %v1231, 0.0
        %v1606 = vmax.f32 %v1238, 0.0
        %v1607 = vmax.f32 %v1245, 0.0
        %v1608 = vmax.f32 %v1252, 0.0
        %v1609 = vmax.f32 %v1259, 0.0
        %v1610 = vmax.f32 %v1266, 0.0
        %v1611 = vmax.f32 %v1273, 0.0
        %v1612 = vmax.f32 %v1280, 0.0
        %v1613 = vmax.f32 %v1287, 0.0
        %v1614 = vmax.f32 %v1294, 0.0
        %v1615 = vmax.f32 %v1301, 0.0
        %v1616 = vmax.f32 %v1308, 0.0
        %v1617 = vmax.f32 %v1315, 0.0
        %v1618 = vmax.f32 %v1322, 0.0
        %v1619 = vmax.f32 %v1329, 0.0
        %v1620 = vmax.f32 %v1336, 0.0
        %v1621 = vmax.f32 %v1343, 0.0
        %v1622 = vmax.f32 %v1350, 0.0
        %v1623 = vmax.f32 %v1357, 0.0
        %v1624 = vmax.f32 %v1364, 0.0
        %v1625 = vmax.f32 %v1371, 0.0
        %v1626 = vmax.f32 %v1378, 0.0
        %v1627 = vmax.f32 %v1385, 0.0
        %v1628 = vmax.f32 %v1392, 0.0
        %v1629 = vmax.f32 %v1399, 0.0
        %v1630 = vmax.f32 %v1406, 0.0
        %v1631 = vmax.f32 %v1413, 0.0
        %v1632 = vmax.f32 %v1420, 0.0
        %v1633 = vmax.f32 %v1427, 0.0
        %v1634 = vmax.f32 %v1434, 0.0
        %v1635 = vmax.f32 %v1441, 0.0
        %v1636 = vmax.f32 %v1448, 0.0
        %v1637 = vmax.f32 %v1455, 0.0
        %v1638 = vmax.f32 %v1462, 0.0
        %v1639 = vmax.f32 %v1469, 0.0
        %v1640 = vmax.f32 %v1476, 0.0
        %v1641 = vmax.f32 %v1483, 0.0
        %v1642 = vmax.f32 %v1490, 0.0
        %v1643 = vmax.f32 %v1497, 0.0
        %v1644 = vmax.f32 %v1504, 0.0
        %v1645 = vmax.f32 %v1511, 0.0
        %v1646 = vmax.f32 %v1518, 0.0
        %v1647 = vld [vmem:[%s237] sm:$0xff]
        %v1648 = vld [vmem:[%s237 + $0x8] sm:$0xff]
        %v1649 = vld [vmem:[%s237 + $0x10] sm:$0xff]
        %v1650 = vld [vmem:[%s237 + $0x18] sm:$0xff]
        %v1651 = vld [vmem:[%s237 + $0x20] sm:$0xff]
        %v1652 = vld [vmem:[%s237 + $0x28] sm:$0xff]
        %v1653 = vld [vmem:[%s237 + $0x30] sm:$0xff]
        %v1654 = vld [vmem:[%s237 + $0x38] sm:$0xff]
        %v1655 = vld [vmem:[%s237 + $0x40] sm:$0xff]
        %v1656 = vld [vmem:[%s237 + $0x48] sm:$0xff]
        %v1657 = vld [vmem:[%s237 + $0x50] sm:$0xff]
        %v1658 = vld [vmem:[%s237 + $0x58] sm:$0xff]
        %v1659 = vld [vmem:[%s237 + $0x60] sm:$0xff]
        %v1660 = vld [vmem:[%s237 + $0x68] sm:$0xff]
        %v1661 = vld [vmem:[%s237 + $0x70] sm:$0xff]
        %v1662 = vld [vmem:[%s237 + $0x78] sm:$0xff]
        %v1679 = vrot.slane %v1647, 1
        %v1680 = vrot.slane %v1648, 1
        %v1681 = vrot.slane %v1649, 1
        %v1682 = vrot.slane %v1650, 1
        %v1683 = vrot.slane %v1651, 1
        %v1684 = vrot.slane %v1652, 1
        %v1685 = vrot.slane %v1653, 1
        %v1686 = vrot.slane %v1654, 1
        %v1687 = vrot.slane %v1655, 1
        %v1688 = vrot.slane %v1656, 1
        %v1689 = vrot.slane %v1657, 1
        %v1690 = vrot.slane %v1658, 1
        %v1691 = vrot.slane %v1659, 1
        %v1692 = vrot.slane %v1660, 1
        %v1693 = vrot.slane %v1661, 1
        %v1694 = vrot.slane %v1662, 1
        %v1695 = vrot.slane %v1647, 2
        %v1696 = vrot.slane %v1648, 2
        %v1697 = vrot.slane %v1649, 2
        %v1698 = vrot.slane %v1650, 2
        %v1699 = vrot.slane %v1651, 2
        %v1700 = vrot.slane %v1652, 2
        %v1701 = vrot.slane %v1653, 2
        %v1702 = vrot.slane %v1654, 2
        %v1703 = vrot.slane %v1655, 2
        %v1704 = vrot.slane %v1656, 2
        %v1705 = vrot.slane %v1657, 2
        %v1706 = vrot.slane %v1658, 2
        %v1707 = vrot.slane %v1659, 2
        %v1708 = vrot.slane %v1660, 2
        %v1709 = vrot.slane %v1661, 2
        %v1710 = vrot.slane %v1662, 2
        %v1711 = vrot.slane %v1647, 3
        %v1712 = vrot.slane %v1648, 3
        %v1713 = vrot.slane %v1649, 3
        %v1714 = vrot.slane %v1650, 3
        %v1715 = vrot.slane %v1651, 3
        %v1716 = vrot.slane %v1652, 3
        %v1717 = vrot.slane %v1653, 3
        %v1718 = vrot.slane %v1654, 3
        %v1719 = vrot.slane %v1655, 3
        %v1720 = vrot.slane %v1656, 3
        %v1721 = vrot.slane %v1657, 3
        %v1722 = vrot.slane %v1658, 3
        %v1723 = vrot.slane %v1659, 3
        %v1724 = vrot.slane %v1660, 3
        %v1725 = vrot.slane %v1661, 3
        %v1726 = vrot.slane %v1662, 3
        %v1727 = vrot.slane %v1647, 4
        %v1728 = vrot.slane %v1648, 4
        %v1729 = vrot.slane %v1649, 4
        %v1730 = vrot.slane %v1650, 4
        %v1731 = vrot.slane %v1651, 4
        %v1732 = vrot.slane %v1652, 4
        %v1733 = vrot.slane %v1653, 4
        %v1734 = vrot.slane %v1654, 4
        %v1735 = vrot.slane %v1655, 4
        %v1736 = vrot.slane %v1656, 4
        %v1737 = vrot.slane %v1657, 4
        %v1738 = vrot.slane %v1658, 4
        %v1739 = vrot.slane %v1659, 4
        %v1740 = vrot.slane %v1660, 4
        %v1741 = vrot.slane %v1661, 4
        %v1742 = vrot.slane %v1662, 4
        %v1743 = vrot.slane %v1647, 5
        %v1744 = vrot.slane %v1648, 5
        %v1745 = vrot.slane %v1649, 5
        %v1746 = vrot.slane %v1650, 5
        %v1747 = vrot.slane %v1651, 5
        %v1748 = vrot.slane %v1652, 5
        %v1749 = vrot.slane %v1653, 5
        %v1750 = vrot.slane %v1654, 5
        %v1751 = vrot.slane %v1655, 5
        %v1752 = vrot.slane %v1656, 5
        %v1753 = vrot.slane %v1657, 5
        %v1754 = vrot.slane %v1658, 5
        %v1755 = vrot.slane %v1659, 5
        %v1756 = vrot.slane %v1660, 5
        %v1757 = vrot.slane %v1661, 5
        %v1758 = vrot.slane %v1662, 5
        %v1759 = vrot.slane %v1647, 6
        %v1760 = vrot.slane %v1648, 6
        %v1761 = vrot.slane %v1649, 6
        %v1762 = vrot.slane %v1650, 6
        %v1763 = vrot.slane %v1651, 6
        %v1764 = vrot.slane %v1652, 6
        %v1765 = vrot.slane %v1653, 6
        %v1766 = vrot.slane %v1654, 6
        %v1767 = vrot.slane %v1655, 6
        %v1768 = vrot.slane %v1656, 6
        %v1769 = vrot.slane %v1657, 6
        %v1770 = vrot.slane %v1658, 6
        %v1771 = vrot.slane %v1659, 6
        %v1772 = vrot.slane %v1660, 6
        %v1773 = vrot.slane %v1661, 6
        %v1774 = vrot.slane %v1662, 6
        %v1775 = vrot.slane %v1647, 7
        %v1776 = vrot.slane %v1648, 7
        %v1777 = vrot.slane %v1649, 7
        %v1778 = vrot.slane %v1650, 7
        %v1779 = vrot.slane %v1651, 7
        %v1780 = vrot.slane %v1652, 7
        %v1781 = vrot.slane %v1653, 7
        %v1782 = vrot.slane %v1654, 7
        %v1783 = vrot.slane %v1655, 7
        %v1784 = vrot.slane %v1656, 7
        %v1785 = vrot.slane %v1657, 7
        %v1786 = vrot.slane %v1658, 7
        %v1787 = vrot.slane %v1659, 7
        %v1788 = vrot.slane %v1660, 7
        %v1789 = vrot.slane %v1661, 7
        %v1790 = vrot.slane %v1662, 7
        %v1919 = vmul.f32 %v1519, %v1647
        %v1920 = vmul.f32 %v1520, %v1648
        %v1921 = vmul.f32 %v1521, %v1649
        %v1922 = vmul.f32 %v1522, %v1650
        %v1923 = vmul.f32 %v1523, %v1651
        %v1924 = vmul.f32 %v1524, %v1652
        %v1925 = vmul.f32 %v1525, %v1653
        %v1926 = vmul.f32 %v1526, %v1654
        %v1927 = vmul.f32 %v1527, %v1655
        %v1928 = vmul.f32 %v1528, %v1656
        %v1929 = vmul.f32 %v1529, %v1657
        %v1930 = vmul.f32 %v1530, %v1658
        %v1931 = vmul.f32 %v1531, %v1659
        %v1932 = vmul.f32 %v1532, %v1660
        %v1933 = vmul.f32 %v1533, %v1661
        %v1934 = vmul.f32 %v1534, %v1662
        %v1935 = vmul.f32 %v1535, %v1679
        %v1936 = vmul.f32 %v1536, %v1680
        %v1937 = vmul.f32 %v1537, %v1681
        %v1938 = vmul.f32 %v1538, %v1682
        %v1939 = vmul.f32 %v1539, %v1683
        %v1940 = vmul.f32 %v1540, %v1684
        %v1941 = vmul.f32 %v1541, %v1685
        %v1942 = vmul.f32 %v1542, %v1686
        %v1943 = vmul.f32 %v1543, %v1687
        %v1944 = vmul.f32 %v1544, %v1688
        %v1945 = vmul.f32 %v1545, %v1689
        %v1946 = vmul.f32 %v1546, %v1690
        %v1947 = vmul.f32 %v1547, %v1691
        %v1948 = vmul.f32 %v1548, %v1692
        %v1949 = vmul.f32 %v1549, %v1693
        %v1950 = vmul.f32 %v1550, %v1694
        %v1951 = vmul.f32 %v1551, %v1695
        %v1952 = vmul.f32 %v1552, %v1696
        %v1953 = vmul.f32 %v1553, %v1697
        %v1954 = vmul.f32 %v1554, %v1698
        %v1955 = vmul.f32 %v1555, %v1699
        %v1956 = vmul.f32 %v1556, %v1700
        %v1957 = vmul.f32 %v1557, %v1701
        %v1958 = vmul.f32 %v1558, %v1702
        %v1959 = vmul.f32 %v1559, %v1703
        %v1960 = vmul.f32 %v1560, %v1704
        %v1961 = vmul.f32 %v1561, %v1705
        %v1962 = vmul.f32 %v1562, %v1706
        %v1963 = vmul.f32 %v1563, %v1707
        %v1964 = vmul.f32 %v1564, %v1708
        %v1965 = vmul.f32 %v1565, %v1709
        %v1966 = vmul.f32 %v1566, %v1710
        %v1967 = vmul.f32 %v1567, %v1711
        %v1968 = vmul.f32 %v1568, %v1712
        %v1969 = vmul.f32 %v1569, %v1713
        %v1970 = vmul.f32 %v1570, %v1714
        %v1971 = vmul.f32 %v1571, %v1715
        %v1972 = vmul.f32 %v1572, %v1716
        %v1973 = vmul.f32 %v1573, %v1717
        %v1974 = vmul.f32 %v1574, %v1718
        %v1975 = vmul.f32 %v1575, %v1719
        %v1976 = vmul.f32 %v1576, %v1720
        %v1977 = vmul.f32 %v1577, %v1721
        %v1978 = vmul.f32 %v1578, %v1722
        %v1979 = vmul.f32 %v1579, %v1723
        %v1980 = vmul.f32 %v1580, %v1724
        %v1981 = vmul.f32 %v1581, %v1725
        %v1982 = vmul.f32 %v1582, %v1726
        %v1983 = vmul.f32 %v1583, %v1727
        %v1984 = vmul.f32 %v1584, %v1728
        %v1985 = vmul.f32 %v1585, %v1729
        %v1986 = vmul.f32 %v1586, %v1730
        %v1987 = vmul.f32 %v1587, %v1731
        %v1988 = vmul.f32 %v1588, %v1732
        %v1989 = vmul.f32 %v1589, %v1733
        %v1990 = vmul.f32 %v1590, %v1734
        %v1991 = vmul.f32 %v1591, %v1735
        %v1992 = vmul.f32 %v1592, %v1736
        %v1993 = vmul.f32 %v1593, %v1737
        %v1994 = vmul.f32 %v1594, %v1738
        %v1995 = vmul.f32 %v1595, %v1739
        %v1996 = vmul.f32 %v1596, %v1740
        %v1997 = vmul.f32 %v1597, %v1741
        %v1998 = vmul.f32 %v1598, %v1742
        %v1999 = vmul.f32 %v1599, %v1743
        %v2000 = vmul.f32 %v1600, %v1744
        %v2001 = vmul.f32 %v1601, %v1745
        %v2002 = vmul.f32 %v1602, %v1746
        %v2003 = vmul.f32 %v1603, %v1747
        %v2004 = vmul.f32 %v1604, %v1748
        %v2005 = vmul.f32 %v1605, %v1749
        %v2006 = vmul.f32 %v1606, %v1750
        %v2007 = vmul.f32 %v1607, %v1751
        %v2008 = vmul.f32 %v1608, %v1752
        %v2009 = vmul.f32 %v1609, %v1753
        %v2010 = vmul.f32 %v1610, %v1754
        %v2011 = vmul.f32 %v1611, %v1755
        %v2012 = vmul.f32 %v1612, %v1756
        %v2013 = vmul.f32 %v1613, %v1757
        %v2014 = vmul.f32 %v1614, %v1758
        %v2015 = vmul.f32 %v1615, %v1759
        %v2016 = vmul.f32 %v1616, %v1760
        %v2017 = vmul.f32 %v1617, %v1761
        %v2018 = vmul.f32 %v1618, %v1762
        %v2019 = vmul.f32 %v1619, %v1763
        %v2020 = vmul.f32 %v1620, %v1764
        %v2021 = vmul.f32 %v1621, %v1765
        %v2022 = vmul.f32 %v1622, %v1766
        %v2023 = vmul.f32 %v1623, %v1767
        %v2024 = vmul.f32 %v1624, %v1768
        %v2025 = vmul.f32 %v1625, %v1769
        %v2026 = vmul.f32 %v1626, %v1770
        %v2027 = vmul.f32 %v1627, %v1771
        %v2028 = vmul.f32 %v1628, %v1772
        %v2029 = vmul.f32 %v1629, %v1773
        %v2030 = vmul.f32 %v1630, %v1774
        %v2031 = vmul.f32 %v1631, %v1775
        %v2032 = vmul.f32 %v1632, %v1776
        %v2033 = vmul.f32 %v1633, %v1777
        %v2034 = vmul.f32 %v1634, %v1778
        %v2035 = vmul.f32 %v1635, %v1779
        %v2036 = vmul.f32 %v1636, %v1780
        %v2037 = vmul.f32 %v1637, %v1781
        %v2038 = vmul.f32 %v1638, %v1782
        %v2039 = vmul.f32 %v1639, %v1783
        %v2040 = vmul.f32 %v1640, %v1784
        %v2041 = vmul.f32 %v1641, %v1785
        %v2042 = vmul.f32 %v1642, %v1786
        %v2043 = vmul.f32 %v1643, %v1787
        %v2044 = vmul.f32 %v1644, %v1788
        %v2045 = vmul.f32 %v1645, %v1789
        %v2046 = vmul.f32 %v1646, %v1790
        %v2047 = vpack.c.bf16 %v1919, %v1919
        %v2048 = vpack.c.bf16 %v1920, %v1920
        %v2049 = vpack.c.bf16 %v1921, %v1921
        %v2050 = vpack.c.bf16 %v1922, %v1922
        %v2051 = vpack.c.bf16 %v1923, %v1923
        %v2052 = vpack.c.bf16 %v1924, %v1924
        %v2053 = vpack.c.bf16 %v1925, %v1925
        %v2054 = vpack.c.bf16 %v1926, %v1926
        %v2055 = vpack.c.bf16 %v1927, %v1927
        %v2056 = vpack.c.bf16 %v1928, %v1928
        %v2057 = vpack.c.bf16 %v1929, %v1929
        %v2058 = vpack.c.bf16 %v1930, %v1930
        %v2059 = vpack.c.bf16 %v1931, %v1931
        %v2060 = vpack.c.bf16 %v1932, %v1932
        %v2061 = vpack.c.bf16 %v1933, %v1933
        %v2062 = vpack.c.bf16 %v1934, %v1934
        %v2063 = vpack.c.bf16 %v1935, %v1935
        %v2064 = vpack.c.bf16 %v1936, %v1936
        %v2065 = vpack.c.bf16 %v1937, %v1937
        %v2066 = vpack.c.bf16 %v1938, %v1938
        %v2067 = vpack.c.bf16 %v1939, %v1939
        %v2068 = vpack.c.bf16 %v1940, %v1940
        %v2069 = vpack.c.bf16 %v1941, %v1941
        %v2070 = vpack.c.bf16 %v1942, %v1942
        %v2071 = vpack.c.bf16 %v1943, %v1943
        %v2072 = vpack.c.bf16 %v1944, %v1944
        %v2073 = vpack.c.bf16 %v1945, %v1945
        %v2074 = vpack.c.bf16 %v1946, %v1946
        %v2075 = vpack.c.bf16 %v1947, %v1947
        %v2076 = vpack.c.bf16 %v1948, %v1948
        %v2077 = vpack.c.bf16 %v1949, %v1949
        %v2078 = vpack.c.bf16 %v1950, %v1950
        %v2079 = vpack.c.bf16 %v1951, %v1951
        %v2080 = vpack.c.bf16 %v1952, %v1952
        %v2081 = vpack.c.bf16 %v1953, %v1953
        %v2082 = vpack.c.bf16 %v1954, %v1954
        %v2083 = vpack.c.bf16 %v1955, %v1955
        %v2084 = vpack.c.bf16 %v1956, %v1956
        %v2085 = vpack.c.bf16 %v1957, %v1957
        %v2086 = vpack.c.bf16 %v1958, %v1958
        %v2087 = vpack.c.bf16 %v1959, %v1959
        %v2088 = vpack.c.bf16 %v1960, %v1960
        %v2089 = vpack.c.bf16 %v1961, %v1961
        %v2090 = vpack.c.bf16 %v1962, %v1962
        %v2091 = vpack.c.bf16 %v1963, %v1963
        %v2092 = vpack.c.bf16 %v1964, %v1964
        %v2093 = vpack.c.bf16 %v1965, %v1965
        %v2094 = vpack.c.bf16 %v1966, %v1966
        %v2095 = vpack.c.bf16 %v1967, %v1967
        %v2096 = vpack.c.bf16 %v1968, %v1968
        %v2097 = vpack.c.bf16 %v1969, %v1969
        %v2098 = vpack.c.bf16 %v1970, %v1970
        %v2099 = vpack.c.bf16 %v1971, %v1971
        %v2100 = vpack.c.bf16 %v1972, %v1972
        %v2101 = vpack.c.bf16 %v1973, %v1973
        %v2102 = vpack.c.bf16 %v1974, %v1974
        %v2103 = vpack.c.bf16 %v1975, %v1975
        %v2104 = vpack.c.bf16 %v1976, %v1976
        %v2105 = vpack.c.bf16 %v1977, %v1977
        %v2106 = vpack.c.bf16 %v1978, %v1978
        %v2107 = vpack.c.bf16 %v1979, %v1979
        %v2108 = vpack.c.bf16 %v1980, %v1980
        %v2109 = vpack.c.bf16 %v1981, %v1981
        %v2110 = vpack.c.bf16 %v1982, %v1982
        %v2111 = vpack.c.bf16 %v1983, %v1983
        %v2112 = vpack.c.bf16 %v1984, %v1984
        %v2113 = vpack.c.bf16 %v1985, %v1985
        %v2114 = vpack.c.bf16 %v1986, %v1986
        %v2115 = vpack.c.bf16 %v1987, %v1987
        %v2116 = vpack.c.bf16 %v1988, %v1988
        %v2117 = vpack.c.bf16 %v1989, %v1989
        %v2118 = vpack.c.bf16 %v1990, %v1990
        %v2119 = vpack.c.bf16 %v1991, %v1991
        %v2120 = vpack.c.bf16 %v1992, %v1992
        %v2121 = vpack.c.bf16 %v1993, %v1993
        %v2122 = vpack.c.bf16 %v1994, %v1994
        %v2123 = vpack.c.bf16 %v1995, %v1995
        %v2124 = vpack.c.bf16 %v1996, %v1996
        %v2125 = vpack.c.bf16 %v1997, %v1997
        %v2126 = vpack.c.bf16 %v1998, %v1998
        %v2127 = vpack.c.bf16 %v1999, %v1999
        %v2128 = vpack.c.bf16 %v2000, %v2000
        %v2129 = vpack.c.bf16 %v2001, %v2001
        %v2130 = vpack.c.bf16 %v2002, %v2002
        %v2131 = vpack.c.bf16 %v2003, %v2003
        %v2132 = vpack.c.bf16 %v2004, %v2004
        %v2133 = vpack.c.bf16 %v2005, %v2005
        %v2134 = vpack.c.bf16 %v2006, %v2006
        %v2135 = vpack.c.bf16 %v2007, %v2007
        %v2136 = vpack.c.bf16 %v2008, %v2008
        %v2137 = vpack.c.bf16 %v2009, %v2009
        %v2138 = vpack.c.bf16 %v2010, %v2010
        %v2139 = vpack.c.bf16 %v2011, %v2011
        %v2140 = vpack.c.bf16 %v2012, %v2012
        %v2141 = vpack.c.bf16 %v2013, %v2013
        %v2142 = vpack.c.bf16 %v2014, %v2014
        %v2143 = vpack.c.bf16 %v2015, %v2015
        %v2144 = vpack.c.bf16 %v2016, %v2016
        %v2145 = vpack.c.bf16 %v2017, %v2017
        %v2146 = vpack.c.bf16 %v2018, %v2018
        %v2147 = vpack.c.bf16 %v2019, %v2019
        %v2148 = vpack.c.bf16 %v2020, %v2020
        %v2149 = vpack.c.bf16 %v2021, %v2021
        %v2150 = vpack.c.bf16 %v2022, %v2022
        %v2151 = vpack.c.bf16 %v2023, %v2023
        %v2152 = vpack.c.bf16 %v2024, %v2024
        %v2153 = vpack.c.bf16 %v2025, %v2025
        %v2154 = vpack.c.bf16 %v2026, %v2026
        %v2155 = vpack.c.bf16 %v2027, %v2027
        %v2156 = vpack.c.bf16 %v2028, %v2028
        %v2157 = vpack.c.bf16 %v2029, %v2029
        %v2158 = vpack.c.bf16 %v2030, %v2030
        %v2159 = vpack.c.bf16 %v2031, %v2031
        %v2160 = vpack.c.bf16 %v2032, %v2032
        %v2161 = vpack.c.bf16 %v2033, %v2033
        %v2162 = vpack.c.bf16 %v2034, %v2034
        %v2163 = vpack.c.bf16 %v2035, %v2035
        %v2164 = vpack.c.bf16 %v2036, %v2036
        %v2165 = vpack.c.bf16 %v2037, %v2037
        %v2166 = vpack.c.bf16 %v2038, %v2038
        %v2167 = vpack.c.bf16 %v2039, %v2039
        %v2168 = vpack.c.bf16 %v2040, %v2040
        %v2169 = vpack.c.bf16 %v2041, %v2041
        %v2170 = vpack.c.bf16 %v2042, %v2042
        %v2171 = vpack.c.bf16 %v2043, %v2043
        %v2172 = vpack.c.bf16 %v2044, %v2044
        %v2173 = vpack.c.bf16 %v2045, %v2045
        %v2174 = vpack.c.bf16 %v2046, %v2046
        %v2175 = vld [vmem:[%s2] sm:$0xf]
        %v2176 = vld [vmem:[%s2 + $0x4] sm:$0xf]
        %v2177 = vld [vmem:[%s2 + $0x8] sm:$0xf]
        %v2178 = vld [vmem:[%s2 + $0xc] sm:$0xf]
        %v2179 = vld [vmem:[%s2 + $0x10] sm:$0xf]
        %v2180 = vld [vmem:[%s2 + $0x14] sm:$0xf]
        %v2181 = vld [vmem:[%s2 + $0x18] sm:$0xf]
        %v2182 = vld [vmem:[%s2 + $0x1c] sm:$0xf]
        %v2183 = vld [vmem:[%s2 + $0x20] sm:$0xf]
        %v2184 = vld [vmem:[%s2 + $0x24] sm:$0xf]
        %v2185 = vld [vmem:[%s2 + $0x28] sm:$0xf]
        %v2186 = vld [vmem:[%s2 + $0x2c] sm:$0xf]
        %v2187 = vld [vmem:[%s2 + $0x30] sm:$0xf]
        %v2188 = vld [vmem:[%s2 + $0x34] sm:$0xf]
        %v2189 = vld [vmem:[%s2 + $0x38] sm:$0xf]
        %v2190 = vld [vmem:[%s2 + $0x3c] sm:$0xf]
        %v2191 = vld [vmem:[%s2 + $0x40] sm:$0xf]
        %v2192 = vld [vmem:[%s2 + $0x44] sm:$0xf]
        %v2193 = vld [vmem:[%s2 + $0x48] sm:$0xf]
        %v2194 = vld [vmem:[%s2 + $0x4c] sm:$0xf]
        %v2195 = vld [vmem:[%s2 + $0x50] sm:$0xf]
        %v2196 = vld [vmem:[%s2 + $0x54] sm:$0xf]
        %v2197 = vld [vmem:[%s2 + $0x58] sm:$0xf]
        %v2198 = vld [vmem:[%s2 + $0x5c] sm:$0xf]
        %v2199 = vld [vmem:[%s2 + $0x60] sm:$0xf]
        %v2200 = vld [vmem:[%s2 + $0x64] sm:$0xf]
        %v2201 = vld [vmem:[%s2 + $0x68] sm:$0xf]
        %v2202 = vld [vmem:[%s2 + $0x6c] sm:$0xf]
        %v2203 = vld [vmem:[%s2 + $0x70] sm:$0xf]
        %v2204 = vld [vmem:[%s2 + $0x74] sm:$0xf]
        %v2205 = vld [vmem:[%s2 + $0x78] sm:$0xf]
        %v2206 = vld [vmem:[%s2 + $0x7c] sm:$0xf]
        %v2207 = vld [vmem:[%s2 + $0x80] sm:$0xf]
        %v2208 = vld [vmem:[%s2 + $0x84] sm:$0xf]
        %v2209 = vld [vmem:[%s2 + $0x88] sm:$0xf]
        %v2210 = vld [vmem:[%s2 + $0x8c] sm:$0xf]
        %v2211 = vld [vmem:[%s2 + $0x90] sm:$0xf]
        %v2212 = vld [vmem:[%s2 + $0x94] sm:$0xf]
        %v2213 = vld [vmem:[%s2 + $0x98] sm:$0xf]
        %v2214 = vld [vmem:[%s2 + $0x9c] sm:$0xf]
        %v2215 = vld [vmem:[%s2 + $0xa0] sm:$0xf]
        %v2216 = vld [vmem:[%s2 + $0xa4] sm:$0xf]
        %v2217 = vld [vmem:[%s2 + $0xa8] sm:$0xf]
        %v2218 = vld [vmem:[%s2 + $0xac] sm:$0xf]
        %v2219 = vld [vmem:[%s2 + $0xb0] sm:$0xf]
        %v2220 = vld [vmem:[%s2 + $0xb4] sm:$0xf]
        %v2221 = vld [vmem:[%s2 + $0xb8] sm:$0xf]
        %v2222 = vld [vmem:[%s2 + $0xbc] sm:$0xf]
        %v2223 = vld [vmem:[%s2 + $0xc0] sm:$0xf]
        %v2224 = vld [vmem:[%s2 + $0xc4] sm:$0xf]
        %v2225 = vld [vmem:[%s2 + $0xc8] sm:$0xf]
        %v2226 = vld [vmem:[%s2 + $0xcc] sm:$0xf]
        %v2227 = vld [vmem:[%s2 + $0xd0] sm:$0xf]
        %v2228 = vld [vmem:[%s2 + $0xd4] sm:$0xf]
        %v2229 = vld [vmem:[%s2 + $0xd8] sm:$0xf]
        %v2230 = vld [vmem:[%s2 + $0xdc] sm:$0xf]
        %v2231 = vld [vmem:[%s2 + $0xe0] sm:$0xf]
        %v2232 = vld [vmem:[%s2 + $0xe4] sm:$0xf]
        %v2233 = vld [vmem:[%s2 + $0xe8] sm:$0xf]
        %v2234 = vld [vmem:[%s2 + $0xec] sm:$0xf]
        %v2235 = vld [vmem:[%s2 + $0xf0] sm:$0xf]
        %v2236 = vld [vmem:[%s2 + $0xf4] sm:$0xf]
        %v2237 = vld [vmem:[%s2 + $0xf8] sm:$0xf]
        %v2238 = vld [vmem:[%s2 + $0xfc] sm:$0xf]
        %v2239 = vld [vmem:[%s2 + $0x100] sm:$0xf]
        %v2240 = vld [vmem:[%s2 + $0x104] sm:$0xf]
        %v2241 = vld [vmem:[%s2 + $0x108] sm:$0xf]
        %v2242 = vld [vmem:[%s2 + $0x10c] sm:$0xf]
        %v2243 = vld [vmem:[%s2 + $0x110] sm:$0xf]
        %v2244 = vld [vmem:[%s2 + $0x114] sm:$0xf]
        %v2245 = vld [vmem:[%s2 + $0x118] sm:$0xf]
        %v2246 = vld [vmem:[%s2 + $0x11c] sm:$0xf]
        %v2247 = vld [vmem:[%s2 + $0x120] sm:$0xf]
        %v2248 = vld [vmem:[%s2 + $0x124] sm:$0xf]
        %v2249 = vld [vmem:[%s2 + $0x128] sm:$0xf]
        %v2250 = vld [vmem:[%s2 + $0x12c] sm:$0xf]
        %v2251 = vld [vmem:[%s2 + $0x130] sm:$0xf]
        %v2252 = vld [vmem:[%s2 + $0x134] sm:$0xf]
        %v2253 = vld [vmem:[%s2 + $0x138] sm:$0xf]
        %v2254 = vld [vmem:[%s2 + $0x13c] sm:$0xf]
        %v2255 = vld [vmem:[%s2 + $0x140] sm:$0xf]
        %v2256 = vld [vmem:[%s2 + $0x144] sm:$0xf]
        %v2257 = vld [vmem:[%s2 + $0x148] sm:$0xf]
        %v2258 = vld [vmem:[%s2 + $0x14c] sm:$0xf]
        %v2259 = vld [vmem:[%s2 + $0x150] sm:$0xf]
        %v2260 = vld [vmem:[%s2 + $0x154] sm:$0xf]
        %v2261 = vld [vmem:[%s2 + $0x158] sm:$0xf]
        %v2262 = vld [vmem:[%s2 + $0x15c] sm:$0xf]
        %v2263 = vld [vmem:[%s2 + $0x160] sm:$0xf]
        %v2264 = vld [vmem:[%s2 + $0x164] sm:$0xf]
        %v2265 = vld [vmem:[%s2 + $0x168] sm:$0xf]
        %v2266 = vld [vmem:[%s2 + $0x16c] sm:$0xf]
        %v2267 = vld [vmem:[%s2 + $0x170] sm:$0xf]
        %v2268 = vld [vmem:[%s2 + $0x174] sm:$0xf]
        %v2269 = vld [vmem:[%s2 + $0x178] sm:$0xf]
        %v2270 = vld [vmem:[%s2 + $0x17c] sm:$0xf]
        %v2271 = vld [vmem:[%s2 + $0x180] sm:$0xf]
        %v2272 = vld [vmem:[%s2 + $0x184] sm:$0xf]
        %v2273 = vld [vmem:[%s2 + $0x188] sm:$0xf]
        %v2274 = vld [vmem:[%s2 + $0x18c] sm:$0xf]
        %v2275 = vld [vmem:[%s2 + $0x190] sm:$0xf]
        %v2276 = vld [vmem:[%s2 + $0x194] sm:$0xf]
        %v2277 = vld [vmem:[%s2 + $0x198] sm:$0xf]
        %v2278 = vld [vmem:[%s2 + $0x19c] sm:$0xf]
        %v2279 = vld [vmem:[%s2 + $0x1a0] sm:$0xf]
        %v2280 = vld [vmem:[%s2 + $0x1a4] sm:$0xf]
        %v2281 = vld [vmem:[%s2 + $0x1a8] sm:$0xf]
        %v2282 = vld [vmem:[%s2 + $0x1ac] sm:$0xf]
        %v2283 = vld [vmem:[%s2 + $0x1b0] sm:$0xf]
        %v2284 = vld [vmem:[%s2 + $0x1b4] sm:$0xf]
        %v2285 = vld [vmem:[%s2 + $0x1b8] sm:$0xf]
        %v2286 = vld [vmem:[%s2 + $0x1bc] sm:$0xf]
        %v2287 = vld [vmem:[%s2 + $0x1c0] sm:$0xf]
        %v2288 = vld [vmem:[%s2 + $0x1c4] sm:$0xf]
        %v2289 = vld [vmem:[%s2 + $0x1c8] sm:$0xf]
        %v2290 = vld [vmem:[%s2 + $0x1cc] sm:$0xf]
        %v2291 = vld [vmem:[%s2 + $0x1d0] sm:$0xf]
        %v2292 = vld [vmem:[%s2 + $0x1d4] sm:$0xf]
        %v2293 = vld [vmem:[%s2 + $0x1d8] sm:$0xf]
        %v2294 = vld [vmem:[%s2 + $0x1dc] sm:$0xf]
        %v2295 = vld [vmem:[%s2 + $0x1e0] sm:$0xf]
        %v2296 = vld [vmem:[%s2 + $0x1e4] sm:$0xf]
        %v2297 = vld [vmem:[%s2 + $0x1e8] sm:$0xf]
        %v2298 = vld [vmem:[%s2 + $0x1ec] sm:$0xf]
        %v2299 = vld [vmem:[%s2 + $0x1f0] sm:$0xf]
        %v2300 = vld [vmem:[%s2 + $0x1f4] sm:$0xf]
        %v2301 = vld [vmem:[%s2 + $0x1f8] sm:$0xf]
        %v2302 = vld [vmem:[%s2 + $0x1fc] sm:$0xf]
        %v2303 = vld [vmem:[%s2 + $0x200] sm:$0xf]
        %v2304 = vld [vmem:[%s2 + $0x204] sm:$0xf]
        %v2305 = vld [vmem:[%s2 + $0x208] sm:$0xf]
        %v2306 = vld [vmem:[%s2 + $0x20c] sm:$0xf]
        %v2307 = vld [vmem:[%s2 + $0x210] sm:$0xf]
        %v2308 = vld [vmem:[%s2 + $0x214] sm:$0xf]
        %v2309 = vld [vmem:[%s2 + $0x218] sm:$0xf]
        %v2310 = vld [vmem:[%s2 + $0x21c] sm:$0xf]
        %v2311 = vld [vmem:[%s2 + $0x220] sm:$0xf]
        %v2312 = vld [vmem:[%s2 + $0x224] sm:$0xf]
        %v2313 = vld [vmem:[%s2 + $0x228] sm:$0xf]
        %v2314 = vld [vmem:[%s2 + $0x22c] sm:$0xf]
        %v2315 = vld [vmem:[%s2 + $0x230] sm:$0xf]
        %v2316 = vld [vmem:[%s2 + $0x234] sm:$0xf]
        %v2317 = vld [vmem:[%s2 + $0x238] sm:$0xf]
        %v2318 = vld [vmem:[%s2 + $0x23c] sm:$0xf]
        %v2319 = vld [vmem:[%s2 + $0x240] sm:$0xf]
        %v2320 = vld [vmem:[%s2 + $0x244] sm:$0xf]
        %v2321 = vld [vmem:[%s2 + $0x248] sm:$0xf]
        %v2322 = vld [vmem:[%s2 + $0x24c] sm:$0xf]
        %v2323 = vld [vmem:[%s2 + $0x250] sm:$0xf]
        %v2324 = vld [vmem:[%s2 + $0x254] sm:$0xf]
        %v2325 = vld [vmem:[%s2 + $0x258] sm:$0xf]
        %v2326 = vld [vmem:[%s2 + $0x25c] sm:$0xf]
        %v2327 = vld [vmem:[%s2 + $0x260] sm:$0xf]
        %v2328 = vld [vmem:[%s2 + $0x264] sm:$0xf]
        %v2329 = vld [vmem:[%s2 + $0x268] sm:$0xf]
        %v2330 = vld [vmem:[%s2 + $0x26c] sm:$0xf]
        %v2331 = vld [vmem:[%s2 + $0x270] sm:$0xf]
        %v2332 = vld [vmem:[%s2 + $0x274] sm:$0xf]
        %v2333 = vld [vmem:[%s2 + $0x278] sm:$0xf]
        %v2334 = vld [vmem:[%s2 + $0x27c] sm:$0xf]
        %v2335 = vld [vmem:[%s2 + $0x280] sm:$0xf]
        %v2336 = vld [vmem:[%s2 + $0x284] sm:$0xf]
        %v2337 = vld [vmem:[%s2 + $0x288] sm:$0xf]
        %v2338 = vld [vmem:[%s2 + $0x28c] sm:$0xf]
        %v2339 = vld [vmem:[%s2 + $0x290] sm:$0xf]
        %v2340 = vld [vmem:[%s2 + $0x294] sm:$0xf]
        %v2341 = vld [vmem:[%s2 + $0x298] sm:$0xf]
        %v2342 = vld [vmem:[%s2 + $0x29c] sm:$0xf]
        %v2343 = vld [vmem:[%s2 + $0x2a0] sm:$0xf]
        %v2344 = vld [vmem:[%s2 + $0x2a4] sm:$0xf]
        %v2345 = vld [vmem:[%s2 + $0x2a8] sm:$0xf]
        %v2346 = vld [vmem:[%s2 + $0x2ac] sm:$0xf]
        %v2347 = vld [vmem:[%s2 + $0x2b0] sm:$0xf]
        %v2348 = vld [vmem:[%s2 + $0x2b4] sm:$0xf]
        %v2349 = vld [vmem:[%s2 + $0x2b8] sm:$0xf]
        %v2350 = vld [vmem:[%s2 + $0x2bc] sm:$0xf]
        %v2351 = vld [vmem:[%s2 + $0x2c0] sm:$0xf]
        %v2352 = vld [vmem:[%s2 + $0x2c4] sm:$0xf]
        %v2353 = vld [vmem:[%s2 + $0x2c8] sm:$0xf]
        %v2354 = vld [vmem:[%s2 + $0x2cc] sm:$0xf]
        %v2355 = vld [vmem:[%s2 + $0x2d0] sm:$0xf]
        %v2356 = vld [vmem:[%s2 + $0x2d4] sm:$0xf]
        %v2357 = vld [vmem:[%s2 + $0x2d8] sm:$0xf]
        %v2358 = vld [vmem:[%s2 + $0x2dc] sm:$0xf]
        %v2359 = vld [vmem:[%s2 + $0x2e0] sm:$0xf]
        %v2360 = vld [vmem:[%s2 + $0x2e4] sm:$0xf]
        %v2361 = vld [vmem:[%s2 + $0x2e8] sm:$0xf]
        %v2362 = vld [vmem:[%s2 + $0x2ec] sm:$0xf]
        %v2363 = vld [vmem:[%s2 + $0x2f0] sm:$0xf]
        %v2364 = vld [vmem:[%s2 + $0x2f4] sm:$0xf]
        %v2365 = vld [vmem:[%s2 + $0x2f8] sm:$0xf]
        %v2366 = vld [vmem:[%s2 + $0x2fc] sm:$0xf]
        %v2367 = vld [vmem:[%s2 + $0x300] sm:$0xf]
        %v2368 = vld [vmem:[%s2 + $0x304] sm:$0xf]
        %v2369 = vld [vmem:[%s2 + $0x308] sm:$0xf]
        %v2370 = vld [vmem:[%s2 + $0x30c] sm:$0xf]
        %v2371 = vld [vmem:[%s2 + $0x310] sm:$0xf]
        %v2372 = vld [vmem:[%s2 + $0x314] sm:$0xf]
        %v2373 = vld [vmem:[%s2 + $0x318] sm:$0xf]
        %v2374 = vld [vmem:[%s2 + $0x31c] sm:$0xf]
        %v2375 = vld [vmem:[%s2 + $0x320] sm:$0xf]
        %v2376 = vld [vmem:[%s2 + $0x324] sm:$0xf]
        %v2377 = vld [vmem:[%s2 + $0x328] sm:$0xf]
        %v2378 = vld [vmem:[%s2 + $0x32c] sm:$0xf]
        %v2379 = vld [vmem:[%s2 + $0x330] sm:$0xf]
        %v2380 = vld [vmem:[%s2 + $0x334] sm:$0xf]
        %v2381 = vld [vmem:[%s2 + $0x338] sm:$0xf]
        %v2382 = vld [vmem:[%s2 + $0x33c] sm:$0xf]
        %v2383 = vld [vmem:[%s2 + $0x340] sm:$0xf]
        %v2384 = vld [vmem:[%s2 + $0x344] sm:$0xf]
        %v2385 = vld [vmem:[%s2 + $0x348] sm:$0xf]
        %v2386 = vld [vmem:[%s2 + $0x34c] sm:$0xf]
        %v2387 = vld [vmem:[%s2 + $0x350] sm:$0xf]
        %v2388 = vld [vmem:[%s2 + $0x354] sm:$0xf]
        %v2389 = vld [vmem:[%s2 + $0x358] sm:$0xf]
        %v2390 = vld [vmem:[%s2 + $0x35c] sm:$0xf]
        %v2391 = vld [vmem:[%s2 + $0x360] sm:$0xf]
        %v2392 = vld [vmem:[%s2 + $0x364] sm:$0xf]
        %v2393 = vld [vmem:[%s2 + $0x368] sm:$0xf]
        %v2394 = vld [vmem:[%s2 + $0x36c] sm:$0xf]
        %v2395 = vld [vmem:[%s2 + $0x370] sm:$0xf]
        %v2396 = vld [vmem:[%s2 + $0x374] sm:$0xf]
        %v2397 = vld [vmem:[%s2 + $0x378] sm:$0xf]
        %v2398 = vld [vmem:[%s2 + $0x37c] sm:$0xf]
        %v2399 = vld [vmem:[%s2 + $0x380] sm:$0xf]
        %v2400 = vld [vmem:[%s2 + $0x384] sm:$0xf]
        %v2401 = vld [vmem:[%s2 + $0x388] sm:$0xf]
        %v2402 = vld [vmem:[%s2 + $0x38c] sm:$0xf]
        %v2403 = vld [vmem:[%s2 + $0x390] sm:$0xf]
        %v2404 = vld [vmem:[%s2 + $0x394] sm:$0xf]
        %v2405 = vld [vmem:[%s2 + $0x398] sm:$0xf]
        %v2406 = vld [vmem:[%s2 + $0x39c] sm:$0xf]
        %v2407 = vld [vmem:[%s2 + $0x3a0] sm:$0xf]
        %v2408 = vld [vmem:[%s2 + $0x3a4] sm:$0xf]
        %v2409 = vld [vmem:[%s2 + $0x3a8] sm:$0xf]
        %v2410 = vld [vmem:[%s2 + $0x3ac] sm:$0xf]
        %v2411 = vld [vmem:[%s2 + $0x3b0] sm:$0xf]
        %v2412 = vld [vmem:[%s2 + $0x3b4] sm:$0xf]
        %v2413 = vld [vmem:[%s2 + $0x3b8] sm:$0xf]
        %v2414 = vld [vmem:[%s2 + $0x3bc] sm:$0xf]
        %v2415 = vld [vmem:[%s2 + $0x3c0] sm:$0xf]
        %v2416 = vld [vmem:[%s2 + $0x3c4] sm:$0xf]
        %v2417 = vld [vmem:[%s2 + $0x3c8] sm:$0xf]
        %v2418 = vld [vmem:[%s2 + $0x3cc] sm:$0xf]
        %v2419 = vld [vmem:[%s2 + $0x3d0] sm:$0xf]
        %v2420 = vld [vmem:[%s2 + $0x3d4] sm:$0xf]
        %v2421 = vld [vmem:[%s2 + $0x3d8] sm:$0xf]
        %v2422 = vld [vmem:[%s2 + $0x3dc] sm:$0xf]
        %v2423 = vld [vmem:[%s2 + $0x3e0] sm:$0xf]
        %v2424 = vld [vmem:[%s2 + $0x3e4] sm:$0xf]
        %v2425 = vld [vmem:[%s2 + $0x3e8] sm:$0xf]
        %v2426 = vld [vmem:[%s2 + $0x3ec] sm:$0xf]
        %v2427 = vld [vmem:[%s2 + $0x3f0] sm:$0xf]
        %v2428 = vld [vmem:[%s2 + $0x3f4] sm:$0xf]
        %v2429 = vld [vmem:[%s2 + $0x3f8] sm:$0xf]
        %v2430 = vld [vmem:[%s2 + $0x3fc] sm:$0xf]
        %v2431 = vld [vmem:[%s3] sm:$0x1]
        %v2433 = vlaneseq
        %v2434 = vshrl.u32 %v2433, 7
        %v2435 = vsub.s32 0, %v2434
        %v2436 = vrot.slane %v2431, %v2435
        %v2566 = vunpack.c.l.b16 %v2047
        %v2567 = vunpack.c.l.b16 %v2048
        %v2568 = vunpack.c.l.b16 %v2049
        %v2569 = vunpack.c.l.b16 %v2050
        %v2570 = vunpack.c.l.b16 %v2051
        %v2571 = vunpack.c.l.b16 %v2052
        %v2572 = vunpack.c.l.b16 %v2053
        %v2573 = vunpack.c.l.b16 %v2054
        %v2574 = vunpack.c.l.b16 %v2055
        %v2575 = vunpack.c.l.b16 %v2056
        %v2576 = vunpack.c.l.b16 %v2057
        %v2577 = vunpack.c.l.b16 %v2058
        %v2578 = vunpack.c.l.b16 %v2059
        %v2579 = vunpack.c.l.b16 %v2060
        %v2580 = vunpack.c.l.b16 %v2061
        %v2581 = vunpack.c.l.b16 %v2062
        %v2582 = vunpack.c.l.b16 %v2063
        %v2583 = vunpack.c.l.b16 %v2064
        %v2584 = vunpack.c.l.b16 %v2065
        %v2585 = vunpack.c.l.b16 %v2066
        %v2586 = vunpack.c.l.b16 %v2067
        %v2587 = vunpack.c.l.b16 %v2068
        %v2588 = vunpack.c.l.b16 %v2069
        %v2589 = vunpack.c.l.b16 %v2070
        %v2590 = vunpack.c.l.b16 %v2071
        %v2591 = vunpack.c.l.b16 %v2072
        %v2592 = vunpack.c.l.b16 %v2073
        %v2593 = vunpack.c.l.b16 %v2074
        %v2594 = vunpack.c.l.b16 %v2075
        %v2595 = vunpack.c.l.b16 %v2076
        %v2596 = vunpack.c.l.b16 %v2077
        %v2597 = vunpack.c.l.b16 %v2078
        %v2598 = vunpack.c.l.b16 %v2079
        %v2599 = vunpack.c.l.b16 %v2080
        %v2600 = vunpack.c.l.b16 %v2081
        %v2601 = vunpack.c.l.b16 %v2082
        %v2602 = vunpack.c.l.b16 %v2083
        %v2603 = vunpack.c.l.b16 %v2084
        %v2604 = vunpack.c.l.b16 %v2085
        %v2605 = vunpack.c.l.b16 %v2086
        %v2606 = vunpack.c.l.b16 %v2087
        %v2607 = vunpack.c.l.b16 %v2088
        %v2608 = vunpack.c.l.b16 %v2089
        %v2609 = vunpack.c.l.b16 %v2090
        %v2610 = vunpack.c.l.b16 %v2091
        %v2611 = vunpack.c.l.b16 %v2092
        %v2612 = vunpack.c.l.b16 %v2093
        %v2613 = vunpack.c.l.b16 %v2094
        %v2614 = vunpack.c.l.b16 %v2095
        %v2615 = vunpack.c.l.b16 %v2096
        %v2616 = vunpack.c.l.b16 %v2097
        %v2617 = vunpack.c.l.b16 %v2098
        %v2618 = vunpack.c.l.b16 %v2099
        %v2619 = vunpack.c.l.b16 %v2100
        %v2620 = vunpack.c.l.b16 %v2101
        %v2621 = vunpack.c.l.b16 %v2102
        %v2622 = vunpack.c.l.b16 %v2103
        %v2623 = vunpack.c.l.b16 %v2104
        %v2624 = vunpack.c.l.b16 %v2105
        %v2625 = vunpack.c.l.b16 %v2106
        %v2626 = vunpack.c.l.b16 %v2107
        %v2627 = vunpack.c.l.b16 %v2108
        %v2628 = vunpack.c.l.b16 %v2109
        %v2629 = vunpack.c.l.b16 %v2110
        %v2630 = vunpack.c.l.b16 %v2111
        %v2631 = vunpack.c.l.b16 %v2112
        %v2632 = vunpack.c.l.b16 %v2113
        %v2633 = vunpack.c.l.b16 %v2114
        %v2634 = vunpack.c.l.b16 %v2115
        %v2635 = vunpack.c.l.b16 %v2116
        %v2636 = vunpack.c.l.b16 %v2117
        %v2637 = vunpack.c.l.b16 %v2118
        %v2638 = vunpack.c.l.b16 %v2119
        %v2639 = vunpack.c.l.b16 %v2120
        %v2640 = vunpack.c.l.b16 %v2121
        %v2641 = vunpack.c.l.b16 %v2122
        %v2642 = vunpack.c.l.b16 %v2123
        %v2643 = vunpack.c.l.b16 %v2124
        %v2644 = vunpack.c.l.b16 %v2125
        %v2645 = vunpack.c.l.b16 %v2126
        %v2646 = vunpack.c.l.b16 %v2127
        %v2647 = vunpack.c.l.b16 %v2128
        %v2648 = vunpack.c.l.b16 %v2129
        %v2649 = vunpack.c.l.b16 %v2130
        %v2650 = vunpack.c.l.b16 %v2131
        %v2651 = vunpack.c.l.b16 %v2132
        %v2652 = vunpack.c.l.b16 %v2133
        %v2653 = vunpack.c.l.b16 %v2134
        %v2654 = vunpack.c.l.b16 %v2135
        %v2655 = vunpack.c.l.b16 %v2136
        %v2656 = vunpack.c.l.b16 %v2137
        %v2657 = vunpack.c.l.b16 %v2138
        %v2658 = vunpack.c.l.b16 %v2139
        %v2659 = vunpack.c.l.b16 %v2140
        %v2660 = vunpack.c.l.b16 %v2141
        %v2661 = vunpack.c.l.b16 %v2142
        %v2662 = vunpack.c.l.b16 %v2143
        %v2663 = vunpack.c.l.b16 %v2144
        %v2664 = vunpack.c.l.b16 %v2145
        %v2665 = vunpack.c.l.b16 %v2146
        %v2666 = vunpack.c.l.b16 %v2147
        %v2667 = vunpack.c.l.b16 %v2148
        %v2668 = vunpack.c.l.b16 %v2149
        %v2669 = vunpack.c.l.b16 %v2150
        %v2670 = vunpack.c.l.b16 %v2151
        %v2671 = vunpack.c.l.b16 %v2152
        %v2672 = vunpack.c.l.b16 %v2153
        %v2673 = vunpack.c.l.b16 %v2154
        %v2674 = vunpack.c.l.b16 %v2155
        %v2675 = vunpack.c.l.b16 %v2156
        %v2676 = vunpack.c.l.b16 %v2157
        %v2677 = vunpack.c.l.b16 %v2158
        %v2678 = vunpack.c.l.b16 %v2159
        %v2679 = vunpack.c.l.b16 %v2160
        %v2680 = vunpack.c.l.b16 %v2161
        %v2681 = vunpack.c.l.b16 %v2162
        %v2682 = vunpack.c.l.b16 %v2163
        %v2683 = vunpack.c.l.b16 %v2164
        %v2684 = vunpack.c.l.b16 %v2165
        %v2685 = vunpack.c.l.b16 %v2166
        %v2686 = vunpack.c.l.b16 %v2167
        %v2687 = vunpack.c.l.b16 %v2168
        %v2688 = vunpack.c.l.b16 %v2169
        %v2689 = vunpack.c.l.b16 %v2170
        %v2690 = vunpack.c.l.b16 %v2171
        %v2691 = vunpack.c.l.b16 %v2172
        %v2692 = vunpack.c.l.b16 %v2173
        %v2693 = vunpack.c.l.b16 %v2174
        %v2694 = vrot.slane %v2582, 7
        %vm2695 = vcmask 1041409
        %v2696 = vsel %vm2695, %v2694, %v2566
        %v2697 = vrot.slane %v2598, 6
        %vm2698 = vcmask 1042434
        %v2699 = vsel %vm2698, %v2697, %v2696
        %v2700 = vrot.slane %v2614, 5
        %vm2701 = vcmask 1043459
        %v2702 = vsel %vm2701, %v2700, %v2699
        %v2703 = vrot.slane %v2630, 4
        %vm2704 = vcmask 1044484
        %v2705 = vsel %vm2704, %v2703, %v2702
        %v2706 = vrot.slane %v2646, 3
        %vm2707 = vcmask 1045509
        %v2708 = vsel %vm2707, %v2706, %v2705
        %v2709 = vrot.slane %v2662, 2
        %vm2710 = vcmask 1046534
        %v2711 = vsel %vm2710, %v2709, %v2708
        %v2712 = vrot.slane %v2678, 1
        %vm2713 = vcmask 1047559
        %v2714 = vsel %vm2713, %v2712, %v2711
        %v2715 = vrot.slane %v2583, 7
        %v2716 = vsel %vm2695, %v2715, %v2567
        %v2717 = vrot.slane %v2599, 6
        %v2718 = vsel %vm2698, %v2717, %v2716
        %v2719 = vrot.slane %v2615, 5
        %v2720 = vsel %vm2701, %v2719, %v2718
        %v2721 = vrot.slane %v2631, 4
        %v2722 = vsel %vm2704, %v2721, %v2720
        %v2723 = vrot.slane %v2647, 3
        %v2724 = vsel %vm2707, %v2723, %v2722
        %v2725 = vrot.slane %v2663, 2
        %v2726 = vsel %vm2710, %v2725, %v2724
        %v2727 = vrot.slane %v2679, 1
        %v2728 = vsel %vm2713, %v2727, %v2726
        %v2729 = vrot.slane %v2584, 7
        %v2730 = vsel %vm2695, %v2729, %v2568
        %v2731 = vrot.slane %v2600, 6
        %v2732 = vsel %vm2698, %v2731, %v2730
        %v2733 = vrot.slane %v2616, 5
        %v2734 = vsel %vm2701, %v2733, %v2732
        %v2735 = vrot.slane %v2632, 4
        %v2736 = vsel %vm2704, %v2735, %v2734
        %v2737 = vrot.slane %v2648, 3
        %v2738 = vsel %vm2707, %v2737, %v2736
        %v2739 = vrot.slane %v2664, 2
        %v2740 = vsel %vm2710, %v2739, %v2738
        %v2741 = vrot.slane %v2680, 1
        %v2742 = vsel %vm2713, %v2741, %v2740
        %v2743 = vrot.slane %v2585, 7
        %v2744 = vsel %vm2695, %v2743, %v2569
        %v2745 = vrot.slane %v2601, 6
        %v2746 = vsel %vm2698, %v2745, %v2744
        %v2747 = vrot.slane %v2617, 5
        %v2748 = vsel %vm2701, %v2747, %v2746
        %v2749 = vrot.slane %v2633, 4
        %v2750 = vsel %vm2704, %v2749, %v2748
        %v2751 = vrot.slane %v2649, 3
        %v2752 = vsel %vm2707, %v2751, %v2750
        %v2753 = vrot.slane %v2665, 2
        %v2754 = vsel %vm2710, %v2753, %v2752
        %v2755 = vrot.slane %v2681, 1
        %v2756 = vsel %vm2713, %v2755, %v2754
        %v2757 = vrot.slane %v2586, 7
        %v2758 = vsel %vm2695, %v2757, %v2570
        %v2759 = vrot.slane %v2602, 6
        %v2760 = vsel %vm2698, %v2759, %v2758
        %v2761 = vrot.slane %v2618, 5
        %v2762 = vsel %vm2701, %v2761, %v2760
        %v2763 = vrot.slane %v2634, 4
        %v2764 = vsel %vm2704, %v2763, %v2762
        %v2765 = vrot.slane %v2650, 3
        %v2766 = vsel %vm2707, %v2765, %v2764
        %v2767 = vrot.slane %v2666, 2
        %v2768 = vsel %vm2710, %v2767, %v2766
        %v2769 = vrot.slane %v2682, 1
        %v2770 = vsel %vm2713, %v2769, %v2768
        %v2771 = vrot.slane %v2587, 7
        %v2772 = vsel %vm2695, %v2771, %v2571
        %v2773 = vrot.slane %v2603, 6
        %v2774 = vsel %vm2698, %v2773, %v2772
        %v2775 = vrot.slane %v2619, 5
        %v2776 = vsel %vm2701, %v2775, %v2774
        %v2777 = vrot.slane %v2635, 4
        %v2778 = vsel %vm2704, %v2777, %v2776
        %v2779 = vrot.slane %v2651, 3
        %v2780 = vsel %vm2707, %v2779, %v2778
        %v2781 = vrot.slane %v2667, 2
        %v2782 = vsel %vm2710, %v2781, %v2780
        %v2783 = vrot.slane %v2683, 1
        %v2784 = vsel %vm2713, %v2783, %v2782
        %v2785 = vrot.slane %v2588, 7
        %v2786 = vsel %vm2695, %v2785, %v2572
        %v2787 = vrot.slane %v2604, 6
        %v2788 = vsel %vm2698, %v2787, %v2786
        %v2789 = vrot.slane %v2620, 5
        %v2790 = vsel %vm2701, %v2789, %v2788
        %v2791 = vrot.slane %v2636, 4
        %v2792 = vsel %vm2704, %v2791, %v2790
        %v2793 = vrot.slane %v2652, 3
        %v2794 = vsel %vm2707, %v2793, %v2792
        %v2795 = vrot.slane %v2668, 2
        %v2796 = vsel %vm2710, %v2795, %v2794
        %v2797 = vrot.slane %v2684, 1
        %v2798 = vsel %vm2713, %v2797, %v2796
        %v2799 = vrot.slane %v2589, 7
        %v2800 = vsel %vm2695, %v2799, %v2573
        %v2801 = vrot.slane %v2605, 6
        %v2802 = vsel %vm2698, %v2801, %v2800
        %v2803 = vrot.slane %v2621, 5
        %v2804 = vsel %vm2701, %v2803, %v2802
        %v2805 = vrot.slane %v2637, 4
        %v2806 = vsel %vm2704, %v2805, %v2804
        %v2807 = vrot.slane %v2653, 3
        %v2808 = vsel %vm2707, %v2807, %v2806
        %v2809 = vrot.slane %v2669, 2
        %v2810 = vsel %vm2710, %v2809, %v2808
        %v2811 = vrot.slane %v2685, 1
        %v2812 = vsel %vm2713, %v2811, %v2810
        %v2813 = vrot.slane %v2590, 7
        %v2814 = vsel %vm2695, %v2813, %v2574
        %v2815 = vrot.slane %v2606, 6
        %v2816 = vsel %vm2698, %v2815, %v2814
        %v2817 = vrot.slane %v2622, 5
        %v2818 = vsel %vm2701, %v2817, %v2816
        %v2819 = vrot.slane %v2638, 4
        %v2820 = vsel %vm2704, %v2819, %v2818
        %v2821 = vrot.slane %v2654, 3
        %v2822 = vsel %vm2707, %v2821, %v2820
        %v2823 = vrot.slane %v2670, 2
        %v2824 = vsel %vm2710, %v2823, %v2822
        %v2825 = vrot.slane %v2686, 1
        %v2826 = vsel %vm2713, %v2825, %v2824
        %v2827 = vrot.slane %v2591, 7
        %v2828 = vsel %vm2695, %v2827, %v2575
        %v2829 = vrot.slane %v2607, 6
        %v2830 = vsel %vm2698, %v2829, %v2828
        %v2831 = vrot.slane %v2623, 5
        %v2832 = vsel %vm2701, %v2831, %v2830
        %v2833 = vrot.slane %v2639, 4
        %v2834 = vsel %vm2704, %v2833, %v2832
        %v2835 = vrot.slane %v2655, 3
        %v2836 = vsel %vm2707, %v2835, %v2834
        %v2837 = vrot.slane %v2671, 2
        %v2838 = vsel %vm2710, %v2837, %v2836
        %v2839 = vrot.slane %v2687, 1
        %v2840 = vsel %vm2713, %v2839, %v2838
        %v2841 = vrot.slane %v2592, 7
        %v2842 = vsel %vm2695, %v2841, %v2576
        %v2843 = vrot.slane %v2608, 6
        %v2844 = vsel %vm2698, %v2843, %v2842
        %v2845 = vrot.slane %v2624, 5
        %v2846 = vsel %vm2701, %v2845, %v2844
        %v2847 = vrot.slane %v2640, 4
        %v2848 = vsel %vm2704, %v2847, %v2846
        %v2849 = vrot.slane %v2656, 3
        %v2850 = vsel %vm2707, %v2849, %v2848
        %v2851 = vrot.slane %v2672, 2
        %v2852 = vsel %vm2710, %v2851, %v2850
        %v2853 = vrot.slane %v2688, 1
        %v2854 = vsel %vm2713, %v2853, %v2852
        %v2855 = vrot.slane %v2593, 7
        %v2856 = vsel %vm2695, %v2855, %v2577
        %v2857 = vrot.slane %v2609, 6
        %v2858 = vsel %vm2698, %v2857, %v2856
        %v2859 = vrot.slane %v2625, 5
        %v2860 = vsel %vm2701, %v2859, %v2858
        %v2861 = vrot.slane %v2641, 4
        %v2862 = vsel %vm2704, %v2861, %v2860
        %v2863 = vrot.slane %v2657, 3
        %v2864 = vsel %vm2707, %v2863, %v2862
        %v2865 = vrot.slane %v2673, 2
        %v2866 = vsel %vm2710, %v2865, %v2864
        %v2867 = vrot.slane %v2689, 1
        %v2868 = vsel %vm2713, %v2867, %v2866
        %v2869 = vrot.slane %v2594, 7
        %v2870 = vsel %vm2695, %v2869, %v2578
        %v2871 = vrot.slane %v2610, 6
        %v2872 = vsel %vm2698, %v2871, %v2870
        %v2873 = vrot.slane %v2626, 5
        %v2874 = vsel %vm2701, %v2873, %v2872
        %v2875 = vrot.slane %v2642, 4
        %v2876 = vsel %vm2704, %v2875, %v2874
        %v2877 = vrot.slane %v2658, 3
        %v2878 = vsel %vm2707, %v2877, %v2876
        %v2879 = vrot.slane %v2674, 2
        %v2880 = vsel %vm2710, %v2879, %v2878
        %v2881 = vrot.slane %v2690, 1
        %v2882 = vsel %vm2713, %v2881, %v2880
        %v2883 = vrot.slane %v2595, 7
        %v2884 = vsel %vm2695, %v2883, %v2579
        %v2885 = vrot.slane %v2611, 6
        %v2886 = vsel %vm2698, %v2885, %v2884
        %v2887 = vrot.slane %v2627, 5
        %v2888 = vsel %vm2701, %v2887, %v2886
        %v2889 = vrot.slane %v2643, 4
        %v2890 = vsel %vm2704, %v2889, %v2888
        %v2891 = vrot.slane %v2659, 3
        %v2892 = vsel %vm2707, %v2891, %v2890
        %v2893 = vrot.slane %v2675, 2
        %v2894 = vsel %vm2710, %v2893, %v2892
        %v2895 = vrot.slane %v2691, 1
        %v2896 = vsel %vm2713, %v2895, %v2894
        %v2897 = vrot.slane %v2596, 7
        %v2898 = vsel %vm2695, %v2897, %v2580
        %v2899 = vrot.slane %v2612, 6
        %v2900 = vsel %vm2698, %v2899, %v2898
        %v2901 = vrot.slane %v2628, 5
        %v2902 = vsel %vm2701, %v2901, %v2900
        %v2903 = vrot.slane %v2644, 4
        %v2904 = vsel %vm2704, %v2903, %v2902
        %v2905 = vrot.slane %v2660, 3
        %v2906 = vsel %vm2707, %v2905, %v2904
        %v2907 = vrot.slane %v2676, 2
        %v2908 = vsel %vm2710, %v2907, %v2906
        %v2909 = vrot.slane %v2692, 1
        %v2910 = vsel %vm2713, %v2909, %v2908
        %v2911 = vrot.slane %v2597, 7
        %v2912 = vsel %vm2695, %v2911, %v2581
        %v2913 = vrot.slane %v2613, 6
        %v2914 = vsel %vm2698, %v2913, %v2912
        %v2915 = vrot.slane %v2629, 5
        %v2916 = vsel %vm2701, %v2915, %v2914
        %v2917 = vrot.slane %v2645, 4
        %v2918 = vsel %vm2704, %v2917, %v2916
        %v2919 = vrot.slane %v2661, 3
        %v2920 = vsel %vm2707, %v2919, %v2918
        %v2921 = vrot.slane %v2677, 2
        %v2922 = vsel %vm2710, %v2921, %v2920
        %v2923 = vrot.slane %v2693, 1
        %v2924 = vsel %vm2713, %v2923, %v2922
        %v2925 = vpack.c.b16 %v2714, %v2714
        %v2926 = vpack.c.b16 %v2728, %v2728
        %v2927 = vpack.c.b16 %v2742, %v2742
        %v2928 = vpack.c.b16 %v2756, %v2756
        %v2929 = vpack.c.b16 %v2770, %v2770
        %v2930 = vpack.c.b16 %v2784, %v2784
        %v2931 = vpack.c.b16 %v2798, %v2798
        %v2932 = vpack.c.b16 %v2812, %v2812
        %v2933 = vpack.c.b16 %v2826, %v2826
        %v2934 = vpack.c.b16 %v2840, %v2840
        %v2935 = vpack.c.b16 %v2854, %v2854
        %v2936 = vpack.c.b16 %v2868, %v2868
        %v2937 = vpack.c.b16 %v2882, %v2882
        %v2938 = vpack.c.b16 %v2896, %v2896
        %v2939 = vpack.c.b16 %v2910, %v2910
        %v2940 = vpack.c.b16 %v2924, %v2924
        %v3213 = vunpack.c.l.b16 %v2175
        %v3214 = vunpack.c.l.b16 %v2176
        %v3215 = vunpack.c.l.b16 %v2177
        %v3216 = vunpack.c.l.b16 %v2178
        %v3217 = vunpack.c.l.b16 %v2179
        %v3218 = vunpack.c.l.b16 %v2180
        %v3219 = vunpack.c.l.b16 %v2181
        %v3220 = vunpack.c.l.b16 %v2182
        %v3221 = vunpack.c.l.b16 %v2183
        %v3222 = vunpack.c.l.b16 %v2184
        %v3223 = vunpack.c.l.b16 %v2185
        %v3224 = vunpack.c.l.b16 %v2186
        %v3225 = vunpack.c.l.b16 %v2187
        %v3226 = vunpack.c.l.b16 %v2188
        %v3227 = vunpack.c.l.b16 %v2189
        %v3228 = vunpack.c.l.b16 %v2190
        %v3229 = vunpack.c.l.b16 %v2191
        %v3230 = vunpack.c.l.b16 %v2192
        %v3231 = vunpack.c.l.b16 %v2193
        %v3232 = vunpack.c.l.b16 %v2194
        %v3233 = vunpack.c.l.b16 %v2195
        %v3234 = vunpack.c.l.b16 %v2196
        %v3235 = vunpack.c.l.b16 %v2197
        %v3236 = vunpack.c.l.b16 %v2198
        %v3237 = vunpack.c.l.b16 %v2199
        %v3238 = vunpack.c.l.b16 %v2200
        %v3239 = vunpack.c.l.b16 %v2201
        %v3240 = vunpack.c.l.b16 %v2202
        %v3241 = vunpack.c.l.b16 %v2203
        %v3242 = vunpack.c.l.b16 %v2204
        %v3243 = vunpack.c.l.b16 %v2205
        %v3244 = vunpack.c.l.b16 %v2206
        %v3245 = vunpack.c.l.b16 %v2207
        %v3246 = vunpack.c.l.b16 %v2208
        %v3247 = vunpack.c.l.b16 %v2209
        %v3248 = vunpack.c.l.b16 %v2210
        %v3249 = vunpack.c.l.b16 %v2211
        %v3250 = vunpack.c.l.b16 %v2212
        %v3251 = vunpack.c.l.b16 %v2213
        %v3252 = vunpack.c.l.b16 %v2214
        %v3253 = vunpack.c.l.b16 %v2215
        %v3254 = vunpack.c.l.b16 %v2216
        %v3255 = vunpack.c.l.b16 %v2217
        %v3256 = vunpack.c.l.b16 %v2218
        %v3257 = vunpack.c.l.b16 %v2219
        %v3258 = vunpack.c.l.b16 %v2220
        %v3259 = vunpack.c.l.b16 %v2221
        %v3260 = vunpack.c.l.b16 %v2222
        %v3261 = vunpack.c.l.b16 %v2223
        %v3262 = vunpack.c.l.b16 %v2224
        %v3263 = vunpack.c.l.b16 %v2225
        %v3264 = vunpack.c.l.b16 %v2226
        %v3265 = vunpack.c.l.b16 %v2227
        %v3266 = vunpack.c.l.b16 %v2228
        %v3267 = vunpack.c.l.b16 %v2229
        %v3268 = vunpack.c.l.b16 %v2230
        %v3269 = vunpack.c.l.b16 %v2231
        %v3270 = vunpack.c.l.b16 %v2232
        %v3271 = vunpack.c.l.b16 %v2233
        %v3272 = vunpack.c.l.b16 %v2234
        %v3273 = vunpack.c.l.b16 %v2235
        %v3274 = vunpack.c.l.b16 %v2236
        %v3275 = vunpack.c.l.b16 %v2237
        %v3276 = vunpack.c.l.b16 %v2238
        %v3277 = vunpack.c.l.b16 %v2239
        %v3278 = vunpack.c.l.b16 %v2240
        %v3279 = vunpack.c.l.b16 %v2241
        %v3280 = vunpack.c.l.b16 %v2242
        %v3281 = vunpack.c.l.b16 %v2243
        %v3282 = vunpack.c.l.b16 %v2244
        %v3283 = vunpack.c.l.b16 %v2245
        %v3284 = vunpack.c.l.b16 %v2246
        %v3285 = vunpack.c.l.b16 %v2247
        %v3286 = vunpack.c.l.b16 %v2248
        %v3287 = vunpack.c.l.b16 %v2249
        %v3288 = vunpack.c.l.b16 %v2250
        %v3289 = vunpack.c.l.b16 %v2251
        %v3290 = vunpack.c.l.b16 %v2252
        %v3291 = vunpack.c.l.b16 %v2253
        %v3292 = vunpack.c.l.b16 %v2254
        %v3293 = vunpack.c.l.b16 %v2255
        %v3294 = vunpack.c.l.b16 %v2256
        %v3295 = vunpack.c.l.b16 %v2257
        %v3296 = vunpack.c.l.b16 %v2258
        %v3297 = vunpack.c.l.b16 %v2259
        %v3298 = vunpack.c.l.b16 %v2260
        %v3299 = vunpack.c.l.b16 %v2261
        %v3300 = vunpack.c.l.b16 %v2262
        %v3301 = vunpack.c.l.b16 %v2263
        %v3302 = vunpack.c.l.b16 %v2264
        %v3303 = vunpack.c.l.b16 %v2265
        %v3304 = vunpack.c.l.b16 %v2266
        %v3305 = vunpack.c.l.b16 %v2267
        %v3306 = vunpack.c.l.b16 %v2268
        %v3307 = vunpack.c.l.b16 %v2269
        %v3308 = vunpack.c.l.b16 %v2270
        %v3309 = vunpack.c.l.b16 %v2271
        %v3310 = vunpack.c.l.b16 %v2272
        %v3311 = vunpack.c.l.b16 %v2273
        %v3312 = vunpack.c.l.b16 %v2274
        %v3313 = vunpack.c.l.b16 %v2275
        %v3314 = vunpack.c.l.b16 %v2276
        %v3315 = vunpack.c.l.b16 %v2277
        %v3316 = vunpack.c.l.b16 %v2278
        %v3317 = vunpack.c.l.b16 %v2279
        %v3318 = vunpack.c.l.b16 %v2280
        %v3319 = vunpack.c.l.b16 %v2281
        %v3320 = vunpack.c.l.b16 %v2282
        %v3321 = vunpack.c.l.b16 %v2283
        %v3322 = vunpack.c.l.b16 %v2284
        %v3323 = vunpack.c.l.b16 %v2285
        %v3324 = vunpack.c.l.b16 %v2286
        %v3325 = vunpack.c.l.b16 %v2287
        %v3326 = vunpack.c.l.b16 %v2288
        %v3327 = vunpack.c.l.b16 %v2289
        %v3328 = vunpack.c.l.b16 %v2290
        %v3329 = vunpack.c.l.b16 %v2291
        %v3330 = vunpack.c.l.b16 %v2292
        %v3331 = vunpack.c.l.b16 %v2293
        %v3332 = vunpack.c.l.b16 %v2294
        %v3333 = vunpack.c.l.b16 %v2295
        %v3334 = vunpack.c.l.b16 %v2296
        %v3335 = vunpack.c.l.b16 %v2297
        %v3336 = vunpack.c.l.b16 %v2298
        %v3337 = vunpack.c.l.b16 %v2299
        %v3338 = vunpack.c.l.b16 %v2300
        %v3339 = vunpack.c.l.b16 %v2301
        %v3340 = vunpack.c.l.b16 %v2302
        %v3341 = vunpack.c.l.b16 %v2303
        %v3342 = vunpack.c.l.b16 %v2304
        %v3343 = vunpack.c.l.b16 %v2305
        %v3344 = vunpack.c.l.b16 %v2306
        %v3345 = vunpack.c.l.b16 %v2307
        %v3346 = vunpack.c.l.b16 %v2308
        %v3347 = vunpack.c.l.b16 %v2309
        %v3348 = vunpack.c.l.b16 %v2310
        %v3349 = vunpack.c.l.b16 %v2311
        %v3350 = vunpack.c.l.b16 %v2312
        %v3351 = vunpack.c.l.b16 %v2313
        %v3352 = vunpack.c.l.b16 %v2314
        %v3353 = vunpack.c.l.b16 %v2315
        %v3354 = vunpack.c.l.b16 %v2316
        %v3355 = vunpack.c.l.b16 %v2317
        %v3356 = vunpack.c.l.b16 %v2318
        %v3357 = vunpack.c.l.b16 %v2319
        %v3358 = vunpack.c.l.b16 %v2320
        %v3359 = vunpack.c.l.b16 %v2321
        %v3360 = vunpack.c.l.b16 %v2322
        %v3361 = vunpack.c.l.b16 %v2323
        %v3362 = vunpack.c.l.b16 %v2324
        %v3363 = vunpack.c.l.b16 %v2325
        %v3364 = vunpack.c.l.b16 %v2326
        %v3365 = vunpack.c.l.b16 %v2327
        %v3366 = vunpack.c.l.b16 %v2328
        %v3367 = vunpack.c.l.b16 %v2329
        %v3368 = vunpack.c.l.b16 %v2330
        %v3369 = vunpack.c.l.b16 %v2331
        %v3370 = vunpack.c.l.b16 %v2332
        %v3371 = vunpack.c.l.b16 %v2333
        %v3372 = vunpack.c.l.b16 %v2334
        %v3373 = vunpack.c.l.b16 %v2335
        %v3374 = vunpack.c.l.b16 %v2336
        %v3375 = vunpack.c.l.b16 %v2337
        %v3376 = vunpack.c.l.b16 %v2338
        %v3377 = vunpack.c.l.b16 %v2339
        %v3378 = vunpack.c.l.b16 %v2340
        %v3379 = vunpack.c.l.b16 %v2341
        %v3380 = vunpack.c.l.b16 %v2342
        %v3381 = vunpack.c.l.b16 %v2343
        %v3382 = vunpack.c.l.b16 %v2344
        %v3383 = vunpack.c.l.b16 %v2345
        %v3384 = vunpack.c.l.b16 %v2346
        %v3385 = vunpack.c.l.b16 %v2347
        %v3386 = vunpack.c.l.b16 %v2348
        %v3387 = vunpack.c.l.b16 %v2349
        %v3388 = vunpack.c.l.b16 %v2350
        %v3389 = vunpack.c.l.b16 %v2351
        %v3390 = vunpack.c.l.b16 %v2352
        %v3391 = vunpack.c.l.b16 %v2353
        %v3392 = vunpack.c.l.b16 %v2354
        %v3393 = vunpack.c.l.b16 %v2355
        %v3394 = vunpack.c.l.b16 %v2356
        %v3395 = vunpack.c.l.b16 %v2357
        %v3396 = vunpack.c.l.b16 %v2358
        %v3397 = vunpack.c.l.b16 %v2359
        %v3398 = vunpack.c.l.b16 %v2360
        %v3399 = vunpack.c.l.b16 %v2361
        %v3400 = vunpack.c.l.b16 %v2362
        %v3401 = vunpack.c.l.b16 %v2363
        %v3402 = vunpack.c.l.b16 %v2364
        %v3403 = vunpack.c.l.b16 %v2365
        %v3404 = vunpack.c.l.b16 %v2366
        %v3405 = vunpack.c.l.b16 %v2367
        %v3406 = vunpack.c.l.b16 %v2368
        %v3407 = vunpack.c.l.b16 %v2369
        %v3408 = vunpack.c.l.b16 %v2370
        %v3409 = vunpack.c.l.b16 %v2371
        %v3410 = vunpack.c.l.b16 %v2372
        %v3411 = vunpack.c.l.b16 %v2373
        %v3412 = vunpack.c.l.b16 %v2374
        %v3413 = vunpack.c.l.b16 %v2375
        %v3414 = vunpack.c.l.b16 %v2376
        %v3415 = vunpack.c.l.b16 %v2377
        %v3416 = vunpack.c.l.b16 %v2378
        %v3417 = vunpack.c.l.b16 %v2379
        %v3418 = vunpack.c.l.b16 %v2380
        %v3419 = vunpack.c.l.b16 %v2381
        %v3420 = vunpack.c.l.b16 %v2382
        %v3421 = vunpack.c.l.b16 %v2383
        %v3422 = vunpack.c.l.b16 %v2384
        %v3423 = vunpack.c.l.b16 %v2385
        %v3424 = vunpack.c.l.b16 %v2386
        %v3425 = vunpack.c.l.b16 %v2387
        %v3426 = vunpack.c.l.b16 %v2388
        %v3427 = vunpack.c.l.b16 %v2389
        %v3428 = vunpack.c.l.b16 %v2390
        %v3429 = vunpack.c.l.b16 %v2391
        %v3430 = vunpack.c.l.b16 %v2392
        %v3431 = vunpack.c.l.b16 %v2393
        %v3432 = vunpack.c.l.b16 %v2394
        %v3433 = vunpack.c.l.b16 %v2395
        %v3434 = vunpack.c.l.b16 %v2396
        %v3435 = vunpack.c.l.b16 %v2397
        %v3436 = vunpack.c.l.b16 %v2398
        %v3437 = vunpack.c.l.b16 %v2399
        %v3438 = vunpack.c.l.b16 %v2400
        %v3439 = vunpack.c.l.b16 %v2401
        %v3440 = vunpack.c.l.b16 %v2402
        %v3441 = vunpack.c.l.b16 %v2403
        %v3442 = vunpack.c.l.b16 %v2404
        %v3443 = vunpack.c.l.b16 %v2405
        %v3444 = vunpack.c.l.b16 %v2406
        %v3445 = vunpack.c.l.b16 %v2407
        %v3446 = vunpack.c.l.b16 %v2408
        %v3447 = vunpack.c.l.b16 %v2409
        %v3448 = vunpack.c.l.b16 %v2410
        %v3449 = vunpack.c.l.b16 %v2411
        %v3450 = vunpack.c.l.b16 %v2412
        %v3451 = vunpack.c.l.b16 %v2413
        %v3452 = vunpack.c.l.b16 %v2414
        %v3453 = vunpack.c.l.b16 %v2415
        %v3454 = vunpack.c.l.b16 %v2416
        %v3455 = vunpack.c.l.b16 %v2417
        %v3456 = vunpack.c.l.b16 %v2418
        %v3457 = vunpack.c.l.b16 %v2419
        %v3458 = vunpack.c.l.b16 %v2420
        %v3459 = vunpack.c.l.b16 %v2421
        %v3460 = vunpack.c.l.b16 %v2422
        %v3461 = vunpack.c.l.b16 %v2423
        %v3462 = vunpack.c.l.b16 %v2424
        %v3463 = vunpack.c.l.b16 %v2425
        %v3464 = vunpack.c.l.b16 %v2426
        %v3465 = vunpack.c.l.b16 %v2427
        %v3466 = vunpack.c.l.b16 %v2428
        %v3467 = vunpack.c.l.b16 %v2429
        %v3468 = vunpack.c.l.b16 %v2430
        %v3469 = vpack.c.b16 %v3214, %v3213
        %v3470 = vpack.c.b16 %v3216, %v3215
        %v3471 = vpack.c.b16 %v3218, %v3217
        %v3472 = vpack.c.b16 %v3220, %v3219
        %v3473 = vpack.c.b16 %v3222, %v3221
        %v3474 = vpack.c.b16 %v3224, %v3223
        %v3475 = vpack.c.b16 %v3226, %v3225
        %v3476 = vpack.c.b16 %v3228, %v3227
        %v3477 = vpack.c.b16 %v3230, %v3229
        %v3478 = vpack.c.b16 %v3232, %v3231
        %v3479 = vpack.c.b16 %v3234, %v3233
        %v3480 = vpack.c.b16 %v3236, %v3235
        %v3481 = vpack.c.b16 %v3238, %v3237
        %v3482 = vpack.c.b16 %v3240, %v3239
        %v3483 = vpack.c.b16 %v3242, %v3241
        %v3484 = vpack.c.b16 %v3244, %v3243
        %v3485 = vpack.c.b16 %v3246, %v3245
        %v3486 = vpack.c.b16 %v3248, %v3247
        %v3487 = vpack.c.b16 %v3250, %v3249
        %v3488 = vpack.c.b16 %v3252, %v3251
        %v3489 = vpack.c.b16 %v3254, %v3253
        %v3490 = vpack.c.b16 %v3256, %v3255
        %v3491 = vpack.c.b16 %v3258, %v3257
        %v3492 = vpack.c.b16 %v3260, %v3259
        %v3493 = vpack.c.b16 %v3262, %v3261
        %v3494 = vpack.c.b16 %v3264, %v3263
        %v3495 = vpack.c.b16 %v3266, %v3265
        %v3496 = vpack.c.b16 %v3268, %v3267
        %v3497 = vpack.c.b16 %v3270, %v3269
        %v3498 = vpack.c.b16 %v3272, %v3271
        %v3499 = vpack.c.b16 %v3274, %v3273
        %v3500 = vpack.c.b16 %v3276, %v3275
        %v3501 = vpack.c.b16 %v3278, %v3277
        %v3502 = vpack.c.b16 %v3280, %v3279
        %v3503 = vpack.c.b16 %v3282, %v3281
        %v3504 = vpack.c.b16 %v3284, %v3283
        %v3505 = vpack.c.b16 %v3286, %v3285
        %v3506 = vpack.c.b16 %v3288, %v3287
        %v3507 = vpack.c.b16 %v3290, %v3289
        %v3508 = vpack.c.b16 %v3292, %v3291
        %v3509 = vpack.c.b16 %v3294, %v3293
        %v3510 = vpack.c.b16 %v3296, %v3295
        %v3511 = vpack.c.b16 %v3298, %v3297
        %v3512 = vpack.c.b16 %v3300, %v3299
        %v3513 = vpack.c.b16 %v3302, %v3301
        %v3514 = vpack.c.b16 %v3304, %v3303
        %v3515 = vpack.c.b16 %v3306, %v3305
        %v3516 = vpack.c.b16 %v3308, %v3307
        %v3517 = vpack.c.b16 %v3310, %v3309
        %v3518 = vpack.c.b16 %v3312, %v3311
        %v3519 = vpack.c.b16 %v3314, %v3313
        %v3520 = vpack.c.b16 %v3316, %v3315
        %v3521 = vpack.c.b16 %v3318, %v3317
        %v3522 = vpack.c.b16 %v3320, %v3319
        %v3523 = vpack.c.b16 %v3322, %v3321
        %v3524 = vpack.c.b16 %v3324, %v3323
        %v3525 = vpack.c.b16 %v3326, %v3325
        %v3526 = vpack.c.b16 %v3328, %v3327
        %v3527 = vpack.c.b16 %v3330, %v3329
        %v3528 = vpack.c.b16 %v3332, %v3331
        %v3529 = vpack.c.b16 %v3334, %v3333
        %v3530 = vpack.c.b16 %v3336, %v3335
        %v3531 = vpack.c.b16 %v3338, %v3337
        %v3532 = vpack.c.b16 %v3340, %v3339
        %v3533 = vpack.c.b16 %v3342, %v3341
        %v3534 = vpack.c.b16 %v3344, %v3343
        %v3535 = vpack.c.b16 %v3346, %v3345
        %v3536 = vpack.c.b16 %v3348, %v3347
        %v3537 = vpack.c.b16 %v3350, %v3349
        %v3538 = vpack.c.b16 %v3352, %v3351
        %v3539 = vpack.c.b16 %v3354, %v3353
        %v3540 = vpack.c.b16 %v3356, %v3355
        %v3541 = vpack.c.b16 %v3358, %v3357
        %v3542 = vpack.c.b16 %v3360, %v3359
        %v3543 = vpack.c.b16 %v3362, %v3361
        %v3544 = vpack.c.b16 %v3364, %v3363
        %v3545 = vpack.c.b16 %v3366, %v3365
        %v3546 = vpack.c.b16 %v3368, %v3367
        %v3547 = vpack.c.b16 %v3370, %v3369
        %v3548 = vpack.c.b16 %v3372, %v3371
        %v3549 = vpack.c.b16 %v3374, %v3373
        %v3550 = vpack.c.b16 %v3376, %v3375
        %v3551 = vpack.c.b16 %v3378, %v3377
        %v3552 = vpack.c.b16 %v3380, %v3379
        %v3553 = vpack.c.b16 %v3382, %v3381
        %v3554 = vpack.c.b16 %v3384, %v3383
        %v3555 = vpack.c.b16 %v3386, %v3385
        %v3556 = vpack.c.b16 %v3388, %v3387
        %v3557 = vpack.c.b16 %v3390, %v3389
        %v3558 = vpack.c.b16 %v3392, %v3391
        %v3559 = vpack.c.b16 %v3394, %v3393
        %v3560 = vpack.c.b16 %v3396, %v3395
        %v3561 = vpack.c.b16 %v3398, %v3397
        %v3562 = vpack.c.b16 %v3400, %v3399
        %v3563 = vpack.c.b16 %v3402, %v3401
        %v3564 = vpack.c.b16 %v3404, %v3403
        %v3565 = vpack.c.b16 %v3406, %v3405
        %v3566 = vpack.c.b16 %v3408, %v3407
        %v3567 = vpack.c.b16 %v3410, %v3409
        %v3568 = vpack.c.b16 %v3412, %v3411
        %v3569 = vpack.c.b16 %v3414, %v3413
        %v3570 = vpack.c.b16 %v3416, %v3415
        %v3571 = vpack.c.b16 %v3418, %v3417
        %v3572 = vpack.c.b16 %v3420, %v3419
        %v3573 = vpack.c.b16 %v3422, %v3421
        %v3574 = vpack.c.b16 %v3424, %v3423
        %v3575 = vpack.c.b16 %v3426, %v3425
        %v3576 = vpack.c.b16 %v3428, %v3427
        %v3577 = vpack.c.b16 %v3430, %v3429
        %v3578 = vpack.c.b16 %v3432, %v3431
        %v3579 = vpack.c.b16 %v3434, %v3433
        %v3580 = vpack.c.b16 %v3436, %v3435
        %v3581 = vpack.c.b16 %v3438, %v3437
        %v3582 = vpack.c.b16 %v3440, %v3439
        %v3583 = vpack.c.b16 %v3442, %v3441
        %v3584 = vpack.c.b16 %v3444, %v3443
        %v3585 = vpack.c.b16 %v3446, %v3445
        %v3586 = vpack.c.b16 %v3448, %v3447
        %v3587 = vpack.c.b16 %v3450, %v3449
        %v3588 = vpack.c.b16 %v3452, %v3451
        %v3589 = vpack.c.b16 %v3454, %v3453
        %v3590 = vpack.c.b16 %v3456, %v3455
        %v3591 = vpack.c.b16 %v3458, %v3457
        %v3592 = vpack.c.b16 %v3460, %v3459
        %v3593 = vpack.c.b16 %v3462, %v3461
        %v3594 = vpack.c.b16 %v3464, %v3463
        %v3595 = vpack.c.b16 %v3466, %v3465
        %v3596 = vpack.c.b16 %v3468, %v3467
        %3725 = vmatprep.subr.bf16.mxu0 0
        %3726 = vmatpush1.bf16.msra.mxu0 %v3469
        %3727 = vmatprep.subr.bf16.mxu0 0
        %3728 = vmatpush1.bf16.msra.mxu0 %v3470
        %3729 = vmatprep.subr.bf16.mxu0 0
        %3730 = vmatpush1.bf16.msra.mxu0 %v3471
        %3731 = vmatprep.subr.bf16.mxu0 0
        %3732 = vmatpush1.bf16.msra.mxu0 %v3472
        %3733 = vmatprep.subr.bf16.mxu0 0
        %3734 = vmatpush1.bf16.msra.mxu0 %v3473
        %3735 = vmatprep.subr.bf16.mxu0 0
        %3736 = vmatpush1.bf16.msra.mxu0 %v3474
        %3737 = vmatprep.subr.bf16.mxu0 0
        %3738 = vmatpush1.bf16.msra.mxu0 %v3475
        %3739 = vmatprep.subr.bf16.mxu0 0
        %3740 = vmatpush1.bf16.msra.mxu0 %v3476
        %3741 = vmatprep.subr.bf16.mxu0 0
        %3742 = vmatpush1.bf16.msra.mxu0 %v3477
        %3743 = vmatprep.subr.bf16.mxu0 0
        %3744 = vmatpush1.bf16.msra.mxu0 %v3478
        %3745 = vmatprep.subr.bf16.mxu0 0
        %3746 = vmatpush1.bf16.msra.mxu0 %v3479
        %3747 = vmatprep.subr.bf16.mxu0 0
        %3748 = vmatpush1.bf16.msra.mxu0 %v3480
        %3749 = vmatprep.subr.bf16.mxu0 0
        %3750 = vmatpush1.bf16.msra.mxu0 %v3481
        %3751 = vmatprep.subr.bf16.mxu0 0
        %3752 = vmatpush1.bf16.msra.mxu0 %v3482
        %3753 = vmatprep.subr.bf16.mxu0 0
        %3754 = vmatpush1.bf16.msra.mxu0 %v3483
        %3755 = vmatprep.subr.bf16.mxu0 0
        %3756 = vmatpush1.bf16.msra.mxu0 %v3484
        %3757 = vmatprep.mubr.bf16.mxu0 %v2926
        %3758 = vmatmul.mubr.bf16.gmra.mrb[0].mxu0 %v2925
        %v3759 = vpop.f32.mrb[0].mxu0
        %v3760 = vadd.f32 %v2436, %v3759
        %v3761 = vpop.f32.mrb[0].mxu0
        %v3762 = vpop.f32.mrb[0].mxu0
        %v3763 = vpop.f32.mrb[0].mxu0
        %3764 = vdwg.mxu0
        %3765 = vmatprep.subr.bf16.mxu0 0
        %3766 = vmatpush1.bf16.msra.mxu0 %v3485
        %3767 = vmatprep.subr.bf16.mxu0 0
        %3768 = vmatpush1.bf16.msra.mxu0 %v3486
        %3769 = vmatprep.subr.bf16.mxu0 0
        %3770 = vmatpush1.bf16.msra.mxu0 %v3487
        %3771 = vmatprep.subr.bf16.mxu0 0
        %3772 = vmatpush1.bf16.msra.mxu0 %v3488
        %3773 = vmatprep.subr.bf16.mxu0 0
        %3774 = vmatpush1.bf16.msra.mxu0 %v3489
        %3775 = vmatprep.subr.bf16.mxu0 0
        %3776 = vmatpush1.bf16.msra.mxu0 %v3490
        %3777 = vmatprep.subr.bf16.mxu0 0
        %3778 = vmatpush1.bf16.msra.mxu0 %v3491
        %3779 = vmatprep.subr.bf16.mxu0 0
        %3780 = vmatpush1.bf16.msra.mxu0 %v3492
        %3781 = vmatprep.subr.bf16.mxu0 0
        %3782 = vmatpush1.bf16.msra.mxu0 %v3493
        %3783 = vmatprep.subr.bf16.mxu0 0
        %3784 = vmatpush1.bf16.msra.mxu0 %v3494
        %3785 = vmatprep.subr.bf16.mxu0 0
        %3786 = vmatpush1.bf16.msra.mxu0 %v3495
        %3787 = vmatprep.subr.bf16.mxu0 0
        %3788 = vmatpush1.bf16.msra.mxu0 %v3496
        %3789 = vmatprep.subr.bf16.mxu0 0
        %3790 = vmatpush1.bf16.msra.mxu0 %v3497
        %3791 = vmatprep.subr.bf16.mxu0 0
        %3792 = vmatpush1.bf16.msra.mxu0 %v3498
        %3793 = vmatprep.subr.bf16.mxu0 0
        %3794 = vmatpush1.bf16.msra.mxu0 %v3499
        %3795 = vmatprep.subr.bf16.mxu0 0
        %3796 = vmatpush1.bf16.msra.mxu0 %v3500
        %3797 = vmatprep.mubr.bf16.mxu0 %v2928
        %3798 = vmatmul.mubr.bf16.gmra.mrb[0].mxu0 %v2927
        %v3799 = vpop.f32.mrb[0].mxu0
        %v3800 = vadd.f32 %v3760, %v3799
        %v3801 = vpop.f32.mrb[0].mxu0
        %v3802 = vpop.f32.mrb[0].mxu0
        %v3803 = vpop.f32.mrb[0].mxu0
        %3804 = vdwg.mxu0
        %3805 = vmatprep.subr.bf16.mxu0 0
        %3806 = vmatpush1.bf16.msra.mxu0 %v3501
        %3807 = vmatprep.subr.bf16.mxu0 0
        %3808 = vmatpush1.bf16.msra.mxu0 %v3502
        %3809 = vmatprep.subr.bf16.mxu0 0
        %3810 = vmatpush1.bf16.msra.mxu0 %v3503
        %3811 = vmatprep.subr.bf16.mxu0 0
        %3812 = vmatpush1.bf16.msra.mxu0 %v3504
        %3813 = vmatprep.subr.bf16.mxu0 0
        %3814 = vmatpush1.bf16.msra.mxu0 %v3505
        %3815 = vmatprep.subr.bf16.mxu0 0
        %3816 = vmatpush1.bf16.msra.mxu0 %v3506
        %3817 = vmatprep.subr.bf16.mxu0 0
        %3818 = vmatpush1.bf16.msra.mxu0 %v3507
        %3819 = vmatprep.subr.bf16.mxu0 0
        %3820 = vmatpush1.bf16.msra.mxu0 %v3508
        %3821 = vmatprep.subr.bf16.mxu0 0
        %3822 = vmatpush1.bf16.msra.mxu0 %v3509
        %3823 = vmatprep.subr.bf16.mxu0 0
        %3824 = vmatpush1.bf16.msra.mxu0 %v3510
        %3825 = vmatprep.subr.bf16.mxu0 0
        %3826 = vmatpush1.bf16.msra.mxu0 %v3511
        %3827 = vmatprep.subr.bf16.mxu0 0
        %3828 = vmatpush1.bf16.msra.mxu0 %v3512
        %3829 = vmatprep.subr.bf16.mxu0 0
        %3830 = vmatpush1.bf16.msra.mxu0 %v3513
        %3831 = vmatprep.subr.bf16.mxu0 0
        %3832 = vmatpush1.bf16.msra.mxu0 %v3514
        %3833 = vmatprep.subr.bf16.mxu0 0
        %3834 = vmatpush1.bf16.msra.mxu0 %v3515
        %3835 = vmatprep.subr.bf16.mxu0 0
        %3836 = vmatpush1.bf16.msra.mxu0 %v3516
        %3837 = vmatprep.mubr.bf16.mxu0 %v2930
        %3838 = vmatmul.mubr.bf16.gmra.mrb[0].mxu0 %v2929
        %v3839 = vpop.f32.mrb[0].mxu0
        %v3840 = vadd.f32 %v3800, %v3839
        %v3841 = vpop.f32.mrb[0].mxu0
        %v3842 = vpop.f32.mrb[0].mxu0
        %v3843 = vpop.f32.mrb[0].mxu0
        %3844 = vdwg.mxu0
        %3845 = vmatprep.subr.bf16.mxu0 0
        %3846 = vmatpush1.bf16.msra.mxu0 %v3517
        %3847 = vmatprep.subr.bf16.mxu0 0
        %3848 = vmatpush1.bf16.msra.mxu0 %v3518
        %3849 = vmatprep.subr.bf16.mxu0 0
        %3850 = vmatpush1.bf16.msra.mxu0 %v3519
        %3851 = vmatprep.subr.bf16.mxu0 0
        %3852 = vmatpush1.bf16.msra.mxu0 %v3520
        %3853 = vmatprep.subr.bf16.mxu0 0
        %3854 = vmatpush1.bf16.msra.mxu0 %v3521
        %3855 = vmatprep.subr.bf16.mxu0 0
        %3856 = vmatpush1.bf16.msra.mxu0 %v3522
        %3857 = vmatprep.subr.bf16.mxu0 0
        %3858 = vmatpush1.bf16.msra.mxu0 %v3523
        %3859 = vmatprep.subr.bf16.mxu0 0
        %3860 = vmatpush1.bf16.msra.mxu0 %v3524
        %3861 = vmatprep.subr.bf16.mxu0 0
        %3862 = vmatpush1.bf16.msra.mxu0 %v3525
        %3863 = vmatprep.subr.bf16.mxu0 0
        %3864 = vmatpush1.bf16.msra.mxu0 %v3526
        %3865 = vmatprep.subr.bf16.mxu0 0
        %3866 = vmatpush1.bf16.msra.mxu0 %v3527
        %3867 = vmatprep.subr.bf16.mxu0 0
        %3868 = vmatpush1.bf16.msra.mxu0 %v3528
        %3869 = vmatprep.subr.bf16.mxu0 0
        %3870 = vmatpush1.bf16.msra.mxu0 %v3529
        %3871 = vmatprep.subr.bf16.mxu0 0
        %3872 = vmatpush1.bf16.msra.mxu0 %v3530
        %3873 = vmatprep.subr.bf16.mxu0 0
        %3874 = vmatpush1.bf16.msra.mxu0 %v3531
        %3875 = vmatprep.subr.bf16.mxu0 0
        %3876 = vmatpush1.bf16.msra.mxu0 %v3532
        %3877 = vmatprep.mubr.bf16.mxu0 %v2932
        %3878 = vmatmul.mubr.bf16.gmra.mrb[0].mxu0 %v2931
        %v3879 = vpop.f32.mrb[0].mxu0
        %v3880 = vadd.f32 %v3840, %v3879
        %v3881 = vpop.f32.mrb[0].mxu0
        %v3882 = vpop.f32.mrb[0].mxu0
        %v3883 = vpop.f32.mrb[0].mxu0
        %3884 = vdwg.mxu0
        %3885 = vmatprep.subr.bf16.mxu0 0
        %3886 = vmatpush1.bf16.msra.mxu0 %v3533
        %3887 = vmatprep.subr.bf16.mxu0 0
        %3888 = vmatpush1.bf16.msra.mxu0 %v3534
        %3889 = vmatprep.subr.bf16.mxu0 0
        %3890 = vmatpush1.bf16.msra.mxu0 %v3535
        %3891 = vmatprep.subr.bf16.mxu0 0
        %3892 = vmatpush1.bf16.msra.mxu0 %v3536
        %3893 = vmatprep.subr.bf16.mxu0 0
        %3894 = vmatpush1.bf16.msra.mxu0 %v3537
        %3895 = vmatprep.subr.bf16.mxu0 0
        %3896 = vmatpush1.bf16.msra.mxu0 %v3538
        %3897 = vmatprep.subr.bf16.mxu0 0
        %3898 = vmatpush1.bf16.msra.mxu0 %v3539
        %3899 = vmatprep.subr.bf16.mxu0 0
        %3900 = vmatpush1.bf16.msra.mxu0 %v3540
        %3901 = vmatprep.subr.bf16.mxu0 0
        %3902 = vmatpush1.bf16.msra.mxu0 %v3541
        %3903 = vmatprep.subr.bf16.mxu0 0
        %3904 = vmatpush1.bf16.msra.mxu0 %v3542
        %3905 = vmatprep.subr.bf16.mxu0 0
        %3906 = vmatpush1.bf16.msra.mxu0 %v3543
        %3907 = vmatprep.subr.bf16.mxu0 0
        %3908 = vmatpush1.bf16.msra.mxu0 %v3544
        %3909 = vmatprep.subr.bf16.mxu0 0
        %3910 = vmatpush1.bf16.msra.mxu0 %v3545
        %3911 = vmatprep.subr.bf16.mxu0 0
        %3912 = vmatpush1.bf16.msra.mxu0 %v3546
        %3913 = vmatprep.subr.bf16.mxu0 0
        %3914 = vmatpush1.bf16.msra.mxu0 %v3547
        %3915 = vmatprep.subr.bf16.mxu0 0
        %3916 = vmatpush1.bf16.msra.mxu0 %v3548
        %3917 = vmatprep.mubr.bf16.mxu0 %v2934
        %3918 = vmatmul.mubr.bf16.gmra.mrb[0].mxu0 %v2933
        %v3919 = vpop.f32.mrb[0].mxu0
        %v3920 = vadd.f32 %v3880, %v3919
        %v3921 = vpop.f32.mrb[0].mxu0
        %v3922 = vpop.f32.mrb[0].mxu0
        %v3923 = vpop.f32.mrb[0].mxu0
        %3924 = vdwg.mxu0
        %3925 = vmatprep.subr.bf16.mxu0 0
        %3926 = vmatpush1.bf16.msra.mxu0 %v3549
        %3927 = vmatprep.subr.bf16.mxu0 0
        %3928 = vmatpush1.bf16.msra.mxu0 %v3550
        %3929 = vmatprep.subr.bf16.mxu0 0
        %3930 = vmatpush1.bf16.msra.mxu0 %v3551
        %3931 = vmatprep.subr.bf16.mxu0 0
        %3932 = vmatpush1.bf16.msra.mxu0 %v3552
        %3933 = vmatprep.subr.bf16.mxu0 0
        %3934 = vmatpush1.bf16.msra.mxu0 %v3553
        %3935 = vmatprep.subr.bf16.mxu0 0
        %3936 = vmatpush1.bf16.msra.mxu0 %v3554
        %3937 = vmatprep.subr.bf16.mxu0 0
        %3938 = vmatpush1.bf16.msra.mxu0 %v3555
        %3939 = vmatprep.subr.bf16.mxu0 0
        %3940 = vmatpush1.bf16.msra.mxu0 %v3556
        %3941 = vmatprep.subr.bf16.mxu0 0
        %3942 = vmatpush1.bf16.msra.mxu0 %v3557
        %3943 = vmatprep.subr.bf16.mxu0 0
        %3944 = vmatpush1.bf16.msra.mxu0 %v3558
        %3945 = vmatprep.subr.bf16.mxu0 0
        %3946 = vmatpush1.bf16.msra.mxu0 %v3559
        %3947 = vmatprep.subr.bf16.mxu0 0
        %3948 = vmatpush1.bf16.msra.mxu0 %v3560
        %3949 = vmatprep.subr.bf16.mxu0 0
        %3950 = vmatpush1.bf16.msra.mxu0 %v3561
        %3951 = vmatprep.subr.bf16.mxu0 0
        %3952 = vmatpush1.bf16.msra.mxu0 %v3562
        %3953 = vmatprep.subr.bf16.mxu0 0
        %3954 = vmatpush1.bf16.msra.mxu0 %v3563
        %3955 = vmatprep.subr.bf16.mxu0 0
        %3956 = vmatpush1.bf16.msra.mxu0 %v3564
        %3957 = vmatprep.mubr.bf16.mxu0 %v2936
        %3958 = vmatmul.mubr.bf16.gmra.mrb[0].mxu0 %v2935
        %v3959 = vpop.f32.mrb[0].mxu0
        %v3960 = vadd.f32 %v3920, %v3959
        %v3961 = vpop.f32.mrb[0].mxu0
        %v3962 = vpop.f32.mrb[0].mxu0
        %v3963 = vpop.f32.mrb[0].mxu0
        %3964 = vdwg.mxu0
        %3965 = vmatprep.subr.bf16.mxu0 0
        %3966 = vmatpush1.bf16.msra.mxu0 %v3565
        %3967 = vmatprep.subr.bf16.mxu0 0
        %3968 = vmatpush1.bf16.msra.mxu0 %v3566
        %3969 = vmatprep.subr.bf16.mxu0 0
        %3970 = vmatpush1.bf16.msra.mxu0 %v3567
        %3971 = vmatprep.subr.bf16.mxu0 0
        %3972 = vmatpush1.bf16.msra.mxu0 %v3568
        %3973 = vmatprep.subr.bf16.mxu0 0
        %3974 = vmatpush1.bf16.msra.mxu0 %v3569
        %3975 = vmatprep.subr.bf16.mxu0 0
        %3976 = vmatpush1.bf16.msra.mxu0 %v3570
        %3977 = vmatprep.subr.bf16.mxu0 0
        %3978 = vmatpush1.bf16.msra.mxu0 %v3571
        %3979 = vmatprep.subr.bf16.mxu0 0
        %3980 = vmatpush1.bf16.msra.mxu0 %v3572
        %3981 = vmatprep.subr.bf16.mxu0 0
        %3982 = vmatpush1.bf16.msra.mxu0 %v3573
        %3983 = vmatprep.subr.bf16.mxu0 0
        %3984 = vmatpush1.bf16.msra.mxu0 %v3574
        %3985 = vmatprep.subr.bf16.mxu0 0
        %3986 = vmatpush1.bf16.msra.mxu0 %v3575
        %3987 = vmatprep.subr.bf16.mxu0 0
        %3988 = vmatpush1.bf16.msra.mxu0 %v3576
        %3989 = vmatprep.subr.bf16.mxu0 0
        %3990 = vmatpush1.bf16.msra.mxu0 %v3577
        %3991 = vmatprep.subr.bf16.mxu0 0
        %3992 = vmatpush1.bf16.msra.mxu0 %v3578
        %3993 = vmatprep.subr.bf16.mxu0 0
        %3994 = vmatpush1.bf16.msra.mxu0 %v3579
        %3995 = vmatprep.subr.bf16.mxu0 0
        %3996 = vmatpush1.bf16.msra.mxu0 %v3580
        %3997 = vmatprep.mubr.bf16.mxu0 %v2938
        %3998 = vmatmul.mubr.bf16.gmra.mrb[0].mxu0 %v2937
        %v3999 = vpop.f32.mrb[0].mxu0
        %v4000 = vadd.f32 %v3960, %v3999
        %v4001 = vpop.f32.mrb[0].mxu0
        %v4002 = vpop.f32.mrb[0].mxu0
        %v4003 = vpop.f32.mrb[0].mxu0
        %4004 = vdwg.mxu0
        %4005 = vmatprep.subr.bf16.mxu0 0
        %4006 = vmatpush1.bf16.msra.mxu0 %v3581
        %4007 = vmatprep.subr.bf16.mxu0 0
        %4008 = vmatpush1.bf16.msra.mxu0 %v3582
        %4009 = vmatprep.subr.bf16.mxu0 0
        %4010 = vmatpush1.bf16.msra.mxu0 %v3583
        %4011 = vmatprep.subr.bf16.mxu0 0
        %4012 = vmatpush1.bf16.msra.mxu0 %v3584
        %4013 = vmatprep.subr.bf16.mxu0 0
        %4014 = vmatpush1.bf16.msra.mxu0 %v3585
        %4015 = vmatprep.subr.bf16.mxu0 0
        %4016 = vmatpush1.bf16.msra.mxu0 %v3586
        %4017 = vmatprep.subr.bf16.mxu0 0
        %4018 = vmatpush1.bf16.msra.mxu0 %v3587
        %4019 = vmatprep.subr.bf16.mxu0 0
        %4020 = vmatpush1.bf16.msra.mxu0 %v3588
        %4021 = vmatprep.subr.bf16.mxu0 0
        %4022 = vmatpush1.bf16.msra.mxu0 %v3589
        %4023 = vmatprep.subr.bf16.mxu0 0
        %4024 = vmatpush1.bf16.msra.mxu0 %v3590
        %4025 = vmatprep.subr.bf16.mxu0 0
        %4026 = vmatpush1.bf16.msra.mxu0 %v3591
        %4027 = vmatprep.subr.bf16.mxu0 0
        %4028 = vmatpush1.bf16.msra.mxu0 %v3592
        %4029 = vmatprep.subr.bf16.mxu0 0
        %4030 = vmatpush1.bf16.msra.mxu0 %v3593
        %4031 = vmatprep.subr.bf16.mxu0 0
        %4032 = vmatpush1.bf16.msra.mxu0 %v3594
        %4033 = vmatprep.subr.bf16.mxu0 0
        %4034 = vmatpush1.bf16.msra.mxu0 %v3595
        %4035 = vmatprep.subr.bf16.mxu0 0
        %4036 = vmatpush1.bf16.msra.mxu0 %v3596
        %4037 = vmatprep.mubr.bf16.mxu0 %v2940
        %4038 = vmatmul.mubr.bf16.gmra.mrb[0].mxu0 %v2939
        %v4039 = vpop.f32.mrb[0].mxu0
        %v4040 = vadd.f32 %v4000, %v4039
        %v4041 = vpop.f32.mrb[0].mxu0
        %v4042 = vpop.f32.mrb[0].mxu0
        %v4043 = vpop.f32.mrb[0].mxu0
        %4044 = vdwg.mxu0
        %vm4045 = vcmask 261120
        %4046 = vst.msk [vmem:[%s231] sm:$0xff] %vm4045, %v4040
        %s4047 = sand.u32 %s123, 1
        %s4048 = scalar_lea.sflag [#allocation4], %s4047
        %s4049 = sand.u32 %s123, 1
        %s4050 = smul.addr %s4049, 8
        %s4051 = scalar_lea.vmem [#allocation5], %s4050
        // Predicated region
        $region41: #{tpu_custom_call.1} parent=35 // pred_check
          %p4052 = pneg %p133
        $region42: #{tpu_custom_call.1} parent=35 // pred_check_branch
          %4054 = sbr.rel (%p4052) target = $region44
        $region43: #{tpu_custom_call.1} parent=35 // pred_region
          %s4056 = ssub.s32 128, 128
          %4057 = vsyncadd %s4048, %s4056
          %s4058 = smul.addr %s21, 128
          %s4059 = scalar_lea.hbm %s4, %s4058
          %s4061 = sshll.u32 %s4051, 4
          %s4062 = int_to_ptr.vmem [resolvable:$true] %s4061
          %4064 = dma.vmem_to_hbm [thread:$0]  %s4062, 128, %s4059, %s4048
        $region44: #{tpu_custom_call.1} parent=35 // pred_fallthru
          _
      $region36: #{tpu_custom_call.1} parent=5 // pred_fallthru
        _
      %p4065 = scmp.le.s32.totalorder 2, %s16
      // Predicated region
      $region45: #{tpu_custom_call.1} parent=5 // pred_check
        %p4066 = pneg %p4065
      $region46: #{tpu_custom_call.1} parent=5 // pred_check_branch
        %4068 = sbr.rel (%p4066) target = $region48
      $region47: #{tpu_custom_call.1} parent=5 // pred_region
        %s4069 = ssub.s32 %s16, 2
        // Predicated region
        $region49: #{tpu_custom_call.1} parent=47 // pred_check
          %p4070 = pneg %p139
        $region50: #{tpu_custom_call.1} parent=47 // pred_check_branch
          %4072 = sbr.rel (%p4070) target = $region52
        $region51: #{tpu_custom_call.1} parent=47 // pred_region
          %s4073 = sand.u32 %s124, 1
          %s4074 = scalar_lea.sflag [#allocation4], %s4073
          %s4075 = sand.u32 %s124, 1
          %s4076 = smul.addr %s4075, 8
          %s4077 = scalar_lea.vmem [#allocation5], %s4076
          %4078 = dma.done %s4074, 128
        $region52: #{tpu_custom_call.1} parent=47 // pred_fallthru
          _
      $region48: #{tpu_custom_call.1} parent=5 // pred_fallthru
        _
    $region6: #{tpu_custom_call.1} parent=1 // loop_footer
      %s20 = sadd.s32 1, %s16
    $region7: #{tpu_custom_call.1} parent=1 // loop_footer_branch
      %15 = sbr.rel target = $region3
    $region8: #{tpu_custom_call.1} parent=1 // loop_exit
      _
    %4079 = vsyncpa [#allocation3], 1
    %s4080 = scalar_lea.sflag [#allocation3], 1
    %4081 = vsyncpa %s4080, 1
    %4082 = vsyncpa [#allocation4], 1
    %s4083 = scalar_lea.sflag [#allocation4], 1
    %4084 = vsyncpa %s4083, 1

</llo_original>
